<compile_context>
chip_gen: v7x
topology: tpu7x:2x2x1
jax: 0.10.0
libtpu: 0.0.40
codegen_flags: <defaults>
</compile_context>

<pallas_src>
import functools

import jax
import jax.numpy as jnp
from jax.experimental import pallas as pl
from jax.experimental.pallas import tpu as pltpu


LANE = 128          # TPU lane width; feature axes are padded to multiples of this.
OUT_PAD = 128       # lane-dense output slab (rgb in lanes 0..2, density in lane 3)


def _round_up(n: int, m: int) -> int:
    return ((n + m - 1) // m) * m


# -----------------------------------------------------------------------------
# Pallas kernel: full NeRFModule MLP for one tile of rows.
# -----------------------------------------------------------------------------
def nerf_module_kernel(inx_ref, ind_ref, *refs, D, skips, compute_dtype):
    """refs = (*packed_param_refs, out_ref); params produced by pack_params()."""
    out_ref = refs[-1]
    params = refs[:-1]
    it = iter(params)

    def nxt():
        return next(it)

    f32 = jnp.float32
    in_x = inx_ref[...]                       # (T, CxP)  compute_dtype (lane-padded)
    in_d = ind_ref[...]                       # (T, CdP)  compute_dtype (lane-padded)

    def mm(a, w_ref):
        # bf16 MXU matmul with f32 accumulation; weights are already compute_dtype.
        return jnp.dot(a.astype(compute_dtype), w_ref[...],
                       preferred_element_type=f32)

    # ---- trunk: D linear layers with ReLU; skip layers use a split matmul ----
    w0, b0 = nxt(), nxt()
    h = jnp.maximum(mm(in_x, w0) + b0[...], 0.0)
    for j in range(1, D):
        if (j - 1) in skips:                  # this layer consumes cat([input_x, h])
            wx, wh, b = nxt(), nxt(), nxt()
            z = mm(in_x, wx) + mm(h, wh) + b[...]
        else:
            wh, b = nxt(), nxt()
            z = mm(h, wh) + b[...]
        h = jnp.maximum(z, 0.0)

    # ---- heads ---------------------------------------------------------------
    wf, bf = nxt(), nxt()
    feat = mm(h, wf) + bf[...]                # linear_feat (no activation)

    wdf, wdd, bd = nxt(), nxt(), nxt()        # linear_d split over cat([feature, in_d])
    hd = jnp.maximum(mm(feat, wdf) + mm(in_d, wdd) + bd[...], 0.0)

    # fused lane-dense output slab:
    #   lanes 0..2 = linear_color(hd), lane 3 = linear_density(h)  (no ReLU on either)
    wc, wdn, bo = nxt(), nxt(), nxt()
    slab = mm(hd, wc) + mm(h, wdn) + bo[...]
    out_ref[...] = slab.astype(out_ref.dtype)


# -----------------------------------------------------------------------------
# pallas_call wrapper
# -----------------------------------------------------------------------------
def nerf_module_forward(x, packed, *, Cx, Cd, D, W, skips, tile=256,
                        compute_dtype=jnp.bfloat16, interpret=False):
    """x: (N, Cx + Cd) float32.  packed: flat param list from pack_params()."""
    N = x.shape[0]
    assert x.shape[1] == Cx + Cd
    assert tile % 8 == 0
    CxP = _round_up(Cx, LANE)
    CdP = _round_up(Cd, LANE)
    Np = _round_up(N, tile)

    # lane-pad the two encodings and zero-pad rows up to a tile multiple
    in_x = jnp.pad(x[:, :Cx].astype(compute_dtype), ((0, Np - N), (0, CxP - Cx)))
    in_d = jnp.pad(x[:, Cx:].astype(compute_dtype), ((0, Np - N), (0, CdP - Cd)))

    in_specs = [
        pl.BlockSpec((tile, CxP), lambda i: (i, 0)),
        pl.BlockSpec((tile, CdP), lambda i: (i, 0)),
    ]
    # Weights/biases: full-array blocks with constant index maps -> Pallas keeps
    # them resident in VMEM and does not re-DMA them every grid step.
    for p in packed:
        in_specs.append(pl.BlockSpec(p.shape, lambda i: (0, 0)))

    kernel = functools.partial(
        nerf_module_kernel, D=D, skips=tuple(skips), compute_dtype=compute_dtype
    )

    out = pl.pallas_call(
        kernel,
        out_shape=jax.ShapeDtypeStruct((Np, OUT_PAD), jnp.float32),
        grid_spec=pltpu.PrefetchScalarGridSpec(
            num_scalar_prefetch=0,
            grid=(Np // tile,),
            in_specs=in_specs,
            out_specs=pl.BlockSpec((tile, OUT_PAD), lambda i: (i, 0)),
        ),
        compiler_params=pltpu.CompilerParams(
            dimension_semantics=("parallel",),      # shards grid across TCs on v7x
            vmem_limit_bytes=32 * 1024 * 1024,      # ample headroom even on v7x (64 MiB)
        ),
        interpret=interpret,
    )(in_x, in_d, *packed)

    # slice away row padding and the lane padding of the output slab
    return out[:N, :4]


# -----------------------------------------------------------------------------
# Parameter construction (xavier-uniform weights as in NeRF._init_weights)
# -----------------------------------------------------------------------------
def _make_linear(key, fan_in, fan_out):
    kw, kb = jax.random.split(key)
    bound_w = jnp.sqrt(6.0 / (fan_in + fan_out))     # xavier_uniform_
    w = jax.random.uniform(kw, (fan_in, fan_out), jnp.float32, -bound_w, bound_w)
    bound_b = 1.0 / jnp.sqrt(fan_in)                 # nn.Linear default bias init
    b = jax.random.uniform(kb, (1, fan_out), jnp.float32, -bound_b, bound_b)
    return w, b


def make_canonical_params(key, *, D, W, Cx, Cd, skips):
    """Parameters in the same layout as the PyTorch module (weights pre-transposed to (in, out))."""
    keys = jax.random.split(key, D + 4)
    linear_x = [_make_linear(keys[0], Cx, W)]
    for i in range(D - 1):
        fan_in = W + Cx if i in skips else W
        linear_x.append(_make_linear(keys[1 + i], fan_in, W))
    return dict(
        linear_x=linear_x,
        linear_density=_make_linear(keys[D + 0], W, 1),
        linear_feat=_make_linear(keys[D + 1], W, W),
        linear_d=_make_linear(keys[D + 2], W + Cd, W // 2),
        linear_color=_make_linear(keys[D + 3], W // 2, 3),
    )


def pack_params(canon, *, D, W, Cx, Cd, skips, compute_dtype):
    """Split/pad the canonical params into the lane-aligned layout the kernel consumes."""
    CxP = _round_up(Cx, LANE)
    CdP = _round_up(Cd, LANE)
    cd = compute_dtype

    def pad_rows(w, rows):
        return jnp.zeros((rows, w.shape[1]), jnp.float32).at[: w.shape[0]].set(w)

    flat = []
    # trunk
    w0, b0 = canon["linear_x"][0]
    flat += [pad_rows(w0, CxP).astype(cd), b0]
    for j in range(1, D):
        w, b = canon["linear_x"][j]
        if (j - 1) in skips:
            # cat([input_x, h]) -> rows [:Cx] act on input_x, rows [Cx:] act on h
            flat += [pad_rows(w[:Cx], CxP).astype(cd), w[Cx:].astype(cd), b]
        else:
            flat += [w.astype(cd), b]
    # linear_feat
    wf, bf = canon["linear_feat"]
    flat += [wf.astype(cd), bf]
    # linear_d split over cat([feature, input_d])
    wd, bd = canon["linear_d"]
    flat += [wd[:W].astype(cd), pad_rows(wd[W:], CdP).astype(cd), bd]
    # fused lane-dense color/density output slab
    wc, bc = canon["linear_color"]        # (W//2, 3)
    wdn, bdn = canon["linear_density"]    # (W, 1)
    wc_pad = jnp.zeros((W // 2, OUT_PAD), jnp.float32).at[:, :3].set(wc)
    wdn_pad = jnp.zeros((W, OUT_PAD), jnp.float32).at[:, 3:4].set(wdn)
    bo = jnp.zeros((1, OUT_PAD), jnp.float32).at[:, :3].set(bc).at[:, 3:4].set(bdn)
    flat += [wc_pad.astype(cd), wdn_pad.astype(cd), bo]
    return flat


# -----------------------------------------------------------------------------
# Pure-JAX reference (mirrors the PyTorch forward; same bf16 matmul inputs)
# -----------------------------------------------------------------------------
def nerf_module_ref(x, canon, *, Cx, D, skips, compute_dtype):
    def lin(a, wb):
        w, b = wb
        return jnp.dot(a.astype(compute_dtype), w.astype(compute_dtype),
                       preferred_element_type=jnp.float32) + b

    in_x = x[:, :Cx]
    in_d = x[:, Cx:]
    h = in_x
    for i in range(D):
        h = jnp.maximum(lin(h, canon["linear_x"][i]), 0.0)
        if i in skips:
            h = jnp.concatenate([in_x, h], axis=-1)
    density = lin(h, canon["linear_density"])
    feature = lin(h, canon["linear_feat"])
    hd = jnp.concatenate([feature, in_d], axis=-1)
    hd = jnp.maximum(lin(hd, canon["linear_d"]), 0.0)
    color = lin(hd, canon["linear_color"])
    return jnp.concatenate([color, density], axis=-1)


# -----------------------------------------------------------------------------
# NeRF (coarse + fine) wrapper mirroring the PyTorch dispatch
# -----------------------------------------------------------------------------
class NeRFPallas:
    def __init__(self, key, D, W, input_ch, input_ch_d, skips=(4,),
                 compute_dtype=jnp.bfloat16):
        self.D, self.W = D, W
        self.Cx, self.Cd = input_ch, input_ch_d
        self.skips = tuple(skips)
        self.compute_dtype = compute_dtype
        k_coarse, k_fine = jax.random.split(key)
        kw = dict(D=D, W=W, Cx=self.Cx, Cd=self.Cd, skips=self.skips)
        self.canon_coarse = make_canonical_params(k_coarse, **kw)
        self.canon_fine = make_canonical_params(k_fine, **kw)
        self.packed_coarse = pack_params(self.canon_coarse, compute_dtype=compute_dtype, **kw)
        self.packed_fine = pack_params(self.canon_fine, compute_dtype=compute_dtype, **kw)

    def __call__(self, x, is_fine: bool = False, tile: int = 256):
        # Matches the PyTorch NeRF.forward source exactly:
        # is_fine=True -> model_coarse, is_fine=False -> model_fine.
        packed = self.packed_coarse if is_fine else self.packed_fine
        return nerf_module_forward(
            x, packed, Cx=self.Cx, Cd=self.Cd, D=self.D, W=self.W,
            skips=self.skips, tile=tile, compute_dtype=self.compute_dtype,
        )

    def ref(self, x, is_fine: bool = False):
        canon = self.canon_coarse if is_fine else self.canon_fine
        return nerf_module_ref(x, canon, Cx=self.Cx, D=self.D, skips=self.skips,
                               compute_dtype=self.compute_dtype)


if __name__ == "__main__":
    # Small config consistent with NeRFModule(D, W, input_ch, input_ch_d, skips=[4]);
    # standard NeRF positional-encoding widths, W kept modest for a quick test.
    D, W = 8, 128
    input_ch, input_ch_d = 63, 27
    N = 1000                  # deliberately NOT a tile multiple (exercises padding)
    tile = 256                # sweep 256/512/1024 on real workloads

    key = jax.random.PRNGKey(0)
    k_model, k_x = jax.random.split(key)

    model = NeRFPallas(k_model, D, W, input_ch, input_ch_d, skips=(4,))
    x = jax.random.normal(k_x, (N, input_ch + input_ch_d), dtype=jnp.float32)

    out = model(x, is_fine=False, tile=tile)
    out = jax.block_until_ready(out)

    ref = model.ref(x, is_fine=False)
    assert out.shape == (N, 4), out.shape
    max_err = float(jnp.max(jnp.abs(out - ref)))
    assert jnp.allclose(out, ref, atol=2e-2, rtol=2e-2), max_err

    print("KERNEL_OK")
</pallas_src>

<mosaic_0001>
module attributes {stable_mosaic.version = 11 : i64} {
  func.func @nerf_module_kernel(%arg0: i32, %arg1: memref<256x128xbf16, #tpu.memory_space<vmem>>, %arg2: memref<256x128xbf16, #tpu.memory_space<vmem>>, %arg3: memref<128x128xbf16, #tpu.memory_space<vmem>>, %arg4: memref<1x128xf32, #tpu.memory_space<vmem>>, %arg5: memref<128x128xbf16, #tpu.memory_space<vmem>>, %arg6: memref<1x128xf32, #tpu.memory_space<vmem>>, %arg7: memref<128x128xbf16, #tpu.memory_space<vmem>>, %arg8: memref<1x128xf32, #tpu.memory_space<vmem>>, %arg9: memref<128x128xbf16, #tpu.memory_space<vmem>>, %arg10: memref<1x128xf32, #tpu.memory_space<vmem>>, %arg11: memref<128x128xbf16, #tpu.memory_space<vmem>>, %arg12: memref<1x128xf32, #tpu.memory_space<vmem>>, %arg13: memref<128x128xbf16, #tpu.memory_space<vmem>>, %arg14: memref<128x128xbf16, #tpu.memory_space<vmem>>, %arg15: memref<1x128xf32, #tpu.memory_space<vmem>>, %arg16: memref<128x128xbf16, #tpu.memory_space<vmem>>, %arg17: memref<1x128xf32, #tpu.memory_space<vmem>>, %arg18: memref<128x128xbf16, #tpu.memory_space<vmem>>, %arg19: memref<1x128xf32, #tpu.memory_space<vmem>>, %arg20: memref<128x128xbf16, #tpu.memory_space<vmem>>, %arg21: memref<1x128xf32, #tpu.memory_space<vmem>>, %arg22: memref<128x64xbf16, #tpu.memory_space<vmem>>, %arg23: memref<128x64xbf16, #tpu.memory_space<vmem>>, %arg24: memref<1x64xf32, #tpu.memory_space<vmem>>, %arg25: memref<64x128xbf16, #tpu.memory_space<vmem>>, %arg26: memref<128x128xbf16, #tpu.memory_space<vmem>>, %arg27: memref<1x128xf32, #tpu.memory_space<vmem>>, %arg28: memref<256x128xf32, #tpu.memory_space<vmem>>) attributes {dimension_semantics = [#tpu.dimension_semantics<parallel>], iteration_bounds = array<i64: 4>, scalar_prefetch = 0 : i64, scratch_operands = 0 : i64, tpu.core_type = #tpu.core_type<tc>, window_params = [{transform_indices = @transform_0, window_bounds = array<i64: 256, 128>}, {transform_indices = @transform_1, window_bounds = array<i64: 256, 128>}, {pipeline_mode = #tpu.pipeline_mode<synchronous>, transform_indices = @transform_2, window_bounds = array<i64: 128, 128>}, {pipeline_mode = #tpu.pipeline_mode<synchronous>, transform_indices = @transform_3, window_bounds = array<i64: 1, 128>}, {pipeline_mode = #tpu.pipeline_mode<synchronous>, transform_indices = @transform_4, window_bounds = array<i64: 128, 128>}, {pipeline_mode = #tpu.pipeline_mode<synchronous>, transform_indices = @transform_5, window_bounds = array<i64: 1, 128>}, {pipeline_mode = #tpu.pipeline_mode<synchronous>, transform_indices = @transform_6, window_bounds = array<i64: 128, 128>}, {pipeline_mode = #tpu.pipeline_mode<synchronous>, transform_indices = @transform_7, window_bounds = array<i64: 1, 128>}, {pipeline_mode = #tpu.pipeline_mode<synchronous>, transform_indices = @transform_8, window_bounds = array<i64: 128, 128>}, {pipeline_mode = #tpu.pipeline_mode<synchronous>, transform_indices = @transform_9, window_bounds = array<i64: 1, 128>}, {pipeline_mode = #tpu.pipeline_mode<synchronous>, transform_indices = @transform_10, window_bounds = array<i64: 128, 128>}, {pipeline_mode = #tpu.pipeline_mode<synchronous>, transform_indices = @transform_11, window_bounds = array<i64: 1, 128>}, {pipeline_mode = #tpu.pipeline_mode<synchronous>, transform_indices = @transform_12, window_bounds = array<i64: 128, 128>}, {pipeline_mode = #tpu.pipeline_mode<synchronous>, transform_indices = @transform_13, window_bounds = array<i64: 128, 128>}, {pipeline_mode = #tpu.pipeline_mode<synchronous>, transform_indices = @transform_14, window_bounds = array<i64: 1, 128>}, {pipeline_mode = #tpu.pipeline_mode<synchronous>, transform_indices = @transform_15, window_bounds = array<i64: 128, 128>}, {pipeline_mode = #tpu.pipeline_mode<synchronous>, transform_indices = @transform_16, window_bounds = array<i64: 1, 128>}, {pipeline_mode = #tpu.pipeline_mode<synchronous>, transform_indices = @transform_17, window_bounds = array<i64: 128, 128>}, {pipeline_mode = #tpu.pipeline_mode<synchronous>, transform_indices = @transform_18, window_bounds = array<i64: 1, 128>}, {pipeline_mode = #tpu.pipeline_mode<synchronous>, transform_indices = @transform_19, window_bounds = array<i64: 128, 128>}, {pipeline_mode = #tpu.pipeline_mode<synchronous>, transform_indices = @transform_20, window_bounds = array<i64: 1, 128>}, {pipeline_mode = #tpu.pipeline_mode<synchronous>, transform_indices = @transform_21, window_bounds = array<i64: 128, 64>}, {pipeline_mode = #tpu.pipeline_mode<synchronous>, transform_indices = @transform_22, window_bounds = array<i64: 128, 64>}, {pipeline_mode = #tpu.pipeline_mode<synchronous>, transform_indices = @transform_23, window_bounds = array<i64: 1, 64>}, {pipeline_mode = #tpu.pipeline_mode<synchronous>, transform_indices = @transform_24, window_bounds = array<i64: 64, 128>}, {pipeline_mode = #tpu.pipeline_mode<synchronous>, transform_indices = @transform_25, window_bounds = array<i64: 128, 128>}, {pipeline_mode = #tpu.pipeline_mode<synchronous>, transform_indices = @transform_26, window_bounds = array<i64: 1, 128>}, {transform_indices = @transform_27, window_bounds = array<i64: 256, 128>}]} {
    %c0 = arith.constant 0 : index
    %c0_0 = arith.constant 0 : index
    %0 = vector.load %arg1[%c0, %c0_0] : memref<256x128xbf16, #tpu.memory_space<vmem>>, vector<256x128xbf16>
    %c0_1 = arith.constant 0 : index
    %c0_2 = arith.constant 0 : index
    %1 = vector.load %arg2[%c0_1, %c0_2] : memref<256x128xbf16, #tpu.memory_space<vmem>>, vector<256x128xbf16>
    %c0_3 = arith.constant 0 : index
    %c0_4 = arith.constant 0 : index
    %2 = vector.load %arg3[%c0_3, %c0_4] : memref<128x128xbf16, #tpu.memory_space<vmem>>, vector<128x128xbf16>
    %cst = arith.constant dense<0.000000e+00> : vector<256x128xf32>
    %3 = tpu.matmul %0, %2, %cst {dimension_numbers = #tpu.dot_dimension_numbers<[1], [0], [0], [1], [0, 0, 1, 1], [], []>} : vector<256x128xbf16>, vector<128x128xbf16>, vector<256x128xf32> -> vector<256x128xf32>
    %c0_5 = arith.constant 0 : index
    %c0_6 = arith.constant 0 : index
    %4 = vector.load %arg4[%c0_5, %c0_6] : memref<1x128xf32, #tpu.memory_space<vmem>>, vector<1x128xf32>
    %5 = vector.broadcast %4 : vector<1x128xf32> to vector<256x128xf32>
    %6 = arith.addf %3, %5 : vector<256x128xf32>
    %cst_7 = arith.constant 0.000000e+00 : f32
    %7 = vector.broadcast %cst_7 : f32 to vector<256x128xf32>
    %8 = arith.maximumf %6, %7 : vector<256x128xf32>
    %9 = arith.truncf %8 : vector<256x128xf32> to vector<256x128xbf16>
    %c0_8 = arith.constant 0 : index
    %c0_9 = arith.constant 0 : index
    %10 = vector.load %arg5[%c0_8, %c0_9] : memref<128x128xbf16, #tpu.memory_space<vmem>>, vector<128x128xbf16>
    %cst_10 = arith.constant dense<0.000000e+00> : vector<256x128xf32>
    %11 = tpu.matmul %9, %10, %cst_10 {dimension_numbers = #tpu.dot_dimension_numbers<[1], [0], [0], [1], [0, 0, 1, 1], [], []>} : vector<256x128xbf16>, vector<128x128xbf16>, vector<256x128xf32> -> vector<256x128xf32>
    %c0_11 = arith.constant 0 : index
    %c0_12 = arith.constant 0 : index
    %12 = vector.load %arg6[%c0_11, %c0_12] : memref<1x128xf32, #tpu.memory_space<vmem>>, vector<1x128xf32>
    %13 = vector.broadcast %12 : vector<1x128xf32> to vector<256x128xf32>
    %14 = arith.addf %11, %13 : vector<256x128xf32>
    %cst_13 = arith.constant 0.000000e+00 : f32
    %15 = vector.broadcast %cst_13 : f32 to vector<256x128xf32>
    %16 = arith.maximumf %14, %15 : vector<256x128xf32>
    %17 = arith.truncf %16 : vector<256x128xf32> to vector<256x128xbf16>
    %c0_14 = arith.constant 0 : index
    %c0_15 = arith.constant 0 : index
    %18 = vector.load %arg7[%c0_14, %c0_15] : memref<128x128xbf16, #tpu.memory_space<vmem>>, vector<128x128xbf16>
    %cst_16 = arith.constant dense<0.000000e+00> : vector<256x128xf32>
    %19 = tpu.matmul %17, %18, %cst_16 {dimension_numbers = #tpu.dot_dimension_numbers<[1], [0], [0], [1], [0, 0, 1, 1], [], []>} : vector<256x128xbf16>, vector<128x128xbf16>, vector<256x128xf32> -> vector<256x128xf32>
    %c0_17 = arith.constant 0 : index
    %c0_18 = arith.constant 0 : index
    %20 = vector.load %arg8[%c0_17, %c0_18] : memref<1x128xf32, #tpu.memory_space<vmem>>, vector<1x128xf32>
    %21 = vector.broadcast %20 : vector<1x128xf32> to vector<256x128xf32>
    %22 = arith.addf %19, %21 : vector<256x128xf32>
    %cst_19 = arith.constant 0.000000e+00 : f32
    %23 = vector.broadcast %cst_19 : f32 to vector<256x128xf32>
    %24 = arith.maximumf %22, %23 : vector<256x128xf32>
    %25 = arith.truncf %24 : vector<256x128xf32> to vector<256x128xbf16>
    %c0_20 = arith.constant 0 : index
    %c0_21 = arith.constant 0 : index
    %26 = vector.load %arg9[%c0_20, %c0_21] : memref<128x128xbf16, #tpu.memory_space<vmem>>, vector<128x128xbf16>
    %cst_22 = arith.constant dense<0.000000e+00> : vector<256x128xf32>
    %27 = tpu.matmul %25, %26, %cst_22 {dimension_numbers = #tpu.dot_dimension_numbers<[1], [0], [0], [1], [0, 0, 1, 1], [], []>} : vector<256x128xbf16>, vector<128x128xbf16>, vector<256x128xf32> -> vector<256x128xf32>
    %c0_23 = arith.constant 0 : index
    %c0_24 = arith.constant 0 : index
    %28 = vector.load %arg10[%c0_23, %c0_24] : memref<1x128xf32, #tpu.memory_space<vmem>>, vector<1x128xf32>
    %29 = vector.broadcast %28 : vector<1x128xf32> to vector<256x128xf32>
    %30 = arith.addf %27, %29 : vector<256x128xf32>
    %cst_25 = arith.constant 0.000000e+00 : f32
    %31 = vector.broadcast %cst_25 : f32 to vector<256x128xf32>
    %32 = arith.maximumf %30, %31 : vector<256x128xf32>
    %33 = arith.truncf %32 : vector<256x128xf32> to vector<256x128xbf16>
    %c0_26 = arith.constant 0 : index
    %c0_27 = arith.constant 0 : index
    %34 = vector.load %arg11[%c0_26, %c0_27] : memref<128x128xbf16, #tpu.memory_space<vmem>>, vector<128x128xbf16>
    %cst_28 = arith.constant dense<0.000000e+00> : vector<256x128xf32>
    %35 = tpu.matmul %33, %34, %cst_28 {dimension_numbers = #tpu.dot_dimension_numbers<[1], [0], [0], [1], [0, 0, 1, 1], [], []>} : vector<256x128xbf16>, vector<128x128xbf16>, vector<256x128xf32> -> vector<256x128xf32>
    %c0_29 = arith.constant 0 : index
    %c0_30 = arith.constant 0 : index
    %36 = vector.load %arg12[%c0_29, %c0_30] : memref<1x128xf32, #tpu.memory_space<vmem>>, vector<1x128xf32>
    %37 = vector.broadcast %36 : vector<1x128xf32> to vector<256x128xf32>
    %38 = arith.addf %35, %37 : vector<256x128xf32>
    %cst_31 = arith.constant 0.000000e+00 : f32
    %39 = vector.broadcast %cst_31 : f32 to vector<256x128xf32>
    %40 = arith.maximumf %38, %39 : vector<256x128xf32>
    %c0_32 = arith.constant 0 : index
    %c0_33 = arith.constant 0 : index
    %41 = vector.load %arg13[%c0_32, %c0_33] : memref<128x128xbf16, #tpu.memory_space<vmem>>, vector<128x128xbf16>
    %cst_34 = arith.constant dense<0.000000e+00> : vector<256x128xf32>
    %42 = tpu.matmul %0, %41, %cst_34 {dimension_numbers = #tpu.dot_dimension_numbers<[1], [0], [0], [1], [0, 0, 1, 1], [], []>} : vector<256x128xbf16>, vector<128x128xbf16>, vector<256x128xf32> -> vector<256x128xf32>
    %43 = arith.truncf %40 : vector<256x128xf32> to vector<256x128xbf16>
    %c0_35 = arith.constant 0 : index
    %c0_36 = arith.constant 0 : index
    %44 = vector.load %arg14[%c0_35, %c0_36] : memref<128x128xbf16, #tpu.memory_space<vmem>>, vector<128x128xbf16>
    %cst_37 = arith.constant dense<0.000000e+00> : vector<256x128xf32>
    %45 = tpu.matmul %43, %44, %cst_37 {dimension_numbers = #tpu.dot_dimension_numbers<[1], [0], [0], [1], [0, 0, 1, 1], [], []>} : vector<256x128xbf16>, vector<128x128xbf16>, vector<256x128xf32> -> vector<256x128xf32>
    %46 = arith.addf %42, %45 : vector<256x128xf32>
    %c0_38 = arith.constant 0 : index
    %c0_39 = arith.constant 0 : index
    %47 = vector.load %arg15[%c0_38, %c0_39] : memref<1x128xf32, #tpu.memory_space<vmem>>, vector<1x128xf32>
    %48 = vector.broadcast %47 : vector<1x128xf32> to vector<256x128xf32>
    %49 = arith.addf %46, %48 : vector<256x128xf32>
    %cst_40 = arith.constant 0.000000e+00 : f32
    %50 = vector.broadcast %cst_40 : f32 to vector<256x128xf32>
    %51 = arith.maximumf %49, %50 : vector<256x128xf32>
    %52 = arith.truncf %51 : vector<256x128xf32> to vector<256x128xbf16>
    %c0_41 = arith.constant 0 : index
    %c0_42 = arith.constant 0 : index
    %53 = vector.load %arg16[%c0_41, %c0_42] : memref<128x128xbf16, #tpu.memory_space<vmem>>, vector<128x128xbf16>
    %cst_43 = arith.constant dense<0.000000e+00> : vector<256x128xf32>
    %54 = tpu.matmul %52, %53, %cst_43 {dimension_numbers = #tpu.dot_dimension_numbers<[1], [0], [0], [1], [0, 0, 1, 1], [], []>} : vector<256x128xbf16>, vector<128x128xbf16>, vector<256x128xf32> -> vector<256x128xf32>
    %c0_44 = arith.constant 0 : index
    %c0_45 = arith.constant 0 : index
    %55 = vector.load %arg17[%c0_44, %c0_45] : memref<1x128xf32, #tpu.memory_space<vmem>>, vector<1x128xf32>
    %56 = vector.broadcast %55 : vector<1x128xf32> to vector<256x128xf32>
    %57 = arith.addf %54, %56 : vector<256x128xf32>
    %cst_46 = arith.constant 0.000000e+00 : f32
    %58 = vector.broadcast %cst_46 : f32 to vector<256x128xf32>
    %59 = arith.maximumf %57, %58 : vector<256x128xf32>
    %60 = arith.truncf %59 : vector<256x128xf32> to vector<256x128xbf16>
    %c0_47 = arith.constant 0 : index
    %c0_48 = arith.constant 0 : index
    %61 = vector.load %arg18[%c0_47, %c0_48] : memref<128x128xbf16, #tpu.memory_space<vmem>>, vector<128x128xbf16>
    %cst_49 = arith.constant dense<0.000000e+00> : vector<256x128xf32>
    %62 = tpu.matmul %60, %61, %cst_49 {dimension_numbers = #tpu.dot_dimension_numbers<[1], [0], [0], [1], [0, 0, 1, 1], [], []>} : vector<256x128xbf16>, vector<128x128xbf16>, vector<256x128xf32> -> vector<256x128xf32>
    %c0_50 = arith.constant 0 : index
    %c0_51 = arith.constant 0 : index
    %63 = vector.load %arg19[%c0_50, %c0_51] : memref<1x128xf32, #tpu.memory_space<vmem>>, vector<1x128xf32>
    %64 = vector.broadcast %63 : vector<1x128xf32> to vector<256x128xf32>
    %65 = arith.addf %62, %64 : vector<256x128xf32>
    %cst_52 = arith.constant 0.000000e+00 : f32
    %66 = vector.broadcast %cst_52 : f32 to vector<256x128xf32>
    %67 = arith.maximumf %65, %66 : vector<256x128xf32>
    %68 = arith.truncf %67 : vector<256x128xf32> to vector<256x128xbf16>
    %c0_53 = arith.constant 0 : index
    %c0_54 = arith.constant 0 : index
    %69 = vector.load %arg20[%c0_53, %c0_54] : memref<128x128xbf16, #tpu.memory_space<vmem>>, vector<128x128xbf16>
    %cst_55 = arith.constant dense<0.000000e+00> : vector<256x128xf32>
    %70 = tpu.matmul %68, %69, %cst_55 {dimension_numbers = #tpu.dot_dimension_numbers<[1], [0], [0], [1], [0, 0, 1, 1], [], []>} : vector<256x128xbf16>, vector<128x128xbf16>, vector<256x128xf32> -> vector<256x128xf32>
    %c0_56 = arith.constant 0 : index
    %c0_57 = arith.constant 0 : index
    %71 = vector.load %arg21[%c0_56, %c0_57] : memref<1x128xf32, #tpu.memory_space<vmem>>, vector<1x128xf32>
    %72 = vector.broadcast %71 : vector<1x128xf32> to vector<256x128xf32>
    %73 = arith.addf %70, %72 : vector<256x128xf32>
    %74 = arith.truncf %73 : vector<256x128xf32> to vector<256x128xbf16>
    %c0_58 = arith.constant 0 : index
    %c0_59 = arith.constant 0 : index
    %75 = vector.load %arg22[%c0_58, %c0_59] : memref<128x64xbf16, #tpu.memory_space<vmem>>, vector<128x64xbf16>
    %cst_60 = arith.constant dense<0.000000e+00> : vector<256x64xf32>
    %76 = tpu.matmul %74, %75, %cst_60 {dimension_numbers = #tpu.dot_dimension_numbers<[1], [0], [0], [1], [0, 0, 1, 1], [], []>} : vector<256x128xbf16>, vector<128x64xbf16>, vector<256x64xf32> -> vector<256x64xf32>
    %c0_61 = arith.constant 0 : index
    %c0_62 = arith.constant 0 : index
    %77 = vector.load %arg23[%c0_61, %c0_62] : memref<128x64xbf16, #tpu.memory_space<vmem>>, vector<128x64xbf16>
    %cst_63 = arith.constant dense<0.000000e+00> : vector<256x64xf32>
    %78 = tpu.matmul %1, %77, %cst_63 {dimension_numbers = #tpu.dot_dimension_numbers<[1], [0], [0], [1], [0, 0, 1, 1], [], []>} : vector<256x128xbf16>, vector<128x64xbf16>, vector<256x64xf32> -> vector<256x64xf32>
    %79 = arith.addf %76, %78 : vector<256x64xf32>
    %c0_64 = arith.constant 0 : index
    %c0_65 = arith.constant 0 : index
    %80 = vector.load %arg24[%c0_64, %c0_65] : memref<1x64xf32, #tpu.memory_space<vmem>>, vector<1x64xf32>
    %81 = vector.broadcast %80 : vector<1x64xf32> to vector<256x64xf32>
    %82 = arith.addf %79, %81 : vector<256x64xf32>
    %cst_66 = arith.constant 0.000000e+00 : f32
    %83 = vector.broadcast %cst_66 : f32 to vector<256x64xf32>
    %84 = arith.maximumf %82, %83 : vector<256x64xf32>
    %85 = arith.truncf %84 : vector<256x64xf32> to vector<256x64xbf16>
    %c0_67 = arith.constant 0 : index
    %c0_68 = arith.constant 0 : index
    %86 = vector.load %arg25[%c0_67, %c0_68] : memref<64x128xbf16, #tpu.memory_space<vmem>>, vector<64x128xbf16>
    %cst_69 = arith.constant dense<0.000000e+00> : vector<256x128xf32>
    %87 = tpu.matmul %85, %86, %cst_69 {dimension_numbers = #tpu.dot_dimension_numbers<[1], [0], [0], [1], [0, 0, 1, 1], [], []>} : vector<256x64xbf16>, vector<64x128xbf16>, vector<256x128xf32> -> vector<256x128xf32>
    %88 = arith.truncf %67 : vector<256x128xf32> to vector<256x128xbf16>
    %c0_70 = arith.constant 0 : index
    %c0_71 = arith.constant 0 : index
    %89 = vector.load %arg26[%c0_70, %c0_71] : memref<128x128xbf16, #tpu.memory_space<vmem>>, vector<128x128xbf16>
    %cst_72 = arith.constant dense<0.000000e+00> : vector<256x128xf32>
    %90 = tpu.matmul %88, %89, %cst_72 {dimension_numbers = #tpu.dot_dimension_numbers<[1], [0], [0], [1], [0, 0, 1, 1], [], []>} : vector<256x128xbf16>, vector<128x128xbf16>, vector<256x128xf32> -> vector<256x128xf32>
    %91 = arith.addf %87, %90 : vector<256x128xf32>
    %c0_73 = arith.constant 0 : index
    %c0_74 = arith.constant 0 : index
    %92 = vector.load %arg27[%c0_73, %c0_74] : memref<1x128xf32, #tpu.memory_space<vmem>>, vector<1x128xf32>
    %93 = vector.broadcast %92 : vector<1x128xf32> to vector<256x128xf32>
    %94 = arith.addf %91, %93 : vector<256x128xf32>
    %c0_75 = arith.constant 0 : index
    %c0_76 = arith.constant 0 : index
    %95 = vector.load %arg28[%c0_75, %c0_76] : memref<256x128xf32, #tpu.memory_space<vmem>>, vector<256x128xf32>
    tpu.vector_store %arg28[%c0_75, %c0_76], %94 {strides = array<i32>} : memref<256x128xf32, #tpu.memory_space<vmem>>, vector<256x128xf32>,
    return
  }
  func.func @transform_0(%arg0: i32) -> (i32, i32) {
    %c0_i32 = arith.constant 0 : i32
    %c0_i32_0 = arith.constant 0 : i32
    return %arg0, %c0_i32 : i32, i32
  }
  func.func @transform_1(%arg0: i32) -> (i32, i32) {
    %c0_i32 = arith.constant 0 : i32
    %c0_i32_0 = arith.constant 0 : i32
    return %arg0, %c0_i32 : i32, i32
  }
  func.func @transform_2(%arg0: i32) -> (i32, i32) {
    %c0_i32 = arith.constant 0 : i32
    %c0_i32_0 = arith.constant 0 : i32
    %c0_i32_1 = arith.constant 0 : i32
    return %c0_i32, %c0_i32_0 : i32, i32
  }
  func.func @transform_3(%arg0: i32) -> (i32, i32) {
    %c0_i32 = arith.constant 0 : i32
    %c0_i32_0 = arith.constant 0 : i32
    %c0_i32_1 = arith.constant 0 : i32
    return %c0_i32, %c0_i32_0 : i32, i32
  }
  func.func @transform_4(%arg0: i32) -> (i32, i32) {
    %c0_i32 = arith.constant 0 : i32
    %c0_i32_0 = arith.constant 0 : i32
    %c0_i32_1 = arith.constant 0 : i32
    return %c0_i32, %c0_i32_0 : i32, i32
  }
  func.func @transform_5(%arg0: i32) -> (i32, i32) {
    %c0_i32 = arith.constant 0 : i32
    %c0_i32_0 = arith.constant 0 : i32
    %c0_i32_1 = arith.constant 0 : i32
    return %c0_i32, %c0_i32_0 : i32, i32
  }
  func.func @transform_6(%arg0: i32) -> (i32, i32) {
    %c0_i32 = arith.constant 0 : i32
    %c0_i32_0 = arith.constant 0 : i32
    %c0_i32_1 = arith.constant 0 : i32
    return %c0_i32, %c0_i32_0 : i32, i32
  }
  func.func @transform_7(%arg0: i32) -> (i32, i32) {
    %c0_i32 = arith.constant 0 : i32
    %c0_i32_0 = arith.constant 0 : i32
    %c0_i32_1 = arith.constant 0 : i32
    return %c0_i32, %c0_i32_0 : i32, i32
  }
  func.func @transform_8(%arg0: i32) -> (i32, i32) {
    %c0_i32 = arith.constant 0 : i32
    %c0_i32_0 = arith.constant 0 : i32
    %c0_i32_1 = arith.constant 0 : i32
    return %c0_i32, %c0_i32_0 : i32, i32
  }
  func.func @transform_9(%arg0: i32) -> (i32, i32) {
    %c0_i32 = arith.constant 0 : i32
    %c0_i32_0 = arith.constant 0 : i32
    %c0_i32_1 = arith.constant 0 : i32
    return %c0_i32, %c0_i32_0 : i32, i32
  }
  func.func @transform_10(%arg0: i32) -> (i32, i32) {
    %c0_i32 = arith.constant 0 : i32
    %c0_i32_0 = arith.constant 0 : i32
    %c0_i32_1 = arith.constant 0 : i32
    return %c0_i32, %c0_i32_0 : i32, i32
  }
  func.func @transform_11(%arg0: i32) -> (i32, i32) {
    %c0_i32 = arith.constant 0 : i32
    %c0_i32_0 = arith.constant 0 : i32
    %c0_i32_1 = arith.constant 0 : i32
    return %c0_i32, %c0_i32_0 : i32, i32
  }
  func.func @transform_12(%arg0: i32) -> (i32, i32) {
    %c0_i32 = arith.constant 0 : i32
    %c0_i32_0 = arith.constant 0 : i32
    %c0_i32_1 = arith.constant 0 : i32
    return %c0_i32, %c0_i32_0 : i32, i32
  }
  func.func @transform_13(%arg0: i32) -> (i32, i32) {
    %c0_i32 = arith.constant 0 : i32
    %c0_i32_0 = arith.constant 0 : i32
    %c0_i32_1 = arith.constant 0 : i32
    return %c0_i32, %c0_i32_0 : i32, i32
  }
  func.func @transform_14(%arg0: i32) -> (i32, i32) {
    %c0_i32 = arith.constant 0 : i32
    %c0_i32_0 = arith.constant 0 : i32
    %c0_i32_1 = arith.constant 0 : i32
    return %c0_i32, %c0_i32_0 : i32, i32
  }
  func.func @transform_15(%arg0: i32) -> (i32, i32) {
    %c0_i32 = arith.constant 0 : i32
    %c0_i32_0 = arith.constant 0 : i32
    %c0_i32_1 = arith.constant 0 : i32
    return %c0_i32, %c0_i32_0 : i32, i32
  }
  func.func @transform_16(%arg0: i32) -> (i32, i32) {
    %c0_i32 = arith.constant 0 : i32
    %c0_i32_0 = arith.constant 0 : i32
    %c0_i32_1 = arith.constant 0 : i32
    return %c0_i32, %c0_i32_0 : i32, i32
  }
  func.func @transform_17(%arg0: i32) -> (i32, i32) {
    %c0_i32 = arith.constant 0 : i32
    %c0_i32_0 = arith.constant 0 : i32
    %c0_i32_1 = arith.constant 0 : i32
    return %c0_i32, %c0_i32_0 : i32, i32
  }
  func.func @transform_18(%arg0: i32) -> (i32, i32) {
    %c0_i32 = arith.constant 0 : i32
    %c0_i32_0 = arith.constant 0 : i32
    %c0_i32_1 = arith.constant 0 : i32
    return %c0_i32, %c0_i32_0 : i32, i32
  }
  func.func @transform_19(%arg0: i32) -> (i32, i32) {
    %c0_i32 = arith.constant 0 : i32
    %c0_i32_0 = arith.constant 0 : i32
    %c0_i32_1 = arith.constant 0 : i32
    return %c0_i32, %c0_i32_0 : i32, i32
  }
  func.func @transform_20(%arg0: i32) -> (i32, i32) {
    %c0_i32 = arith.constant 0 : i32
    %c0_i32_0 = arith.constant 0 : i32
    %c0_i32_1 = arith.constant 0 : i32
    return %c0_i32, %c0_i32_0 : i32, i32
  }
  func.func @transform_21(%arg0: i32) -> (i32, i32) {
    %c0_i32 = arith.constant 0 : i32
    %c0_i32_0 = arith.constant 0 : i32
    %c0_i32_1 = arith.constant 0 : i32
    return %c0_i32, %c0_i32_0 : i32, i32
  }
  func.func @transform_22(%arg0: i32) -> (i32, i32) {
    %c0_i32 = arith.constant 0 : i32
    %c0_i32_0 = arith.constant 0 : i32
    %c0_i32_1 = arith.constant 0 : i32
    return %c0_i32, %c0_i32_0 : i32, i32
  }
  func.func @transform_23(%arg0: i32) -> (i32, i32) {
    %c0_i32 = arith.constant 0 : i32
    %c0_i32_0 = arith.constant 0 : i32
    %c0_i32_1 = arith.constant 0 : i32
    return %c0_i32, %c0_i32_0 : i32, i32
  }
  func.func @transform_24(%arg0: i32) -> (i32, i32) {
    %c0_i32 = arith.constant 0 : i32
    %c0_i32_0 = arith.constant 0 : i32
    %c0_i32_1 = arith.constant 0 : i32
    return %c0_i32, %c0_i32_0 : i32, i32
  }
  func.func @transform_25(%arg0: i32) -> (i32, i32) {
    %c0_i32 = arith.constant 0 : i32
    %c0_i32_0 = arith.constant 0 : i32
    %c0_i32_1 = arith.constant 0 : i32
    return %c0_i32, %c0_i32_0 : i32, i32
  }
  func.func @transform_26(%arg0: i32) -> (i32, i32) {
    %c0_i32 = arith.constant 0 : i32
    %c0_i32_0 = arith.constant 0 : i32
    %c0_i32_1 = arith.constant 0 : i32
    return %c0_i32, %c0_i32_0 : i32, i32
  }
  func.func @transform_27(%arg0: i32) -> (i32, i32) {
    %c0_i32 = arith.constant 0 : i32
    %c0_i32_0 = arith.constant 0 : i32
    return %arg0, %c0_i32 : i32, i32
  }
}

</mosaic_0001>

<llo_original>
// kernel: tpu_custom_call.1
$region0: #{tpu_custom_call.1}
  #allocation0 [shape = 'u32[]', space=smem, size = 0x4, offset = 0x4, fixed_abs, tag = 'smem constant byte address 0x4 - core index']
  #allocation1 [shape = 'u32[144,128]{1,0:T(1,128)}', space=vmem, size = 0x12000, scoped, tag = 'internal scratch']
  %s0 = inlined_call_operand.hbm [shape: bf16[1024,128], index: 0, kind: input, shape index: {}]
  %s1 = inlined_call_operand.hbm [shape: bf16[1024,128], index: 1, kind: input, shape index: {}]
  %s2 = inlined_call_operand.vmem [shape: bf16[128,128], index: 2, kind: input, shape index: {}]
  %s3 = inlined_call_operand.hbm [shape: f32[1,128], index: 3, kind: input, shape index: {}]
  %s4 = inlined_call_operand.vmem [shape: bf16[128,128], index: 4, kind: input, shape index: {}]
  %s5 = inlined_call_operand.hbm [shape: f32[1,128], index: 5, kind: input, shape index: {}]
  %s6 = inlined_call_operand.vmem [shape: bf16[128,128], index: 6, kind: input, shape index: {}]
  %s7 = inlined_call_operand.hbm [shape: f32[1,128], index: 7, kind: input, shape index: {}]
  %s8 = inlined_call_operand.hbm [shape: bf16[128,128], index: 8, kind: input, shape index: {}]
  %s9 = inlined_call_operand.hbm [shape: f32[1,128], index: 9, kind: input, shape index: {}]
  %s10 = inlined_call_operand.hbm [shape: bf16[128,128], index: 10, kind: input, shape index: {}]
  %s11 = inlined_call_operand.hbm [shape: f32[1,128], index: 11, kind: input, shape index: {}]
  %s12 = inlined_call_operand.hbm [shape: bf16[128,128], index: 12, kind: input, shape index: {}]
  %s13 = inlined_call_operand.hbm [shape: bf16[128,128], index: 13, kind: input, shape index: {}]
  %s14 = inlined_call_operand.hbm [shape: f32[1,128], index: 14, kind: input, shape index: {}]
  %s15 = inlined_call_operand.hbm [shape: bf16[128,128], index: 15, kind: input, shape index: {}]
  %s16 = inlined_call_operand.hbm [shape: f32[1,128], index: 16, kind: input, shape index: {}]
  %s17 = inlined_call_operand.vmem [shape: bf16[128,128], index: 17, kind: input, shape index: {}]
  %s18 = inlined_call_operand.vmem [shape: f32[1,128], index: 18, kind: input, shape index: {}]
  %s19 = inlined_call_operand.hbm [shape: bf16[128,128], index: 19, kind: input, shape index: {}]
  %s20 = inlined_call_operand.vmem [shape: f32[1,128], index: 20, kind: input, shape index: {}]
  %s21 = inlined_call_operand.vmem [shape: bf16[128,64], index: 21, kind: input, shape index: {}]
  %s22 = inlined_call_operand.vmem [shape: bf16[128,64], index: 22, kind: input, shape index: {}]
  %s23 = inlined_call_operand.vmem [shape: f32[1,64], index: 23, kind: input, shape index: {}]
  %s24 = inlined_call_operand.hbm [shape: bf16[64,128], index: 24, kind: input, shape index: {}]
  %s25 = inlined_call_operand.hbm [shape: bf16[128,128], index: 25, kind: input, shape index: {}]
  %s26 = inlined_call_operand.vmem [shape: f32[1,128], index: 26, kind: input, shape index: {}]
  %s27 = inlined_call_operand.hbm [shape: f32[1024,128], index: 27, kind: output, shape index: {}]
  %s28 = sld [smem:[#allocation0]]
  $region209: #{tpu_custom_call.1} parent=0
    _
  %s30 = ssub.s32 1, %s28
  %s31 = scalar_select 0, %s30, %s28
  $region1: #{tpu_custom_call.1} parent=0
    #allocation2 [shape = 'u8[131072]{0}', space=vmem, size = 0x20000, scoped, tag = 'input window, operand 0']
    #allocation3 [shape = 's32[2]{0}', space=sflag, size = 0x8, scoped, tag = 'scoped memory for tpu_custom_call.1']
    #allocation4 [shape = 's32[2]{0}', space=sflag, size = 0x8, scoped, tag = 'scoped memory for tpu_custom_call.1']
    #allocation5 [shape = 'u8[131072]{0}', space=vmem, size = 0x20000, scoped, tag = 'input window, operand 1']
    #allocation6 [shape = 's32[2]{0}', space=sflag, size = 0x8, scoped, tag = 'scoped memory for tpu_custom_call.1']
    #allocation7 [shape = 'u8[512]{0}', space=vmem, size = 0x400, scoped, tag = 'input window, operand 3, single buffered']
    #allocation8 [shape = 'u8[512]{0}', space=vmem, size = 0x400, scoped, tag = 'input window, operand 5, single buffered']
    #allocation9 [shape = 's32[1]{0}', space=sflag, size = 0x4, scoped, tag = 'scoped memory for tpu_custom_call.1']
    #allocation10 [shape = 'u8[512]{0}', space=vmem, size = 0x400, scoped, tag = 'input window, operand 7, single buffered']
    #allocation11 [shape = 'u8[32768]{0}', space=vmem, size = 0x8000, scoped, tag = 'input window, operand 8, single buffered']
    #allocation12 [shape = 's32[1]{0}', space=sflag, size = 0x4, scoped, tag = 'scoped memory for tpu_custom_call.1']
    #allocation13 [shape = 'u8[512]{0}', space=vmem, size = 0x400, scoped, tag = 'input window, operand 9, single buffered']
    #allocation14 [shape = 'u8[32768]{0}', space=vmem, size = 0x8000, scoped, tag = 'input window, operand 10, single buffered']
    #allocation15 [shape = 's32[1]{0}', space=sflag, size = 0x4, scoped, tag = 'scoped memory for tpu_custom_call.1']
    #allocation16 [shape = 'u8[512]{0}', space=vmem, size = 0x400, scoped, tag = 'input window, operand 11, single buffered']
    #allocation17 [shape = 'u8[32768]{0}', space=vmem, size = 0x8000, scoped, tag = 'input window, operand 12, single buffered']
    #allocation18 [shape = 's32[1]{0}', space=sflag, size = 0x4, scoped, tag = 'scoped memory for tpu_custom_call.1']
    #allocation19 [shape = 'u8[32768]{0}', space=vmem, size = 0x8000, scoped, tag = 'input window, operand 13, single buffered']
    #allocation20 [shape = 'u8[512]{0}', space=vmem, size = 0x400, scoped, tag = 'input window, operand 14, single buffered']
    #allocation21 [shape = 's32[1]{0}', space=sflag, size = 0x4, scoped, tag = 'scoped memory for tpu_custom_call.1']
    #allocation22 [shape = 'u8[32768]{0}', space=vmem, size = 0x8000, scoped, tag = 'input window, operand 15, single buffered']
    #allocation23 [shape = 'u8[512]{0}', space=vmem, size = 0x400, scoped, tag = 'input window, operand 16, single buffered']
    #allocation24 [shape = 's32[1]{0}', space=sflag, size = 0x4, scoped, tag = 'scoped memory for tpu_custom_call.1']
    #allocation25 [shape = 'u8[32768]{0}', space=vmem, size = 0x8000, scoped, tag = 'input window, operand 19, single buffered']
    #allocation26 [shape = 'u8[16384]{0}', space=vmem, size = 0x4000, scoped, tag = 'input window, operand 24, single buffered']
    #allocation27 [shape = 's32[1]{0}', space=sflag, size = 0x4, scoped, tag = 'scoped memory for tpu_custom_call.1']
    #allocation28 [shape = 'u8[32768]{0}', space=vmem, size = 0x8000, scoped, tag = 'input window, operand 25, single buffered']
    #allocation29 [shape = 'u8[262144]{0}', space=vmem, size = 0x40000, scoped, tag = 'output window, operand 0']
    %32 = vsyncpa [#allocation3], 0
    %s33 = scalar_lea.sflag [#allocation3], 1
    %34 = vsyncpa %s33, 0
    %35 = vsyncpa [#allocation6], 0
    %s36 = scalar_lea.sflag [#allocation6], 1
    %37 = vsyncpa %s36, 0
    %38 = vsyncpa [#allocation9], 0
    %39 = vsyncpa [#allocation12], 0
    %40 = vsyncpa [#allocation15], 0
    %41 = vsyncpa [#allocation18], 0
    %42 = vsyncpa [#allocation21], 0
    %43 = vsyncpa [#allocation24], 0
    %44 = vsyncpa [#allocation27], 0
    %45 = vsyncpa [#allocation4], 0
    %s46 = scalar_lea.sflag [#allocation4], 1
    %47 = vsyncpa %s46, 0
    loop: start=0, step=1, limit=6
    $region2: #{tpu_custom_call.1} parent=1 // loop_pre_header
      _
    $region3: #{tpu_custom_call.1} parent=1 // loop_header
      %s49 = sphi 0, %s53
      %p50 = scmp.ge.s32.totalorder %s49, 6
      %s59 = sphi 0, %s61
      %s62 = sphi 0, %s59
      %s63 = sphi 0, %s62
      %s79 = sphi 0, %s63
      %s85 = sphi 0, %s87
      %s88 = sphi 0, %s85
      %s89 = sphi 0, %s88
      %s105 = sphi 0, %s89
      %s109 = sphi 0, %s109
      %s111 = sphi 0, %s109
      %s112 = sphi 0, %s111
      %s126 = sphi 0, %s112
      %s130 = sphi 0, %s130
      %s132 = sphi 0, %s130
      %s133 = sphi 0, %s132
      %s147 = sphi 0, %s133
      %s151 = sphi 0, %s151
      %s153 = sphi 0, %s151
      %s154 = sphi 0, %s153
      %s168 = sphi 0, %s154
      %s172 = sphi 0, %s172
      %s174 = sphi 0, %s172
      %s175 = sphi 0, %s174
      %s189 = sphi 0, %s175
      %s193 = sphi 0, %s193
      %s195 = sphi 0, %s193
      %s196 = sphi 0, %s195
      %s210 = sphi 0, %s196
      %s214 = sphi 0, %s214
      %s216 = sphi 0, %s214
      %s217 = sphi 0, %s216
      %s231 = sphi 0, %s217
      %s235 = sphi 0, %s235
      %s237 = sphi 0, %s235
      %s238 = sphi 0, %s237
      %s252 = sphi 0, %s238
      %s256 = sphi 0, %s256
      %s258 = sphi 0, %s256
      %s259 = sphi 0, %s258
      %s273 = sphi 0, %s259
      %s277 = sphi 0, %s277
      %s279 = sphi 0, %s277
      %s280 = sphi 0, %s279
      %s294 = sphi 0, %s280
      %s298 = sphi 0, %s298
      %s300 = sphi 0, %s298
      %s301 = sphi 0, %s300
      %s315 = sphi 0, %s301
      %s319 = sphi 0, %s319
      %s321 = sphi 0, %s319
      %s322 = sphi 0, %s321
      %s336 = sphi 0, %s322
      %s340 = sphi 0, %s340
      %s342 = sphi 0, %s340
      %s343 = sphi 0, %s342
      %s357 = sphi 0, %s343
      %s361 = sphi 0, %s361
      %s363 = sphi 0, %s361
      %s364 = sphi 0, %s363
      %s378 = sphi 0, %s364
      %s382 = sphi 0, %s382
      %s384 = sphi 0, %s382
      %s385 = sphi 0, %s384
      %s399 = sphi 0, %s385
      %s403 = sphi 0, %s403
      %s405 = sphi 0, %s403
      %s406 = sphi 0, %s405
      %s420 = sphi 0, %s406
      %s424 = sphi 0, %s424
      %s426 = sphi 0, %s424
      %s427 = sphi 0, %s426
      %s441 = sphi 0, %s427
      %s445 = sphi 0, %s445
      %s447 = sphi 0, %s445
      %s448 = sphi 0, %s447
      %s462 = sphi 0, %s448
      %s466 = sphi 0, %s466
      %s468 = sphi 0, %s466
      %s469 = sphi 0, %s468
      %s483 = sphi 0, %s469
      %s487 = sphi 0, %s487
      %s489 = sphi 0, %s487
      %s490 = sphi 0, %s489
      %s504 = sphi 0, %s490
      %s508 = sphi 0, %s508
      %s510 = sphi 0, %s508
      %s511 = sphi 0, %s510
      %s525 = sphi 0, %s511
      %s529 = sphi 0, %s529
      %s531 = sphi 0, %s529
      %s532 = sphi 0, %s531
      %s546 = sphi 0, %s532
      %s550 = sphi 0, %s550
      %s552 = sphi 0, %s550
      %s553 = sphi 0, %s552
      %s567 = sphi 0, %s553
      %s571 = sphi 0, %s571
      %s573 = sphi 0, %s571
      %s574 = sphi 0, %s573
      %s588 = sphi 0, %s574
      %s592 = sphi 0, %s592
      %s594 = sphi 0, %s592
      %s595 = sphi 0, %s594
      %s609 = sphi 0, %s595
      %s613 = sphi 0, %s613
      %s615 = sphi 0, %s613
      %s616 = sphi 0, %s615
      %s630 = sphi 0, %s616
      %s636 = sphi 0, %s638
      %s639 = sphi 0, %s636
      %s640 = sphi 0, %s639
      %s656 = sphi 0, %s640
    $region4: #{tpu_custom_call.1} parent=1 // loop_header_branch
      %52 = sbr.rel (%p50) target = $region8
    $region5: #{tpu_custom_call.1} parent=1 // loop_body
      %s54 = ssub.s32 %s49, 1
      %s55 = ssub.s32 %s49, 2
      %s56 = sadd.s32 %s49, 1
      %s57 = ssub.s32 %s49, %s56
      %p58 = scmp.eq.s32.totalorder %s57, 0
      %s60 = sadd.s32 %s59, 1
      %s61 = scalar_select %p58, %s59, %s60
      %p64 = pneg %p58
      %p65 = scmp.eq.s32.totalorder %s49, 3
      %p66 = por %p64, %p65
      %p67 = scmp.ne.s32.totalorder %s59, %s62
      %p68 = scmp.eq.s32.totalorder %s49, 0
      %p69 = por %p67, %p68
      %p70 = scmp.ne.s32.totalorder %s59, %s62
      %p71 = scmp.eq.s32.totalorder %s54, 3
      %p72 = por %p70, %p71
      %p73 = scmp.ne.s32.totalorder %s62, %s63
      %p74 = scmp.eq.s32.totalorder %s54, 0
      %p75 = por %p73, %p74
      %p76 = scmp.ne.s32.totalorder %s62, %s63
      %p77 = scmp.eq.s32.totalorder %s55, 3
      %p78 = por %p76, %p77
      %p80 = scmp.ne.s32.totalorder %s63, %s79
      %p81 = scmp.eq.s32.totalorder %s55, 0
      %p82 = por %p80, %p81
      %s83 = ssub.s32 %s49, %s56
      %p84 = scmp.eq.s32.totalorder %s83, 0
      %s86 = sadd.s32 %s85, 1
      %s87 = scalar_select %p84, %s85, %s86
      %p90 = pneg %p84
      %p91 = scmp.eq.s32.totalorder %s49, 3
      %p92 = por %p90, %p91
      %p93 = scmp.ne.s32.totalorder %s85, %s88
      %p94 = scmp.eq.s32.totalorder %s49, 0
      %p95 = por %p93, %p94
      %p96 = scmp.ne.s32.totalorder %s85, %s88
      %p97 = scmp.eq.s32.totalorder %s54, 3
      %p98 = por %p96, %p97
      %p99 = scmp.ne.s32.totalorder %s88, %s89
      %p100 = scmp.eq.s32.totalorder %s54, 0
      %p101 = por %p99, %p100
      %p102 = scmp.ne.s32.totalorder %s88, %s89
      %p103 = scmp.eq.s32.totalorder %s55, 3
      %p104 = por %p102, %p103
      %p106 = scmp.ne.s32.totalorder %s89, %s105
      %p107 = scmp.eq.s32.totalorder %s55, 0
      %p108 = por %p106, %p107
      %s110 = sadd.s32 %s109, 1
      %p113 = scmp.eq.s32.totalorder %s49, 3
      %p114 = scmp.ne.s32.totalorder %s109, %s111
      %p115 = scmp.eq.s32.totalorder %s49, 0
      %p116 = por %p114, %p115
      %p117 = scmp.ne.s32.totalorder %s109, %s111
      %p118 = scmp.eq.s32.totalorder %s54, 3
      %p119 = por %p117, %p118
      %p120 = scmp.ne.s32.totalorder %s111, %s112
      %p121 = scmp.eq.s32.totalorder %s54, 0
      %p122 = por %p120, %p121
      %p123 = scmp.ne.s32.totalorder %s111, %s112
      %p124 = scmp.eq.s32.totalorder %s55, 3
      %p125 = por %p123, %p124
      %p127 = scmp.ne.s32.totalorder %s112, %s126
      %p128 = scmp.eq.s32.totalorder %s55, 0
      %p129 = por %p127, %p128
      %s131 = sadd.s32 %s130, 1
      %p134 = scmp.eq.s32.totalorder %s49, 3
      %p135 = scmp.ne.s32.totalorder %s130, %s132
      %p136 = scmp.eq.s32.totalorder %s49, 0
      %p137 = por %p135, %p136
      %p138 = scmp.ne.s32.totalorder %s130, %s132
      %p139 = scmp.eq.s32.totalorder %s54, 3
      %p140 = por %p138, %p139
      %p141 = scmp.ne.s32.totalorder %s132, %s133
      %p142 = scmp.eq.s32.totalorder %s54, 0
      %p143 = por %p141, %p142
      %p144 = scmp.ne.s32.totalorder %s132, %s133
      %p145 = scmp.eq.s32.totalorder %s55, 3
      %p146 = por %p144, %p145
      %p148 = scmp.ne.s32.totalorder %s133, %s147
      %p149 = scmp.eq.s32.totalorder %s55, 0
      %p150 = por %p148, %p149
      %s152 = sadd.s32 %s151, 1
      %p155 = scmp.eq.s32.totalorder %s49, 3
      %p156 = scmp.ne.s32.totalorder %s151, %s153
      %p157 = scmp.eq.s32.totalorder %s49, 0
      %p158 = por %p156, %p157
      %p159 = scmp.ne.s32.totalorder %s151, %s153
      %p160 = scmp.eq.s32.totalorder %s54, 3
      %p161 = por %p159, %p160
      %p162 = scmp.ne.s32.totalorder %s153, %s154
      %p163 = scmp.eq.s32.totalorder %s54, 0
      %p164 = por %p162, %p163
      %p165 = scmp.ne.s32.totalorder %s153, %s154
      %p166 = scmp.eq.s32.totalorder %s55, 3
      %p167 = por %p165, %p166
      %p169 = scmp.ne.s32.totalorder %s154, %s168
      %p170 = scmp.eq.s32.totalorder %s55, 0
      %p171 = por %p169, %p170
      %s173 = sadd.s32 %s172, 1
      %p176 = scmp.eq.s32.totalorder %s49, 3
      %p177 = scmp.ne.s32.totalorder %s172, %s174
      %p178 = scmp.eq.s32.totalorder %s49, 0
      %p179 = por %p177, %p178
      %p180 = scmp.ne.s32.totalorder %s172, %s174
      %p181 = scmp.eq.s32.totalorder %s54, 3
      %p182 = por %p180, %p181
      %p183 = scmp.ne.s32.totalorder %s174, %s175
      %p184 = scmp.eq.s32.totalorder %s54, 0
      %p185 = por %p183, %p184
      %p186 = scmp.ne.s32.totalorder %s174, %s175
      %p187 = scmp.eq.s32.totalorder %s55, 3
      %p188 = por %p186, %p187
      %p190 = scmp.ne.s32.totalorder %s175, %s189
      %p191 = scmp.eq.s32.totalorder %s55, 0
      %p192 = por %p190, %p191
      %s194 = sadd.s32 %s193, 1
      %p197 = scmp.eq.s32.totalorder %s49, 3
      %p198 = scmp.ne.s32.totalorder %s193, %s195
      %p199 = scmp.eq.s32.totalorder %s49, 0
      %p200 = por %p198, %p199
      %p201 = scmp.ne.s32.totalorder %s193, %s195
      %p202 = scmp.eq.s32.totalorder %s54, 3
      %p203 = por %p201, %p202
      %p204 = scmp.ne.s32.totalorder %s195, %s196
      %p205 = scmp.eq.s32.totalorder %s54, 0
      %p206 = por %p204, %p205
      %p207 = scmp.ne.s32.totalorder %s195, %s196
      %p208 = scmp.eq.s32.totalorder %s55, 3
      %p209 = por %p207, %p208
      %p211 = scmp.ne.s32.totalorder %s196, %s210
      %p212 = scmp.eq.s32.totalorder %s55, 0
      %p213 = por %p211, %p212
      %s215 = sadd.s32 %s214, 1
      %p218 = scmp.eq.s32.totalorder %s49, 3
      %p219 = scmp.ne.s32.totalorder %s214, %s216
      %p220 = scmp.eq.s32.totalorder %s49, 0
      %p221 = por %p219, %p220
      %p222 = scmp.ne.s32.totalorder %s214, %s216
      %p223 = scmp.eq.s32.totalorder %s54, 3
      %p224 = por %p222, %p223
      %p225 = scmp.ne.s32.totalorder %s216, %s217
      %p226 = scmp.eq.s32.totalorder %s54, 0
      %p227 = por %p225, %p226
      %p228 = scmp.ne.s32.totalorder %s216, %s217
      %p229 = scmp.eq.s32.totalorder %s55, 3
      %p230 = por %p228, %p229
      %p232 = scmp.ne.s32.totalorder %s217, %s231
      %p233 = scmp.eq.s32.totalorder %s55, 0
      %p234 = por %p232, %p233
      %s236 = sadd.s32 %s235, 1
      %p239 = scmp.eq.s32.totalorder %s49, 3
      %p240 = scmp.ne.s32.totalorder %s235, %s237
      %p241 = scmp.eq.s32.totalorder %s49, 0
      %p242 = por %p240, %p241
      %p243 = scmp.ne.s32.totalorder %s235, %s237
      %p244 = scmp.eq.s32.totalorder %s54, 3
      %p245 = por %p243, %p244
      %p246 = scmp.ne.s32.totalorder %s237, %s238
      %p247 = scmp.eq.s32.totalorder %s54, 0
      %p248 = por %p246, %p247
      %p249 = scmp.ne.s32.totalorder %s237, %s238
      %p250 = scmp.eq.s32.totalorder %s55, 3
      %p251 = por %p249, %p250
      %p253 = scmp.ne.s32.totalorder %s238, %s252
      %p254 = scmp.eq.s32.totalorder %s55, 0
      %p255 = por %p253, %p254
      %s257 = sadd.s32 %s256, 1
      %p260 = scmp.eq.s32.totalorder %s49, 3
      %p261 = scmp.ne.s32.totalorder %s256, %s258
      %p262 = scmp.eq.s32.totalorder %s49, 0
      %p263 = por %p261, %p262
      %p264 = scmp.ne.s32.totalorder %s256, %s258
      %p265 = scmp.eq.s32.totalorder %s54, 3
      %p266 = por %p264, %p265
      %p267 = scmp.ne.s32.totalorder %s258, %s259
      %p268 = scmp.eq.s32.totalorder %s54, 0
      %p269 = por %p267, %p268
      %p270 = scmp.ne.s32.totalorder %s258, %s259
      %p271 = scmp.eq.s32.totalorder %s55, 3
      %p272 = por %p270, %p271
      %p274 = scmp.ne.s32.totalorder %s259, %s273
      %p275 = scmp.eq.s32.totalorder %s55, 0
      %p276 = por %p274, %p275
      %s278 = sadd.s32 %s277, 1
      %p281 = scmp.eq.s32.totalorder %s49, 3
      %p282 = scmp.ne.s32.totalorder %s277, %s279
      %p283 = scmp.eq.s32.totalorder %s49, 0
      %p284 = por %p282, %p283
      %p285 = scmp.ne.s32.totalorder %s277, %s279
      %p286 = scmp.eq.s32.totalorder %s54, 3
      %p287 = por %p285, %p286
      %p288 = scmp.ne.s32.totalorder %s279, %s280
      %p289 = scmp.eq.s32.totalorder %s54, 0
      %p290 = por %p288, %p289
      %p291 = scmp.ne.s32.totalorder %s279, %s280
      %p292 = scmp.eq.s32.totalorder %s55, 3
      %p293 = por %p291, %p292
      %p295 = scmp.ne.s32.totalorder %s280, %s294
      %p296 = scmp.eq.s32.totalorder %s55, 0
      %p297 = por %p295, %p296
      %s299 = sadd.s32 %s298, 1
      %p302 = scmp.eq.s32.totalorder %s49, 3
      %p303 = scmp.ne.s32.totalorder %s298, %s300
      %p304 = scmp.eq.s32.totalorder %s49, 0
      %p305 = por %p303, %p304
      %p306 = scmp.ne.s32.totalorder %s298, %s300
      %p307 = scmp.eq.s32.totalorder %s54, 3
      %p308 = por %p306, %p307
      %p309 = scmp.ne.s32.totalorder %s300, %s301
      %p310 = scmp.eq.s32.totalorder %s54, 0
      %p311 = por %p309, %p310
      %p312 = scmp.ne.s32.totalorder %s300, %s301
      %p313 = scmp.eq.s32.totalorder %s55, 3
      %p314 = por %p312, %p313
      %p316 = scmp.ne.s32.totalorder %s301, %s315
      %p317 = scmp.eq.s32.totalorder %s55, 0
      %p318 = por %p316, %p317
      %s320 = sadd.s32 %s319, 1
      %p323 = scmp.eq.s32.totalorder %s49, 3
      %p324 = scmp.ne.s32.totalorder %s319, %s321
      %p325 = scmp.eq.s32.totalorder %s49, 0
      %p326 = por %p324, %p325
      %p327 = scmp.ne.s32.totalorder %s319, %s321
      %p328 = scmp.eq.s32.totalorder %s54, 3
      %p329 = por %p327, %p328
      %p330 = scmp.ne.s32.totalorder %s321, %s322
      %p331 = scmp.eq.s32.totalorder %s54, 0
      %p332 = por %p330, %p331
      %p333 = scmp.ne.s32.totalorder %s321, %s322
      %p334 = scmp.eq.s32.totalorder %s55, 3
      %p335 = por %p333, %p334
      %p337 = scmp.ne.s32.totalorder %s322, %s336
      %p338 = scmp.eq.s32.totalorder %s55, 0
      %p339 = por %p337, %p338
      %s341 = sadd.s32 %s340, 1
      %p344 = scmp.eq.s32.totalorder %s49, 3
      %p345 = scmp.ne.s32.totalorder %s340, %s342
      %p346 = scmp.eq.s32.totalorder %s49, 0
      %p347 = por %p345, %p346
      %p348 = scmp.ne.s32.totalorder %s340, %s342
      %p349 = scmp.eq.s32.totalorder %s54, 3
      %p350 = por %p348, %p349
      %p351 = scmp.ne.s32.totalorder %s342, %s343
      %p352 = scmp.eq.s32.totalorder %s54, 0
      %p353 = por %p351, %p352
      %p354 = scmp.ne.s32.totalorder %s342, %s343
      %p355 = scmp.eq.s32.totalorder %s55, 3
      %p356 = por %p354, %p355
      %p358 = scmp.ne.s32.totalorder %s343, %s357
      %p359 = scmp.eq.s32.totalorder %s55, 0
      %p360 = por %p358, %p359
      %s362 = sadd.s32 %s361, 1
      %p365 = scmp.eq.s32.totalorder %s49, 3
      %p366 = scmp.ne.s32.totalorder %s361, %s363
      %p367 = scmp.eq.s32.totalorder %s49, 0
      %p368 = por %p366, %p367
      %p369 = scmp.ne.s32.totalorder %s361, %s363
      %p370 = scmp.eq.s32.totalorder %s54, 3
      %p371 = por %p369, %p370
      %p372 = scmp.ne.s32.totalorder %s363, %s364
      %p373 = scmp.eq.s32.totalorder %s54, 0
      %p374 = por %p372, %p373
      %p375 = scmp.ne.s32.totalorder %s363, %s364
      %p376 = scmp.eq.s32.totalorder %s55, 3
      %p377 = por %p375, %p376
      %p379 = scmp.ne.s32.totalorder %s364, %s378
      %p380 = scmp.eq.s32.totalorder %s55, 0
      %p381 = por %p379, %p380
      %s383 = sadd.s32 %s382, 1
      %p386 = scmp.eq.s32.totalorder %s49, 3
      %p387 = scmp.ne.s32.totalorder %s382, %s384
      %p388 = scmp.eq.s32.totalorder %s49, 0
      %p389 = por %p387, %p388
      %p390 = scmp.ne.s32.totalorder %s382, %s384
      %p391 = scmp.eq.s32.totalorder %s54, 3
      %p392 = por %p390, %p391
      %p393 = scmp.ne.s32.totalorder %s384, %s385
      %p394 = scmp.eq.s32.totalorder %s54, 0
      %p395 = por %p393, %p394
      %p396 = scmp.ne.s32.totalorder %s384, %s385
      %p397 = scmp.eq.s32.totalorder %s55, 3
      %p398 = por %p396, %p397
      %p400 = scmp.ne.s32.totalorder %s385, %s399
      %p401 = scmp.eq.s32.totalorder %s55, 0
      %p402 = por %p400, %p401
      %s404 = sadd.s32 %s403, 1
      %p407 = scmp.eq.s32.totalorder %s49, 3
      %p408 = scmp.ne.s32.totalorder %s403, %s405
      %p409 = scmp.eq.s32.totalorder %s49, 0
      %p410 = por %p408, %p409
      %p411 = scmp.ne.s32.totalorder %s403, %s405
      %p412 = scmp.eq.s32.totalorder %s54, 3
      %p413 = por %p411, %p412
      %p414 = scmp.ne.s32.totalorder %s405, %s406
      %p415 = scmp.eq.s32.totalorder %s54, 0
      %p416 = por %p414, %p415
      %p417 = scmp.ne.s32.totalorder %s405, %s406
      %p418 = scmp.eq.s32.totalorder %s55, 3
      %p419 = por %p417, %p418
      %p421 = scmp.ne.s32.totalorder %s406, %s420
      %p422 = scmp.eq.s32.totalorder %s55, 0
      %p423 = por %p421, %p422
      %s425 = sadd.s32 %s424, 1
      %p428 = scmp.eq.s32.totalorder %s49, 3
      %p429 = scmp.ne.s32.totalorder %s424, %s426
      %p430 = scmp.eq.s32.totalorder %s49, 0
      %p431 = por %p429, %p430
      %p432 = scmp.ne.s32.totalorder %s424, %s426
      %p433 = scmp.eq.s32.totalorder %s54, 3
      %p434 = por %p432, %p433
      %p435 = scmp.ne.s32.totalorder %s426, %s427
      %p436 = scmp.eq.s32.totalorder %s54, 0
      %p437 = por %p435, %p436
      %p438 = scmp.ne.s32.totalorder %s426, %s427
      %p439 = scmp.eq.s32.totalorder %s55, 3
      %p440 = por %p438, %p439
      %p442 = scmp.ne.s32.totalorder %s427, %s441
      %p443 = scmp.eq.s32.totalorder %s55, 0
      %p444 = por %p442, %p443
      %s446 = sadd.s32 %s445, 1
      %p449 = scmp.eq.s32.totalorder %s49, 3
      %p450 = scmp.ne.s32.totalorder %s445, %s447
      %p451 = scmp.eq.s32.totalorder %s49, 0
      %p452 = por %p450, %p451
      %p453 = scmp.ne.s32.totalorder %s445, %s447
      %p454 = scmp.eq.s32.totalorder %s54, 3
      %p455 = por %p453, %p454
      %p456 = scmp.ne.s32.totalorder %s447, %s448
      %p457 = scmp.eq.s32.totalorder %s54, 0
      %p458 = por %p456, %p457
      %p459 = scmp.ne.s32.totalorder %s447, %s448
      %p460 = scmp.eq.s32.totalorder %s55, 3
      %p461 = por %p459, %p460
      %p463 = scmp.ne.s32.totalorder %s448, %s462
      %p464 = scmp.eq.s32.totalorder %s55, 0
      %p465 = por %p463, %p464
      %s467 = sadd.s32 %s466, 1
      %p470 = scmp.eq.s32.totalorder %s49, 3
      %p471 = scmp.ne.s32.totalorder %s466, %s468
      %p472 = scmp.eq.s32.totalorder %s49, 0
      %p473 = por %p471, %p472
      %p474 = scmp.ne.s32.totalorder %s466, %s468
      %p475 = scmp.eq.s32.totalorder %s54, 3
      %p476 = por %p474, %p475
      %p477 = scmp.ne.s32.totalorder %s468, %s469
      %p478 = scmp.eq.s32.totalorder %s54, 0
      %p479 = por %p477, %p478
      %p480 = scmp.ne.s32.totalorder %s468, %s469
      %p481 = scmp.eq.s32.totalorder %s55, 3
      %p482 = por %p480, %p481
      %p484 = scmp.ne.s32.totalorder %s469, %s483
      %p485 = scmp.eq.s32.totalorder %s55, 0
      %p486 = por %p484, %p485
      %s488 = sadd.s32 %s487, 1
      %p491 = scmp.eq.s32.totalorder %s49, 3
      %p492 = scmp.ne.s32.totalorder %s487, %s489
      %p493 = scmp.eq.s32.totalorder %s49, 0
      %p494 = por %p492, %p493
      %p495 = scmp.ne.s32.totalorder %s487, %s489
      %p496 = scmp.eq.s32.totalorder %s54, 3
      %p497 = por %p495, %p496
      %p498 = scmp.ne.s32.totalorder %s489, %s490
      %p499 = scmp.eq.s32.totalorder %s54, 0
      %p500 = por %p498, %p499
      %p501 = scmp.ne.s32.totalorder %s489, %s490
      %p502 = scmp.eq.s32.totalorder %s55, 3
      %p503 = por %p501, %p502
      %p505 = scmp.ne.s32.totalorder %s490, %s504
      %p506 = scmp.eq.s32.totalorder %s55, 0
      %p507 = por %p505, %p506
      %s509 = sadd.s32 %s508, 1
      %p512 = scmp.eq.s32.totalorder %s49, 3
      %p513 = scmp.ne.s32.totalorder %s508, %s510
      %p514 = scmp.eq.s32.totalorder %s49, 0
      %p515 = por %p513, %p514
      %p516 = scmp.ne.s32.totalorder %s508, %s510
      %p517 = scmp.eq.s32.totalorder %s54, 3
      %p518 = por %p516, %p517
      %p519 = scmp.ne.s32.totalorder %s510, %s511
      %p520 = scmp.eq.s32.totalorder %s54, 0
      %p521 = por %p519, %p520
      %p522 = scmp.ne.s32.totalorder %s510, %s511
      %p523 = scmp.eq.s32.totalorder %s55, 3
      %p524 = por %p522, %p523
      %p526 = scmp.ne.s32.totalorder %s511, %s525
      %p527 = scmp.eq.s32.totalorder %s55, 0
      %p528 = por %p526, %p527
      %s530 = sadd.s32 %s529, 1
      %p533 = scmp.eq.s32.totalorder %s49, 3
      %p534 = scmp.ne.s32.totalorder %s529, %s531
      %p535 = scmp.eq.s32.totalorder %s49, 0
      %p536 = por %p534, %p535
      %p537 = scmp.ne.s32.totalorder %s529, %s531
      %p538 = scmp.eq.s32.totalorder %s54, 3
      %p539 = por %p537, %p538
      %p540 = scmp.ne.s32.totalorder %s531, %s532
      %p541 = scmp.eq.s32.totalorder %s54, 0
      %p542 = por %p540, %p541
      %p543 = scmp.ne.s32.totalorder %s531, %s532
      %p544 = scmp.eq.s32.totalorder %s55, 3
      %p545 = por %p543, %p544
      %p547 = scmp.ne.s32.totalorder %s532, %s546
      %p548 = scmp.eq.s32.totalorder %s55, 0
      %p549 = por %p547, %p548
      %s551 = sadd.s32 %s550, 1
      %p554 = scmp.eq.s32.totalorder %s49, 3
      %p555 = scmp.ne.s32.totalorder %s550, %s552
      %p556 = scmp.eq.s32.totalorder %s49, 0
      %p557 = por %p555, %p556
      %p558 = scmp.ne.s32.totalorder %s550, %s552
      %p559 = scmp.eq.s32.totalorder %s54, 3
      %p560 = por %p558, %p559
      %p561 = scmp.ne.s32.totalorder %s552, %s553
      %p562 = scmp.eq.s32.totalorder %s54, 0
      %p563 = por %p561, %p562
      %p564 = scmp.ne.s32.totalorder %s552, %s553
      %p565 = scmp.eq.s32.totalorder %s55, 3
      %p566 = por %p564, %p565
      %p568 = scmp.ne.s32.totalorder %s553, %s567
      %p569 = scmp.eq.s32.totalorder %s55, 0
      %p570 = por %p568, %p569
      %s572 = sadd.s32 %s571, 1
      %p575 = scmp.eq.s32.totalorder %s49, 3
      %p576 = scmp.ne.s32.totalorder %s571, %s573
      %p577 = scmp.eq.s32.totalorder %s49, 0
      %p578 = por %p576, %p577
      %p579 = scmp.ne.s32.totalorder %s571, %s573
      %p580 = scmp.eq.s32.totalorder %s54, 3
      %p581 = por %p579, %p580
      %p582 = scmp.ne.s32.totalorder %s573, %s574
      %p583 = scmp.eq.s32.totalorder %s54, 0
      %p584 = por %p582, %p583
      %p585 = scmp.ne.s32.totalorder %s573, %s574
      %p586 = scmp.eq.s32.totalorder %s55, 3
      %p587 = por %p585, %p586
      %p589 = scmp.ne.s32.totalorder %s574, %s588
      %p590 = scmp.eq.s32.totalorder %s55, 0
      %p591 = por %p589, %p590
      %s593 = sadd.s32 %s592, 1
      %p596 = scmp.eq.s32.totalorder %s49, 3
      %p597 = scmp.ne.s32.totalorder %s592, %s594
      %p598 = scmp.eq.s32.totalorder %s49, 0
      %p599 = por %p597, %p598
      %p600 = scmp.ne.s32.totalorder %s592, %s594
      %p601 = scmp.eq.s32.totalorder %s54, 3
      %p602 = por %p600, %p601
      %p603 = scmp.ne.s32.totalorder %s594, %s595
      %p604 = scmp.eq.s32.totalorder %s54, 0
      %p605 = por %p603, %p604
      %p606 = scmp.ne.s32.totalorder %s594, %s595
      %p607 = scmp.eq.s32.totalorder %s55, 3
      %p608 = por %p606, %p607
      %p610 = scmp.ne.s32.totalorder %s595, %s609
      %p611 = scmp.eq.s32.totalorder %s55, 0
      %p612 = por %p610, %p611
      %s614 = sadd.s32 %s613, 1
      %p617 = scmp.eq.s32.totalorder %s49, 3
      %p618 = scmp.ne.s32.totalorder %s613, %s615
      %p619 = scmp.eq.s32.totalorder %s49, 0
      %p620 = por %p618, %p619
      %p621 = scmp.ne.s32.totalorder %s613, %s615
      %p622 = scmp.eq.s32.totalorder %s54, 3
      %p623 = por %p621, %p622
      %p624 = scmp.ne.s32.totalorder %s615, %s616
      %p625 = scmp.eq.s32.totalorder %s54, 0
      %p626 = por %p624, %p625
      %p627 = scmp.ne.s32.totalorder %s615, %s616
      %p628 = scmp.eq.s32.totalorder %s55, 3
      %p629 = por %p627, %p628
      %p631 = scmp.ne.s32.totalorder %s616, %s630
      %p632 = scmp.eq.s32.totalorder %s55, 0
      %p633 = por %p631, %p632
      %s634 = ssub.s32 %s49, %s56
      %p635 = scmp.eq.s32.totalorder %s634, 0
      %s637 = sadd.s32 %s636, 1
      %s638 = scalar_select %p635, %s636, %s637
      %p641 = pneg %p635
      %p642 = scmp.eq.s32.totalorder %s49, 3
      %p643 = por %p641, %p642
      %p644 = scmp.ne.s32.totalorder %s636, %s639
      %p645 = scmp.eq.s32.totalorder %s49, 0
      %p646 = por %p644, %p645
      %p647 = scmp.ne.s32.totalorder %s636, %s639
      %p648 = scmp.eq.s32.totalorder %s54, 3
      %p649 = por %p647, %p648
      %p650 = scmp.ne.s32.totalorder %s639, %s640
      %p651 = scmp.eq.s32.totalorder %s54, 0
      %p652 = por %p650, %p651
      %p653 = scmp.ne.s32.totalorder %s639, %s640
      %p654 = scmp.eq.s32.totalorder %s55, 3
      %p655 = por %p653, %p654
      %p657 = scmp.ne.s32.totalorder %s640, %s656
      %p658 = scmp.eq.s32.totalorder %s55, 0
      %p659 = por %p657, %p658
      %p660 = scmp.le.s32.totalorder 1, %s49
      %p661 = scmp.lt.s32.totalorder %s49, 5
      %p662 = pnand %p660, %p661
      %p663 = pneg %p662
      // Predicated region
      $region9: #{tpu_custom_call.1} parent=5 // pred_check
        _
      $region10: #{tpu_custom_call.1} parent=5 // pred_check_branch
        %665 = sbr.rel (%p662) target = $region12
      $region11: #{tpu_custom_call.1} parent=5 // pred_region
        %s666 = ssub.s32 %s49, 1
        // Predicated region
        $region13: #{tpu_custom_call.1} parent=11 // pred_check
          %p667 = pneg %p122
        $region14: #{tpu_custom_call.1} parent=11 // pred_check_branch
          %669 = sbr.rel (%p667) target = $region16
        $region15: #{tpu_custom_call.1} parent=11 // pred_region
          _
        $region16: #{tpu_custom_call.1} parent=11 // pred_fallthru
          _
        // Predicated region
        $region17: #{tpu_custom_call.1} parent=11 // pred_check
          %p670 = pneg %p143
        $region18: #{tpu_custom_call.1} parent=11 // pred_check_branch
          %672 = sbr.rel (%p670) target = $region20
        $region19: #{tpu_custom_call.1} parent=11 // pred_region
          %s674 = ssub.s32 16, 16
          %675 = vsyncadd [#allocation6], %s674
          %s677 = sshll.u32 [#allocation7], 4
          %s678 = int_to_ptr.vmem [resolvable:$true] %s677
          %680 = dma.hbm_to_vmem [thread:$0]  %s3, 16, %s678, [#allocation6]
        $region20: #{tpu_custom_call.1} parent=11 // pred_fallthru
          _
        // Predicated region
        $region21: #{tpu_custom_call.1} parent=11 // pred_check
          %p681 = pneg %p164
        $region22: #{tpu_custom_call.1} parent=11 // pred_check_branch
          %683 = sbr.rel (%p681) target = $region24
        $region23: #{tpu_custom_call.1} parent=11 // pred_region
          _
        $region24: #{tpu_custom_call.1} parent=11 // pred_fallthru
          _
        // Predicated region
        $region25: #{tpu_custom_call.1} parent=11 // pred_check
          %p684 = pneg %p185
        $region26: #{tpu_custom_call.1} parent=11 // pred_check_branch
          %686 = sbr.rel (%p684) target = $region28
        $region27: #{tpu_custom_call.1} parent=11 // pred_region
          %s688 = ssub.s32 16, 16
          %689 = vsyncadd [#allocation9], %s688
          %s691 = sshll.u32 [#allocation8], 4
          %s692 = int_to_ptr.vmem [resolvable:$true] %s691
          %694 = dma.hbm_to_vmem [thread:$0]  %s5, 16, %s692, [#allocation9]
        $region28: #{tpu_custom_call.1} parent=11 // pred_fallthru
          _
        // Predicated region
        $region29: #{tpu_custom_call.1} parent=11 // pred_check
          %p695 = pneg %p206
        $region30: #{tpu_custom_call.1} parent=11 // pred_check_branch
          %697 = sbr.rel (%p695) target = $region32
        $region31: #{tpu_custom_call.1} parent=11 // pred_region
          _
        $region32: #{tpu_custom_call.1} parent=11 // pred_fallthru
          _
        // Predicated region
        $region33: #{tpu_custom_call.1} parent=11 // pred_check
          %p698 = pneg %p227
        $region34: #{tpu_custom_call.1} parent=11 // pred_check_branch
          %700 = sbr.rel (%p698) target = $region36
        $region35: #{tpu_custom_call.1} parent=11 // pred_region
          %s702 = ssub.s32 16, 16
          %703 = vsyncadd [#allocation9], %s702
          %s705 = sshll.u32 [#allocation10], 4
          %s706 = int_to_ptr.vmem [resolvable:$true] %s705
          %708 = dma.hbm_to_vmem [thread:$0]  %s7, 16, %s706, [#allocation9]
        $region36: #{tpu_custom_call.1} parent=11 // pred_fallthru
          _
        // Predicated region
        $region37: #{tpu_custom_call.1} parent=11 // pred_check
          %p709 = pneg %p248
        $region38: #{tpu_custom_call.1} parent=11 // pred_check_branch
          %711 = sbr.rel (%p709) target = $region40
        $region39: #{tpu_custom_call.1} parent=11 // pred_region
          %s713 = ssub.s32 1024, 1024
          %714 = vsyncadd [#allocation12], %s713
          %s715 = sshll.u32 [#allocation11], 4
          %s716 = int_to_ptr.vmem [resolvable:$true] %s715
          %721 = dma.hbm_to_vmem [thread:$0]  %s8, 1024, %s716, [#allocation12], 64, 64, 4
        $region40: #{tpu_custom_call.1} parent=11 // pred_fallthru
          _
        // Predicated region
        $region41: #{tpu_custom_call.1} parent=11 // pred_check
          %p722 = pneg %p269
        $region42: #{tpu_custom_call.1} parent=11 // pred_check_branch
          %724 = sbr.rel (%p722) target = $region44
        $region43: #{tpu_custom_call.1} parent=11 // pred_region
          %s726 = ssub.s32 16, 16
          %727 = vsyncadd [#allocation12], %s726
          %s729 = sshll.u32 [#allocation13], 4
          %s730 = int_to_ptr.vmem [resolvable:$true] %s729
          %732 = dma.hbm_to_vmem [thread:$0]  %s9, 16, %s730, [#allocation12]
        $region44: #{tpu_custom_call.1} parent=11 // pred_fallthru
          _
        // Predicated region
        $region45: #{tpu_custom_call.1} parent=11 // pred_check
          %p733 = pneg %p290
        $region46: #{tpu_custom_call.1} parent=11 // pred_check_branch
          %735 = sbr.rel (%p733) target = $region48
        $region47: #{tpu_custom_call.1} parent=11 // pred_region
          %s737 = ssub.s32 1024, 1024
          %738 = vsyncadd [#allocation15], %s737
          %s739 = sshll.u32 [#allocation14], 4
          %s740 = int_to_ptr.vmem [resolvable:$true] %s739
          %745 = dma.hbm_to_vmem [thread:$0]  %s10, 1024, %s740, [#allocation15], 64, 64, 4
        $region48: #{tpu_custom_call.1} parent=11 // pred_fallthru
          _
        // Predicated region
        $region49: #{tpu_custom_call.1} parent=11 // pred_check
          %p746 = pneg %p311
        $region50: #{tpu_custom_call.1} parent=11 // pred_check_branch
          %748 = sbr.rel (%p746) target = $region52
        $region51: #{tpu_custom_call.1} parent=11 // pred_region
          %s750 = ssub.s32 16, 16
          %751 = vsyncadd [#allocation15], %s750
          %s753 = sshll.u32 [#allocation16], 4
          %s754 = int_to_ptr.vmem [resolvable:$true] %s753
          %756 = dma.hbm_to_vmem [thread:$0]  %s11, 16, %s754, [#allocation15]
        $region52: #{tpu_custom_call.1} parent=11 // pred_fallthru
          _
        // Predicated region
        $region53: #{tpu_custom_call.1} parent=11 // pred_check
          %p757 = pneg %p332
        $region54: #{tpu_custom_call.1} parent=11 // pred_check_branch
          %759 = sbr.rel (%p757) target = $region56
        $region55: #{tpu_custom_call.1} parent=11 // pred_region
          %s761 = ssub.s32 1024, 1024
          %762 = vsyncadd [#allocation18], %s761
          %s763 = sshll.u32 [#allocation17], 4
          %s764 = int_to_ptr.vmem [resolvable:$true] %s763
          %769 = dma.hbm_to_vmem [thread:$0]  %s12, 1024, %s764, [#allocation18], 64, 64, 4
        $region56: #{tpu_custom_call.1} parent=11 // pred_fallthru
          _
        // Predicated region
        $region57: #{tpu_custom_call.1} parent=11 // pred_check
          %p770 = pneg %p353
        $region58: #{tpu_custom_call.1} parent=11 // pred_check_branch
          %772 = sbr.rel (%p770) target = $region60
        $region59: #{tpu_custom_call.1} parent=11 // pred_region
          %s774 = ssub.s32 1024, 1024
          %775 = vsyncadd [#allocation18], %s774
          %s776 = sshll.u32 [#allocation19], 4
          %s777 = int_to_ptr.vmem [resolvable:$true] %s776
          %782 = dma.hbm_to_vmem [thread:$0]  %s13, 1024, %s777, [#allocation18], 64, 64, 4
        $region60: #{tpu_custom_call.1} parent=11 // pred_fallthru
          _
        // Predicated region
        $region61: #{tpu_custom_call.1} parent=11 // pred_check
          %p783 = pneg %p374
        $region62: #{tpu_custom_call.1} parent=11 // pred_check_branch
          %785 = sbr.rel (%p783) target = $region64
        $region63: #{tpu_custom_call.1} parent=11 // pred_region
          %s787 = ssub.s32 16, 16
          %788 = vsyncadd [#allocation21], %s787
          %s790 = sshll.u32 [#allocation20], 4
          %s791 = int_to_ptr.vmem [resolvable:$true] %s790
          %793 = dma.hbm_to_vmem [thread:$0]  %s14, 16, %s791, [#allocation21]
        $region64: #{tpu_custom_call.1} parent=11 // pred_fallthru
          _
        // Predicated region
        $region65: #{tpu_custom_call.1} parent=11 // pred_check
          %p794 = pneg %p395
        $region66: #{tpu_custom_call.1} parent=11 // pred_check_branch
          %796 = sbr.rel (%p794) target = $region68
        $region67: #{tpu_custom_call.1} parent=11 // pred_region
          %s798 = ssub.s32 1024, 1024
          %799 = vsyncadd [#allocation21], %s798
          %s800 = sshll.u32 [#allocation22], 4
          %s801 = int_to_ptr.vmem [resolvable:$true] %s800
          %806 = dma.hbm_to_vmem [thread:$0]  %s15, 1024, %s801, [#allocation21], 64, 64, 4
        $region68: #{tpu_custom_call.1} parent=11 // pred_fallthru
          _
        // Predicated region
        $region69: #{tpu_custom_call.1} parent=11 // pred_check
          %p807 = pneg %p416
        $region70: #{tpu_custom_call.1} parent=11 // pred_check_branch
          %809 = sbr.rel (%p807) target = $region72
        $region71: #{tpu_custom_call.1} parent=11 // pred_region
          %s811 = ssub.s32 16, 16
          %812 = vsyncadd [#allocation24], %s811
          %s814 = sshll.u32 [#allocation23], 4
          %s815 = int_to_ptr.vmem [resolvable:$true] %s814
          %817 = dma.hbm_to_vmem [thread:$0]  %s16, 16, %s815, [#allocation24]
        $region72: #{tpu_custom_call.1} parent=11 // pred_fallthru
          _
        // Predicated region
        $region73: #{tpu_custom_call.1} parent=11 // pred_check
          %p818 = pneg %p437
        $region74: #{tpu_custom_call.1} parent=11 // pred_check_branch
          %820 = sbr.rel (%p818) target = $region76
        $region75: #{tpu_custom_call.1} parent=11 // pred_region
          _
        $region76: #{tpu_custom_call.1} parent=11 // pred_fallthru
          _
        // Predicated region
        $region77: #{tpu_custom_call.1} parent=11 // pred_check
          %p821 = pneg %p458
        $region78: #{tpu_custom_call.1} parent=11 // pred_check_branch
          %823 = sbr.rel (%p821) target = $region80
        $region79: #{tpu_custom_call.1} parent=11 // pred_region
          _
        $region80: #{tpu_custom_call.1} parent=11 // pred_fallthru
          _
        // Predicated region
        $region81: #{tpu_custom_call.1} parent=11 // pred_check
          %p824 = pneg %p479
        $region82: #{tpu_custom_call.1} parent=11 // pred_check_branch
          %826 = sbr.rel (%p824) target = $region84
        $region83: #{tpu_custom_call.1} parent=11 // pred_region
          %s828 = ssub.s32 1024, 1024
          %829 = vsyncadd [#allocation24], %s828
          %s830 = sshll.u32 [#allocation25], 4
          %s831 = int_to_ptr.vmem [resolvable:$true] %s830
          %836 = dma.hbm_to_vmem [thread:$0]  %s19, 1024, %s831, [#allocation24], 64, 64, 4
        $region84: #{tpu_custom_call.1} parent=11 // pred_fallthru
          _
        // Predicated region
        $region85: #{tpu_custom_call.1} parent=11 // pred_check
          %p837 = pneg %p500
        $region86: #{tpu_custom_call.1} parent=11 // pred_check_branch
          %839 = sbr.rel (%p837) target = $region88
        $region87: #{tpu_custom_call.1} parent=11 // pred_region
          _
        $region88: #{tpu_custom_call.1} parent=11 // pred_fallthru
          _
        // Predicated region
        $region89: #{tpu_custom_call.1} parent=11 // pred_check
          %p840 = pneg %p521
        $region90: #{tpu_custom_call.1} parent=11 // pred_check_branch
          %842 = sbr.rel (%p840) target = $region92
        $region91: #{tpu_custom_call.1} parent=11 // pred_region
          _
        $region92: #{tpu_custom_call.1} parent=11 // pred_fallthru
          _
        // Predicated region
        $region93: #{tpu_custom_call.1} parent=11 // pred_check
          %p843 = pneg %p542
        $region94: #{tpu_custom_call.1} parent=11 // pred_check_branch
          %845 = sbr.rel (%p843) target = $region96
        $region95: #{tpu_custom_call.1} parent=11 // pred_region
          _
        $region96: #{tpu_custom_call.1} parent=11 // pred_fallthru
          _
        // Predicated region
        $region97: #{tpu_custom_call.1} parent=11 // pred_check
          %p846 = pneg %p563
        $region98: #{tpu_custom_call.1} parent=11 // pred_check_branch
          %848 = sbr.rel (%p846) target = $region100
        $region99: #{tpu_custom_call.1} parent=11 // pred_region
          _
        $region100: #{tpu_custom_call.1} parent=11 // pred_fallthru
          _
        // Predicated region
        $region101: #{tpu_custom_call.1} parent=11 // pred_check
          %p849 = pneg %p584
        $region102: #{tpu_custom_call.1} parent=11 // pred_check_branch
          %851 = sbr.rel (%p849) target = $region104
        $region103: #{tpu_custom_call.1} parent=11 // pred_region
          %s853 = ssub.s32 512, 512
          %854 = vsyncadd [#allocation27], %s853
          %s855 = sshll.u32 [#allocation26], 4
          %s856 = int_to_ptr.vmem [resolvable:$true] %s855
          %861 = dma.hbm_to_vmem [thread:$0]  %s24, 512, %s856, [#allocation27], 64, 64, 4
        $region104: #{tpu_custom_call.1} parent=11 // pred_fallthru
          _
        // Predicated region
        $region105: #{tpu_custom_call.1} parent=11 // pred_check
          %p862 = pneg %p605
        $region106: #{tpu_custom_call.1} parent=11 // pred_check_branch
          %864 = sbr.rel (%p862) target = $region108
        $region107: #{tpu_custom_call.1} parent=11 // pred_region
          %s866 = ssub.s32 1024, 1024
          %867 = vsyncadd [#allocation27], %s866
          %s868 = sshll.u32 [#allocation28], 4
          %s869 = int_to_ptr.vmem [resolvable:$true] %s868
          %874 = dma.hbm_to_vmem [thread:$0]  %s25, 1024, %s869, [#allocation27], 64, 64, 4
        $region108: #{tpu_custom_call.1} parent=11 // pred_fallthru
          _
        // Predicated region
        $region109: #{tpu_custom_call.1} parent=11 // pred_check
          %p875 = pneg %p626
        $region110: #{tpu_custom_call.1} parent=11 // pred_check_branch
          %877 = sbr.rel (%p875) target = $region112
        $region111: #{tpu_custom_call.1} parent=11 // pred_region
          _
        $region112: #{tpu_custom_call.1} parent=11 // pred_fallthru
          _
      $region12: #{tpu_custom_call.1} parent=5 // pred_fallthru
        _
      %p878 = scmp.lt.s32.totalorder %s49, 4
      // Predicated region
      $region113: #{tpu_custom_call.1} parent=5 // pred_check
        %p879 = pneg %p878
      $region114: #{tpu_custom_call.1} parent=5 // pred_check_branch
        %881 = sbr.rel (%p879) target = $region116
      $region115: #{tpu_custom_call.1} parent=5 // pred_region
        // Predicated region
        $region117: #{tpu_custom_call.1} parent=115 // pred_check
          %p882 = pneg %p69
        $region118: #{tpu_custom_call.1} parent=115 // pred_check_branch
          %884 = sbr.rel (%p882) target = $region120
        $region119: #{tpu_custom_call.1} parent=115 // pred_region
          %s885 = sand.u32 %s59, 1
          %s886 = scalar_lea.sflag [#allocation3], %s885
          %s887 = sand.u32 %s59, 1
          %s888 = smul.addr %s887, 128
          %s889 = scalar_lea.vmem [#allocation2], %s888
          %s890 = smul.u32 32, %s49
          %s892 = ssub.s32 2048, 2048
          %893 = vsyncadd %s886, %s892
          %s894 = smul.addr %s890, 64
          %s895 = scalar_lea.hbm %s0, %s894
          %s896 = sshll.u32 %s889, 4
          %s897 = int_to_ptr.vmem [resolvable:$true] %s896
          %902 = dma.hbm_to_vmem [thread:$0]  %s895, 2048, %s897, %s886, 64, 64, 4
        $region120: #{tpu_custom_call.1} parent=115 // pred_fallthru
          _
        // Predicated region
        $region121: #{tpu_custom_call.1} parent=115 // pred_check
          %p903 = pneg %p95
        $region122: #{tpu_custom_call.1} parent=115 // pred_check_branch
          %905 = sbr.rel (%p903) target = $region124
        $region123: #{tpu_custom_call.1} parent=115 // pred_region
          %s906 = sand.u32 %s49, 1
          %s907 = scalar_lea.sflag [#allocation6], %s906
          %s908 = sand.u32 %s85, 1
          %s909 = smul.addr %s908, 128
          %s910 = scalar_lea.vmem [#allocation5], %s909
          %s911 = smul.u32 32, %s49
          %s913 = ssub.s32 2048, 2048
          %914 = vsyncadd %s907, %s913
          %s915 = smul.addr %s911, 64
          %s916 = scalar_lea.hbm %s1, %s915
          %s917 = sshll.u32 %s910, 4
          %s918 = int_to_ptr.vmem [resolvable:$true] %s917
          %923 = dma.hbm_to_vmem [thread:$0]  %s916, 2048, %s918, %s907, 64, 64, 4
        $region124: #{tpu_custom_call.1} parent=115 // pred_fallthru
          _
      $region116: #{tpu_custom_call.1} parent=5 // pred_fallthru
        _
      %p924 = scmp.le.s32.totalorder 1, %s49
      %p925 = scmp.lt.s32.totalorder %s49, 5
      %p926 = pnand %p924, %p925
      %p927 = pneg %p926
      // Predicated region
      $region125: #{tpu_custom_call.1} parent=5 // pred_check
        _
      $region126: #{tpu_custom_call.1} parent=5 // pred_check_branch
        %929 = sbr.rel (%p926) target = $region128
      $region127: #{tpu_custom_call.1} parent=5 // pred_region
        %s930 = ssub.s32 %s49, 1
        %s931 = sand.u32 %s62, 1
        %s932 = scalar_lea.sflag [#allocation3], %s931
        %s933 = sand.u32 %s62, 1
        %s934 = smul.addr %s933, 128
        %s935 = scalar_lea.vmem [#allocation2], %s934
        // Predicated region
        $region129: #{tpu_custom_call.1} parent=127 // pred_check
          %p936 = pneg %p75
        $region130: #{tpu_custom_call.1} parent=127 // pred_check_branch
          %938 = sbr.rel (%p936) target = $region132
        $region131: #{tpu_custom_call.1} parent=127 // pred_region
          %939 = dma.done %s932, 2048
        $region132: #{tpu_custom_call.1} parent=127 // pred_fallthru
          _
        %s940 = sand.u32 %s54, 1
        %s941 = scalar_lea.sflag [#allocation6], %s940
        %s942 = sand.u32 %s88, 1
        %s943 = smul.addr %s942, 128
        %s944 = scalar_lea.vmem [#allocation5], %s943
        // Predicated region
        $region133: #{tpu_custom_call.1} parent=127 // pred_check
          %p945 = pneg %p101
        $region134: #{tpu_custom_call.1} parent=127 // pred_check_branch
          %947 = sbr.rel (%p945) target = $region136
        $region135: #{tpu_custom_call.1} parent=127 // pred_region
          %948 = dma.done %s941, 2048
        $region136: #{tpu_custom_call.1} parent=127 // pred_fallthru
          _
        // Predicated region
        $region137: #{tpu_custom_call.1} parent=127 // pred_check
          %p949 = pneg %p143
        $region138: #{tpu_custom_call.1} parent=127 // pred_check_branch
          %951 = sbr.rel (%p949) target = $region140
        $region139: #{tpu_custom_call.1} parent=127 // pred_region
          %952 = dma.done [#allocation6], 16
        $region140: #{tpu_custom_call.1} parent=127 // pred_fallthru
          _
        // Predicated region
        $region141: #{tpu_custom_call.1} parent=127 // pred_check
          %p953 = pneg %p185
        $region142: #{tpu_custom_call.1} parent=127 // pred_check_branch
          %955 = sbr.rel (%p953) target = $region144
        $region143: #{tpu_custom_call.1} parent=127 // pred_region
          %956 = dma.done [#allocation9], 16
        $region144: #{tpu_custom_call.1} parent=127 // pred_fallthru
          _
        // Predicated region
        $region145: #{tpu_custom_call.1} parent=127 // pred_check
          %p957 = pneg %p227
        $region146: #{tpu_custom_call.1} parent=127 // pred_check_branch
          %959 = sbr.rel (%p957) target = $region148
        $region147: #{tpu_custom_call.1} parent=127 // pred_region
          %960 = dma.done [#allocation9], 16
        $region148: #{tpu_custom_call.1} parent=127 // pred_fallthru
          _
        // Predicated region
        $region149: #{tpu_custom_call.1} parent=127 // pred_check
          %p961 = pneg %p248
        $region150: #{tpu_custom_call.1} parent=127 // pred_check_branch
          %963 = sbr.rel (%p961) target = $region152
        $region151: #{tpu_custom_call.1} parent=127 // pred_region
          %964 = dma.done [#allocation12], 1024
        $region152: #{tpu_custom_call.1} parent=127 // pred_fallthru
          _
        // Predicated region
        $region153: #{tpu_custom_call.1} parent=127 // pred_check
          %p965 = pneg %p269
        $region154: #{tpu_custom_call.1} parent=127 // pred_check_branch
          %967 = sbr.rel (%p965) target = $region156
        $region155: #{tpu_custom_call.1} parent=127 // pred_region
          %968 = dma.done [#allocation12], 16
        $region156: #{tpu_custom_call.1} parent=127 // pred_fallthru
          _
        // Predicated region
        $region157: #{tpu_custom_call.1} parent=127 // pred_check
          %p969 = pneg %p290
        $region158: #{tpu_custom_call.1} parent=127 // pred_check_branch
          %971 = sbr.rel (%p969) target = $region160
        $region159: #{tpu_custom_call.1} parent=127 // pred_region
          %972 = dma.done [#allocation15], 1024
        $region160: #{tpu_custom_call.1} parent=127 // pred_fallthru
          _
        // Predicated region
        $region161: #{tpu_custom_call.1} parent=127 // pred_check
          %p973 = pneg %p311
        $region162: #{tpu_custom_call.1} parent=127 // pred_check_branch
          %975 = sbr.rel (%p973) target = $region164
        $region163: #{tpu_custom_call.1} parent=127 // pred_region
          %976 = dma.done [#allocation15], 16
        $region164: #{tpu_custom_call.1} parent=127 // pred_fallthru
          _
        // Predicated region
        $region165: #{tpu_custom_call.1} parent=127 // pred_check
          %p977 = pneg %p332
        $region166: #{tpu_custom_call.1} parent=127 // pred_check_branch
          %979 = sbr.rel (%p977) target = $region168
        $region167: #{tpu_custom_call.1} parent=127 // pred_region
          %980 = dma.done [#allocation18], 1024
        $region168: #{tpu_custom_call.1} parent=127 // pred_fallthru
          _
        // Predicated region
        $region169: #{tpu_custom_call.1} parent=127 // pred_check
          %p981 = pneg %p353
        $region170: #{tpu_custom_call.1} parent=127 // pred_check_branch
          %983 = sbr.rel (%p981) target = $region172
        $region171: #{tpu_custom_call.1} parent=127 // pred_region
          %984 = dma.done [#allocation18], 1024
        $region172: #{tpu_custom_call.1} parent=127 // pred_fallthru
          _
        // Predicated region
        $region173: #{tpu_custom_call.1} parent=127 // pred_check
          %p985 = pneg %p374
        $region174: #{tpu_custom_call.1} parent=127 // pred_check_branch
          %987 = sbr.rel (%p985) target = $region176
        $region175: #{tpu_custom_call.1} parent=127 // pred_region
          %988 = dma.done [#allocation21], 16
        $region176: #{tpu_custom_call.1} parent=127 // pred_fallthru
          _
        // Predicated region
        $region177: #{tpu_custom_call.1} parent=127 // pred_check
          %p989 = pneg %p395
        $region178: #{tpu_custom_call.1} parent=127 // pred_check_branch
          %991 = sbr.rel (%p989) target = $region180
        $region179: #{tpu_custom_call.1} parent=127 // pred_region
          %992 = dma.done [#allocation21], 1024
        $region180: #{tpu_custom_call.1} parent=127 // pred_fallthru
          _
        // Predicated region
        $region181: #{tpu_custom_call.1} parent=127 // pred_check
          %p993 = pneg %p416
        $region182: #{tpu_custom_call.1} parent=127 // pred_check_branch
          %995 = sbr.rel (%p993) target = $region184
        $region183: #{tpu_custom_call.1} parent=127 // pred_region
          %996 = dma.done [#allocation24], 16
        $region184: #{tpu_custom_call.1} parent=127 // pred_fallthru
          _
        // Predicated region
        $region185: #{tpu_custom_call.1} parent=127 // pred_check
          %p997 = pneg %p479
        $region186: #{tpu_custom_call.1} parent=127 // pred_check_branch
          %999 = sbr.rel (%p997) target = $region188
        $region187: #{tpu_custom_call.1} parent=127 // pred_region
          %1000 = dma.done [#allocation24], 1024
        $region188: #{tpu_custom_call.1} parent=127 // pred_fallthru
          _
        // Predicated region
        $region189: #{tpu_custom_call.1} parent=127 // pred_check
          %p1001 = pneg %p584
        $region190: #{tpu_custom_call.1} parent=127 // pred_check_branch
          %1003 = sbr.rel (%p1001) target = $region192
        $region191: #{tpu_custom_call.1} parent=127 // pred_region
          %1004 = dma.done [#allocation27], 512
        $region192: #{tpu_custom_call.1} parent=127 // pred_fallthru
          _
        // Predicated region
        $region193: #{tpu_custom_call.1} parent=127 // pred_check
          %p1005 = pneg %p605
        $region194: #{tpu_custom_call.1} parent=127 // pred_check_branch
          %1007 = sbr.rel (%p1005) target = $region196
        $region195: #{tpu_custom_call.1} parent=127 // pred_region
          %1008 = dma.done [#allocation27], 1024
        $region196: #{tpu_custom_call.1} parent=127 // pred_fallthru
          _
        %s1009 = sand.u32 %s62, 1
        %s1010 = scalar_lea.sflag [#allocation3], %s1009
        %s1011 = sand.u32 %s62, 1
        %s1012 = smul.addr %s1011, 128
        %s1013 = scalar_lea.vmem [#allocation2], %s1012
        %p1014 = pneg %p75
        %p1015 = pneg %p72
        %s1016 = sand.u32 %s54, 1
        %s1017 = scalar_lea.sflag [#allocation6], %s1016
        %s1018 = sand.u32 %s88, 1
        %s1019 = smul.addr %s1018, 128
        %s1020 = scalar_lea.vmem [#allocation5], %s1019
        %p1021 = pneg %p101
        %p1022 = pneg %p98
        %p1023 = pneg %p122
        %p1024 = pneg %p119
        %p1025 = pneg %p143
        %p1026 = pneg %p140
        %p1027 = pneg %p164
        %p1028 = pneg %p161
        %p1029 = pneg %p185
        %p1030 = pneg %p182
        %p1031 = pneg %p206
        %p1032 = pneg %p203
        %p1033 = pneg %p227
        %p1034 = pneg %p224
        %p1035 = pneg %p248
        %p1036 = pneg %p245
        %p1037 = pneg %p269
        %p1038 = pneg %p266
        %p1039 = pneg %p290
        %p1040 = pneg %p287
        %p1041 = pneg %p311
        %p1042 = pneg %p308
        %p1043 = pneg %p332
        %p1044 = pneg %p329
        %p1045 = pneg %p353
        %p1046 = pneg %p350
        %p1047 = pneg %p374
        %p1048 = pneg %p371
        %p1049 = pneg %p395
        %p1050 = pneg %p392
        %p1051 = pneg %p416
        %p1052 = pneg %p413
        %p1053 = pneg %p437
        %p1054 = pneg %p434
        %p1055 = pneg %p458
        %p1056 = pneg %p455
        %p1057 = pneg %p479
        %p1058 = pneg %p476
        %p1059 = pneg %p500
        %p1060 = pneg %p497
        %p1061 = pneg %p521
        %p1062 = pneg %p518
        %p1063 = pneg %p542
        %p1064 = pneg %p539
        %p1065 = pneg %p563
        %p1066 = pneg %p560
        %p1067 = pneg %p584
        %p1068 = pneg %p581
        %p1069 = pneg %p605
        %p1070 = pneg %p602
        %p1071 = pneg %p626
        %p1072 = pneg %p623
        %p1073 = pneg %p652
        %p1074 = pneg %p649
        %s1075 = sand.u32 %s639, 1
        %s1076 = scalar_lea.sflag [#allocation4], %s1075
        %s1077 = sand.u32 %s639, 1
        %s1078 = smul.addr %s1077, 256
        %s1079 = scalar_lea.vmem [#allocation29], %s1078
        %s1080 = smul.u32 32, %s54
        %s1081 = smul.u32 32, %s54
        %s1082 = smul.u32 32, %s54
        %v1084 = vld [vmem:[%s935] sm:$0xf]
        %v1085 = vld [vmem:[%s935 + $0x4] sm:$0xf]
        %v1086 = vld [vmem:[%s935 + $0x8] sm:$0xf]
        %v1087 = vld [vmem:[%s935 + $0xc] sm:$0xf]
        %v1088 = vld [vmem:[%s935 + $0x10] sm:$0xf]
        %v1089 = vld [vmem:[%s935 + $0x14] sm:$0xf]
        %v1090 = vld [vmem:[%s935 + $0x18] sm:$0xf]
        %v1091 = vld [vmem:[%s935 + $0x1c] sm:$0xf]
        %v1092 = vld [vmem:[%s935 + $0x20] sm:$0xf]
        %v1093 = vld [vmem:[%s935 + $0x24] sm:$0xf]
        %v1094 = vld [vmem:[%s935 + $0x28] sm:$0xf]
        %v1095 = vld [vmem:[%s935 + $0x2c] sm:$0xf]
        %v1096 = vld [vmem:[%s935 + $0x30] sm:$0xf]
        %v1097 = vld [vmem:[%s935 + $0x34] sm:$0xf]
        %v1098 = vld [vmem:[%s935 + $0x38] sm:$0xf]
        %v1099 = vld [vmem:[%s935 + $0x3c] sm:$0xf]
        %v1100 = vld [vmem:[%s935 + $0x40] sm:$0xf]
        %v1101 = vld [vmem:[%s935 + $0x44] sm:$0xf]
        %v1102 = vld [vmem:[%s935 + $0x48] sm:$0xf]
        %v1103 = vld [vmem:[%s935 + $0x4c] sm:$0xf]
        %v1104 = vld [vmem:[%s935 + $0x50] sm:$0xf]
        %v1105 = vld [vmem:[%s935 + $0x54] sm:$0xf]
        %v1106 = vld [vmem:[%s935 + $0x58] sm:$0xf]
        %v1107 = vld [vmem:[%s935 + $0x5c] sm:$0xf]
        %v1108 = vld [vmem:[%s935 + $0x60] sm:$0xf]
        %v1109 = vld [vmem:[%s935 + $0x64] sm:$0xf]
        %v1110 = vld [vmem:[%s935 + $0x68] sm:$0xf]
        %v1111 = vld [vmem:[%s935 + $0x6c] sm:$0xf]
        %v1112 = vld [vmem:[%s935 + $0x70] sm:$0xf]
        %v1113 = vld [vmem:[%s935 + $0x74] sm:$0xf]
        %v1114 = vld [vmem:[%s935 + $0x78] sm:$0xf]
        %v1115 = vld [vmem:[%s935 + $0x7c] sm:$0xf]
        %v1116 = vld [vmem:[%s944] sm:$0xf]
        %v1117 = vld [vmem:[%s944 + $0x4] sm:$0xf]
        %v1118 = vld [vmem:[%s944 + $0x8] sm:$0xf]
        %v1119 = vld [vmem:[%s944 + $0xc] sm:$0xf]
        %v1120 = vld [vmem:[%s944 + $0x10] sm:$0xf]
        %v1121 = vld [vmem:[%s944 + $0x14] sm:$0xf]
        %v1122 = vld [vmem:[%s944 + $0x18] sm:$0xf]
        %v1123 = vld [vmem:[%s944 + $0x1c] sm:$0xf]
        %v1124 = vld [vmem:[%s944 + $0x20] sm:$0xf]
        %v1125 = vld [vmem:[%s944 + $0x24] sm:$0xf]
        %v1126 = vld [vmem:[%s944 + $0x28] sm:$0xf]
        %v1127 = vld [vmem:[%s944 + $0x2c] sm:$0xf]
        %v1128 = vld [vmem:[%s944 + $0x30] sm:$0xf]
        %v1129 = vld [vmem:[%s944 + $0x34] sm:$0xf]
        %v1130 = vld [vmem:[%s944 + $0x38] sm:$0xf]
        %v1131 = vld [vmem:[%s944 + $0x3c] sm:$0xf]
        %v1132 = vld [vmem:[%s944 + $0x40] sm:$0xf]
        %v1133 = vld [vmem:[%s944 + $0x44] sm:$0xf]
        %v1134 = vld [vmem:[%s944 + $0x48] sm:$0xf]
        %v1135 = vld [vmem:[%s944 + $0x4c] sm:$0xf]
        %v1136 = vld [vmem:[%s944 + $0x50] sm:$0xf]
        %v1137 = vld [vmem:[%s944 + $0x54] sm:$0xf]
        %v1138 = vld [vmem:[%s944 + $0x58] sm:$0xf]
        %v1139 = vld [vmem:[%s944 + $0x5c] sm:$0xf]
        %v1140 = vld [vmem:[%s944 + $0x60] sm:$0xf]
        %v1141 = vld [vmem:[%s944 + $0x64] sm:$0xf]
        %v1142 = vld [vmem:[%s944 + $0x68] sm:$0xf]
        %v1143 = vld [vmem:[%s944 + $0x6c] sm:$0xf]
        %v1144 = vld [vmem:[%s944 + $0x70] sm:$0xf]
        %v1145 = vld [vmem:[%s944 + $0x74] sm:$0xf]
        %v1146 = vld [vmem:[%s944 + $0x78] sm:$0xf]
        %v1147 = vld [vmem:[%s944 + $0x7c] sm:$0xf]
        %v1148 = vld [vmem:[%s2] sm:$0xf]
        %v1149 = vld [vmem:[%s2 + $0x4] sm:$0xf]
        %v1150 = vld [vmem:[%s2 + $0x8] sm:$0xf]
        %v1151 = vld [vmem:[%s2 + $0xc] sm:$0xf]
        %v1152 = vld [vmem:[%s2 + $0x10] sm:$0xf]
        %v1153 = vld [vmem:[%s2 + $0x14] sm:$0xf]
        %v1154 = vld [vmem:[%s2 + $0x18] sm:$0xf]
        %v1155 = vld [vmem:[%s2 + $0x1c] sm:$0xf]
        %v1156 = vld [vmem:[%s2 + $0x20] sm:$0xf]
        %v1157 = vld [vmem:[%s2 + $0x24] sm:$0xf]
        %v1158 = vld [vmem:[%s2 + $0x28] sm:$0xf]
        %v1159 = vld [vmem:[%s2 + $0x2c] sm:$0xf]
        %v1160 = vld [vmem:[%s2 + $0x30] sm:$0xf]
        %v1161 = vld [vmem:[%s2 + $0x34] sm:$0xf]
        %v1162 = vld [vmem:[%s2 + $0x38] sm:$0xf]
        %v1163 = vld [vmem:[%s2 + $0x3c] sm:$0xf]
        %v1164 = vld [vmem:[#allocation7] sm:$0x1]
        %v1166 = vlaneseq
        %v1167 = vshrl.u32 %v1166, 7
        %v1168 = vsub.s32 0, %v1167
        %v1169 = vrot.slane %v1164, %v1168
        %v1203 = vunpack.c.l.b16 %v1084
        %v1204 = vunpack.c.l.b16 %v1085
        %v1205 = vunpack.c.l.b16 %v1086
        %v1206 = vunpack.c.l.b16 %v1087
        %v1207 = vunpack.c.l.b16 %v1088
        %v1208 = vunpack.c.l.b16 %v1089
        %v1209 = vunpack.c.l.b16 %v1090
        %v1210 = vunpack.c.l.b16 %v1091
        %v1211 = vunpack.c.l.b16 %v1092
        %v1212 = vunpack.c.l.b16 %v1093
        %v1213 = vunpack.c.l.b16 %v1094
        %v1214 = vunpack.c.l.b16 %v1095
        %v1215 = vunpack.c.l.b16 %v1096
        %v1216 = vunpack.c.l.b16 %v1097
        %v1217 = vunpack.c.l.b16 %v1098
        %v1218 = vunpack.c.l.b16 %v1099
        %v1219 = vunpack.c.l.b16 %v1100
        %v1220 = vunpack.c.l.b16 %v1101
        %v1221 = vunpack.c.l.b16 %v1102
        %v1222 = vunpack.c.l.b16 %v1103
        %v1223 = vunpack.c.l.b16 %v1104
        %v1224 = vunpack.c.l.b16 %v1105
        %v1225 = vunpack.c.l.b16 %v1106
        %v1226 = vunpack.c.l.b16 %v1107
        %v1227 = vunpack.c.l.b16 %v1108
        %v1228 = vunpack.c.l.b16 %v1109
        %v1229 = vunpack.c.l.b16 %v1110
        %v1230 = vunpack.c.l.b16 %v1111
        %v1231 = vunpack.c.l.b16 %v1112
        %v1232 = vunpack.c.l.b16 %v1113
        %v1233 = vunpack.c.l.b16 %v1114
        %v1234 = vunpack.c.l.b16 %v1115
        %v1235 = vpack.c.b16 %v1204, %v1203
        %v1236 = vpack.c.b16 %v1206, %v1205
        %v1237 = vpack.c.b16 %v1208, %v1207
        %v1238 = vpack.c.b16 %v1210, %v1209
        %v1239 = vpack.c.b16 %v1212, %v1211
        %v1240 = vpack.c.b16 %v1214, %v1213
        %v1241 = vpack.c.b16 %v1216, %v1215
        %v1242 = vpack.c.b16 %v1218, %v1217
        %v1243 = vpack.c.b16 %v1220, %v1219
        %v1244 = vpack.c.b16 %v1222, %v1221
        %v1245 = vpack.c.b16 %v1224, %v1223
        %v1246 = vpack.c.b16 %v1226, %v1225
        %v1247 = vpack.c.b16 %v1228, %v1227
        %v1248 = vpack.c.b16 %v1230, %v1229
        %v1249 = vpack.c.b16 %v1232, %v1231
        %v1250 = vpack.c.b16 %v1234, %v1233
        %v1283 = vunpack.c.l.b16 %v1148
        %v1284 = vunpack.c.l.b16 %v1149
        %v1285 = vunpack.c.l.b16 %v1150
        %v1286 = vunpack.c.l.b16 %v1151
        %v1287 = vunpack.c.l.b16 %v1152
        %v1288 = vunpack.c.l.b16 %v1153
        %v1289 = vunpack.c.l.b16 %v1154
        %v1290 = vunpack.c.l.b16 %v1155
        %v1291 = vunpack.c.l.b16 %v1156
        %v1292 = vunpack.c.l.b16 %v1157
        %v1293 = vunpack.c.l.b16 %v1158
        %v1294 = vunpack.c.l.b16 %v1159
        %v1295 = vunpack.c.l.b16 %v1160
        %v1296 = vunpack.c.l.b16 %v1161
        %v1297 = vunpack.c.l.b16 %v1162
        %v1298 = vunpack.c.l.b16 %v1163
        %v1299 = vpack.c.b16 %v1284, %v1283
        %v1300 = vpack.c.b16 %v1286, %v1285
        %v1301 = vpack.c.b16 %v1288, %v1287
        %v1302 = vpack.c.b16 %v1290, %v1289
        %v1303 = vpack.c.b16 %v1292, %v1291
        %v1304 = vpack.c.b16 %v1294, %v1293
        %v1305 = vpack.c.b16 %v1296, %v1295
        %v1306 = vpack.c.b16 %v1298, %v1297
        %1315 = vmatprep.subr.bf16.mxu0 0
        %1316 = vmatpush1.bf16.msra.mxu0 %v1299
        %1317 = vmatprep.subr.bf16.mxu0 0
        %1318 = vmatpush1.bf16.msra.mxu0 %v1300
        %1319 = vmatprep.subr.bf16.mxu0 0
        %1320 = vmatpush1.bf16.msra.mxu0 %v1301
        %1321 = vmatprep.subr.bf16.mxu0 0
        %1322 = vmatpush1.bf16.msra.mxu0 %v1302
        %1323 = vmatprep.subr.bf16.mxu0 0
        %1324 = vmatpush1.bf16.msra.mxu0 %v1303
        %1325 = vmatprep.subr.bf16.mxu0 0
        %1326 = vmatpush1.bf16.msra.mxu0 %v1304
        %1327 = vmatprep.subr.bf16.mxu0 0
        %1328 = vmatpush1.bf16.msra.mxu0 %v1305
        %1329 = vmatprep.subr.bf16.mxu0 0
        %1330 = vmatpush1.bf16.msra.mxu0 %v1306
        %1331 = vmatprep.subr.bf16.mxu0 0
        %1332 = vmatpush1.bf16.msra.mxu0 0
        %1333 = vmatprep.subr.bf16.mxu0 0
        %1334 = vmatpush1.bf16.msra.mxu0 0
        %1335 = vmatprep.subr.bf16.mxu0 0
        %1336 = vmatpush1.bf16.msra.mxu0 0
        %1337 = vmatprep.subr.bf16.mxu0 0
        %1338 = vmatpush1.bf16.msra.mxu0 0
        %1339 = vmatprep.subr.bf16.mxu0 0
        %1340 = vmatpush1.bf16.msra.mxu0 0
        %1341 = vmatprep.subr.bf16.mxu0 0
        %1342 = vmatpush1.bf16.msra.mxu0 0
        %1343 = vmatprep.subr.bf16.mxu0 0
        %1344 = vmatpush1.bf16.msra.mxu0 0
        %1345 = vmatprep.subr.bf16.mxu0 0
        %1346 = vmatpush1.bf16.msra.mxu0 0
        %1347 = vmatprep.mubr.bf16.mxu0 0
        %1348 = vmatmul.mubr.bf16.gmra.mrb[0].mxu0 %v1235
        %v1349 = vpop.f32.mrb[0].mxu0
        %v1350 = vadd.f32 %v1169, %v1349
        %v1351 = vpop.f32.mrb[0].mxu0
        %v1352 = vpop.f32.mrb[0].mxu0
        %v1353 = vadd.f32 %v1169, %v1352
        %v1354 = vpop.f32.mrb[0].mxu0
        %1355 = vmatprep.mubr.bf16.mxu0 0
        %1356 = vmatmul.mubr.bf16.gmra.mrb[0].mxu0 %v1236
        %v1357 = vpop.f32.mrb[0].mxu0
        %v1358 = vadd.f32 %v1169, %v1357
        %v1359 = vpop.f32.mrb[0].mxu0
        %v1360 = vpop.f32.mrb[0].mxu0
        %v1361 = vadd.f32 %v1169, %v1360
        %v1362 = vpop.f32.mrb[0].mxu0
        %1363 = vmatprep.mubr.bf16.mxu0 0
        %1364 = vmatmul.mubr.bf16.gmra.mrb[0].mxu0 %v1237
        %v1365 = vpop.f32.mrb[0].mxu0
        %v1366 = vadd.f32 %v1169, %v1365
        %v1367 = vpop.f32.mrb[0].mxu0
        %v1368 = vpop.f32.mrb[0].mxu0
        %v1369 = vadd.f32 %v1169, %v1368
        %v1370 = vpop.f32.mrb[0].mxu0
        %1371 = vmatprep.mubr.bf16.mxu0 0
        %1372 = vmatmul.mubr.bf16.gmra.mrb[0].mxu0 %v1238
        %v1373 = vpop.f32.mrb[0].mxu0
        %v1374 = vadd.f32 %v1169, %v1373
        %v1375 = vpop.f32.mrb[0].mxu0
        %v1376 = vpop.f32.mrb[0].mxu0
        %v1377 = vadd.f32 %v1169, %v1376
        %v1378 = vpop.f32.mrb[0].mxu0
        %1379 = vmatprep.mubr.bf16.mxu0 0
        %1380 = vmatmul.mubr.bf16.gmra.mrb[0].mxu0 %v1239
        %v1381 = vpop.f32.mrb[0].mxu0
        %v1382 = vadd.f32 %v1169, %v1381
        %v1383 = vpop.f32.mrb[0].mxu0
        %v1384 = vpop.f32.mrb[0].mxu0
        %v1385 = vadd.f32 %v1169, %v1384
        %v1386 = vpop.f32.mrb[0].mxu0
        %1387 = vmatprep.mubr.bf16.mxu0 0
        %1388 = vmatmul.mubr.bf16.gmra.mrb[0].mxu0 %v1240
        %v1389 = vpop.f32.mrb[0].mxu0
        %v1390 = vadd.f32 %v1169, %v1389
        %v1391 = vpop.f32.mrb[0].mxu0
        %v1392 = vpop.f32.mrb[0].mxu0
        %v1393 = vadd.f32 %v1169, %v1392
        %v1394 = vpop.f32.mrb[0].mxu0
        %1395 = vmatprep.mubr.bf16.mxu0 0
        %1396 = vmatmul.mubr.bf16.gmra.mrb[0].mxu0 %v1241
        %v1397 = vpop.f32.mrb[0].mxu0
        %v1398 = vadd.f32 %v1169, %v1397
        %v1399 = vpop.f32.mrb[0].mxu0
        %v1400 = vpop.f32.mrb[0].mxu0
        %v1401 = vadd.f32 %v1169, %v1400
        %v1402 = vpop.f32.mrb[0].mxu0
        %1403 = vmatprep.mubr.bf16.mxu0 0
        %1404 = vmatmul.mubr.bf16.gmra.mrb[0].mxu0 %v1242
        %v1405 = vpop.f32.mrb[0].mxu0
        %v1406 = vadd.f32 %v1169, %v1405
        %v1407 = vpop.f32.mrb[0].mxu0
        %v1408 = vpop.f32.mrb[0].mxu0
        %v1409 = vadd.f32 %v1169, %v1408
        %v1410 = vpop.f32.mrb[0].mxu0
        %1411 = vmatprep.mubr.bf16.mxu0 0
        %1412 = vmatmul.mubr.bf16.gmra.mrb[0].mxu0 %v1243
        %v1413 = vpop.f32.mrb[0].mxu0
        %v1414 = vadd.f32 %v1169, %v1413
        %v1415 = vpop.f32.mrb[0].mxu0
        %v1416 = vpop.f32.mrb[0].mxu0
        %v1417 = vadd.f32 %v1169, %v1416
        %v1418 = vpop.f32.mrb[0].mxu0
        %1419 = vmatprep.mubr.bf16.mxu0 0
        %1420 = vmatmul.mubr.bf16.gmra.mrb[0].mxu0 %v1244
        %v1421 = vpop.f32.mrb[0].mxu0
        %v1422 = vadd.f32 %v1169, %v1421
        %v1423 = vpop.f32.mrb[0].mxu0
        %v1424 = vpop.f32.mrb[0].mxu0
        %v1425 = vadd.f32 %v1169, %v1424
        %v1426 = vpop.f32.mrb[0].mxu0
        %1427 = vmatprep.mubr.bf16.mxu0 0
        %1428 = vmatmul.mubr.bf16.gmra.mrb[0].mxu0 %v1245
        %v1429 = vpop.f32.mrb[0].mxu0
        %v1430 = vadd.f32 %v1169, %v1429
        %v1431 = vpop.f32.mrb[0].mxu0
        %v1432 = vpop.f32.mrb[0].mxu0
        %v1433 = vadd.f32 %v1169, %v1432
        %v1434 = vpop.f32.mrb[0].mxu0
        %1435 = vmatprep.mubr.bf16.mxu0 0
        %1436 = vmatmul.mubr.bf16.gmra.mrb[0].mxu0 %v1246
        %v1437 = vpop.f32.mrb[0].mxu0
        %v1438 = vadd.f32 %v1169, %v1437
        %v1439 = vpop.f32.mrb[0].mxu0
        %v1440 = vpop.f32.mrb[0].mxu0
        %v1441 = vadd.f32 %v1169, %v1440
        %v1442 = vpop.f32.mrb[0].mxu0
        %1443 = vmatprep.mubr.bf16.mxu0 0
        %1444 = vmatmul.mubr.bf16.gmra.mrb[0].mxu0 %v1247
        %v1445 = vpop.f32.mrb[0].mxu0
        %v1446 = vadd.f32 %v1169, %v1445
        %v1447 = vpop.f32.mrb[0].mxu0
        %v1448 = vpop.f32.mrb[0].mxu0
        %v1449 = vadd.f32 %v1169, %v1448
        %v1450 = vpop.f32.mrb[0].mxu0
        %1451 = vmatprep.mubr.bf16.mxu0 0
        %1452 = vmatmul.mubr.bf16.gmra.mrb[0].mxu0 %v1248
        %v1453 = vpop.f32.mrb[0].mxu0
        %v1454 = vadd.f32 %v1169, %v1453
        %v1455 = vpop.f32.mrb[0].mxu0
        %v1456 = vpop.f32.mrb[0].mxu0
        %v1457 = vadd.f32 %v1169, %v1456
        %v1458 = vpop.f32.mrb[0].mxu0
        %1459 = vmatprep.mubr.bf16.mxu0 0
        %1460 = vmatmul.mubr.bf16.gmra.mrb[0].mxu0 %v1249
        %v1461 = vpop.f32.mrb[0].mxu0
        %v1462 = vadd.f32 %v1169, %v1461
        %v1463 = vpop.f32.mrb[0].mxu0
        %v1464 = vpop.f32.mrb[0].mxu0
        %v1465 = vadd.f32 %v1169, %v1464
        %v1466 = vpop.f32.mrb[0].mxu0
        %1467 = vmatprep.mubr.bf16.mxu0 0
        %1468 = vmatmul.mubr.bf16.gmra.mrb[0].mxu0 %v1250
        %v1469 = vpop.f32.mrb[0].mxu0
        %v1470 = vadd.f32 %v1169, %v1469
        %v1471 = vpop.f32.mrb[0].mxu0
        %v1472 = vpop.f32.mrb[0].mxu0
        %v1473 = vadd.f32 %v1169, %v1472
        %v1474 = vpop.f32.mrb[0].mxu0
        %1475 = vdwg.mxu0
        %v1476 = vmax.f32 %v1350, 0.0
        %v1477 = vmax.f32 %v1353, 0.0
        %v1478 = vmax.f32 %v1358, 0.0
        %v1479 = vmax.f32 %v1361, 0.0
        %v1480 = vmax.f32 %v1366, 0.0
        %v1481 = vmax.f32 %v1369, 0.0
        %v1482 = vmax.f32 %v1374, 0.0
        %v1483 = vmax.f32 %v1377, 0.0
        %v1484 = vmax.f32 %v1382, 0.0
        %v1485 = vmax.f32 %v1385, 0.0
        %v1486 = vmax.f32 %v1390, 0.0
        %v1487 = vmax.f32 %v1393, 0.0
        %v1488 = vmax.f32 %v1398, 0.0
        %v1489 = vmax.f32 %v1401, 0.0
        %v1490 = vmax.f32 %v1406, 0.0
        %v1491 = vmax.f32 %v1409, 0.0
        %v1492 = vmax.f32 %v1414, 0.0
        %v1493 = vmax.f32 %v1417, 0.0
        %v1494 = vmax.f32 %v1422, 0.0
        %v1495 = vmax.f32 %v1425, 0.0
        %v1496 = vmax.f32 %v1430, 0.0
        %v1497 = vmax.f32 %v1433, 0.0
        %v1498 = vmax.f32 %v1438, 0.0
        %v1499 = vmax.f32 %v1441, 0.0
        %v1500 = vmax.f32 %v1446, 0.0
        %v1501 = vmax.f32 %v1449, 0.0
        %v1502 = vmax.f32 %v1454, 0.0
        %v1503 = vmax.f32 %v1457, 0.0
        %v1504 = vmax.f32 %v1462, 0.0
        %v1505 = vmax.f32 %v1465, 0.0
        %v1506 = vmax.f32 %v1470, 0.0
        %v1507 = vmax.f32 %v1473, 0.0
        %v1508 = vpack.c.bf16 %v1477, %v1476
        %v1509 = vpack.c.bf16 %v1479, %v1478
        %v1510 = vpack.c.bf16 %v1481, %v1480
        %v1511 = vpack.c.bf16 %v1483, %v1482
        %v1512 = vpack.c.bf16 %v1485, %v1484
        %v1513 = vpack.c.bf16 %v1487, %v1486
        %v1514 = vpack.c.bf16 %v1489, %v1488
        %v1515 = vpack.c.bf16 %v1491, %v1490
        %v1516 = vpack.c.bf16 %v1493, %v1492
        %v1517 = vpack.c.bf16 %v1495, %v1494
        %v1518 = vpack.c.bf16 %v1497, %v1496
        %v1519 = vpack.c.bf16 %v1499, %v1498
        %v1520 = vpack.c.bf16 %v1501, %v1500
        %v1521 = vpack.c.bf16 %v1503, %v1502
        %v1522 = vpack.c.bf16 %v1505, %v1504
        %v1523 = vpack.c.bf16 %v1507, %v1506
        %v1524 = vld [vmem:[%s4] sm:$0xf]
        %v1525 = vld [vmem:[%s4 + $0x4] sm:$0xf]
        %v1526 = vld [vmem:[%s4 + $0x8] sm:$0xf]
        %v1527 = vld [vmem:[%s4 + $0xc] sm:$0xf]
        %v1528 = vld [vmem:[%s4 + $0x10] sm:$0xf]
        %v1529 = vld [vmem:[%s4 + $0x14] sm:$0xf]
        %v1530 = vld [vmem:[%s4 + $0x18] sm:$0xf]
        %v1531 = vld [vmem:[%s4 + $0x1c] sm:$0xf]
        %v1532 = vld [vmem:[%s4 + $0x20] sm:$0xf]
        %v1533 = vld [vmem:[%s4 + $0x24] sm:$0xf]
        %v1534 = vld [vmem:[%s4 + $0x28] sm:$0xf]
        %v1535 = vld [vmem:[%s4 + $0x2c] sm:$0xf]
        %v1536 = vld [vmem:[%s4 + $0x30] sm:$0xf]
        %v1537 = vld [vmem:[%s4 + $0x34] sm:$0xf]
        %v1538 = vld [vmem:[%s4 + $0x38] sm:$0xf]
        %v1539 = vld [vmem:[%s4 + $0x3c] sm:$0xf]
        %v1540 = vld [vmem:[#allocation8] sm:$0x1]
        %v1542 = vlaneseq
        %v1543 = vshrl.u32 %v1542, 7
        %v1544 = vsub.s32 0, %v1543
        %v1545 = vrot.slane %v1540, %v1544
        %v1563 = vunpack.c.l.b16 %v1524
        %v1564 = vunpack.c.l.b16 %v1525
        %v1565 = vunpack.c.l.b16 %v1526
        %v1566 = vunpack.c.l.b16 %v1527
        %v1567 = vunpack.c.l.b16 %v1528
        %v1568 = vunpack.c.l.b16 %v1529
        %v1569 = vunpack.c.l.b16 %v1530
        %v1570 = vunpack.c.l.b16 %v1531
        %v1571 = vunpack.c.l.b16 %v1532
        %v1572 = vunpack.c.l.b16 %v1533
        %v1573 = vunpack.c.l.b16 %v1534
        %v1574 = vunpack.c.l.b16 %v1535
        %v1575 = vunpack.c.l.b16 %v1536
        %v1576 = vunpack.c.l.b16 %v1537
        %v1577 = vunpack.c.l.b16 %v1538
        %v1578 = vunpack.c.l.b16 %v1539
        %v1579 = vpack.c.b16 %v1564, %v1563
        %v1580 = vpack.c.b16 %v1566, %v1565
        %v1581 = vpack.c.b16 %v1568, %v1567
        %v1582 = vpack.c.b16 %v1570, %v1569
        %v1583 = vpack.c.b16 %v1572, %v1571
        %v1584 = vpack.c.b16 %v1574, %v1573
        %v1585 = vpack.c.b16 %v1576, %v1575
        %v1586 = vpack.c.b16 %v1578, %v1577
        %1595 = vmatprep.subr.bf16.mxu0 0
        %1596 = vmatpush1.bf16.msra.mxu0 %v1579
        %1597 = vmatprep.subr.bf16.mxu0 0
        %1598 = vmatpush1.bf16.msra.mxu0 %v1580
        %1599 = vmatprep.subr.bf16.mxu0 0
        %1600 = vmatpush1.bf16.msra.mxu0 %v1581
        %1601 = vmatprep.subr.bf16.mxu0 0
        %1602 = vmatpush1.bf16.msra.mxu0 %v1582
        %1603 = vmatprep.subr.bf16.mxu0 0
        %1604 = vmatpush1.bf16.msra.mxu0 %v1583
        %1605 = vmatprep.subr.bf16.mxu0 0
        %1606 = vmatpush1.bf16.msra.mxu0 %v1584
        %1607 = vmatprep.subr.bf16.mxu0 0
        %1608 = vmatpush1.bf16.msra.mxu0 %v1585
        %1609 = vmatprep.subr.bf16.mxu0 0
        %1610 = vmatpush1.bf16.msra.mxu0 %v1586
        %1611 = vmatprep.subr.bf16.mxu0 0
        %1612 = vmatpush1.bf16.msra.mxu0 0
        %1613 = vmatprep.subr.bf16.mxu0 0
        %1614 = vmatpush1.bf16.msra.mxu0 0
        %1615 = vmatprep.subr.bf16.mxu0 0
        %1616 = vmatpush1.bf16.msra.mxu0 0
        %1617 = vmatprep.subr.bf16.mxu0 0
        %1618 = vmatpush1.bf16.msra.mxu0 0
        %1619 = vmatprep.subr.bf16.mxu0 0
        %1620 = vmatpush1.bf16.msra.mxu0 0
        %1621 = vmatprep.subr.bf16.mxu0 0
        %1622 = vmatpush1.bf16.msra.mxu0 0
        %1623 = vmatprep.subr.bf16.mxu0 0
        %1624 = vmatpush1.bf16.msra.mxu0 0
        %1625 = vmatprep.subr.bf16.mxu0 0
        %1626 = vmatpush1.bf16.msra.mxu0 0
        %1627 = vmatprep.mubr.bf16.mxu0 0
        %1628 = vmatmul.mubr.bf16.gmra.mrb[0].mxu0 %v1508
        %v1629 = vpop.f32.mrb[0].mxu0
        %v1630 = vadd.f32 %v1545, %v1629
        %v1631 = vpop.f32.mrb[0].mxu0
        %v1632 = vpop.f32.mrb[0].mxu0
        %v1633 = vadd.f32 %v1545, %v1632
        %v1634 = vpop.f32.mrb[0].mxu0
        %1635 = vmatprep.mubr.bf16.mxu0 0
        %1636 = vmatmul.mubr.bf16.gmra.mrb[0].mxu0 %v1509
        %v1637 = vpop.f32.mrb[0].mxu0
        %v1638 = vadd.f32 %v1545, %v1637
        %v1639 = vpop.f32.mrb[0].mxu0
        %v1640 = vpop.f32.mrb[0].mxu0
        %v1641 = vadd.f32 %v1545, %v1640
        %v1642 = vpop.f32.mrb[0].mxu0
        %1643 = vmatprep.mubr.bf16.mxu0 0
        %1644 = vmatmul.mubr.bf16.gmra.mrb[0].mxu0 %v1510
        %v1645 = vpop.f32.mrb[0].mxu0
        %v1646 = vadd.f32 %v1545, %v1645
        %v1647 = vpop.f32.mrb[0].mxu0
        %v1648 = vpop.f32.mrb[0].mxu0
        %v1649 = vadd.f32 %v1545, %v1648
        %v1650 = vpop.f32.mrb[0].mxu0
        %1651 = vmatprep.mubr.bf16.mxu0 0
        %1652 = vmatmul.mubr.bf16.gmra.mrb[0].mxu0 %v1511
        %v1653 = vpop.f32.mrb[0].mxu0
        %v1654 = vadd.f32 %v1545, %v1653
        %v1655 = vpop.f32.mrb[0].mxu0
        %v1656 = vpop.f32.mrb[0].mxu0
        %v1657 = vadd.f32 %v1545, %v1656
        %v1658 = vpop.f32.mrb[0].mxu0
        %1659 = vmatprep.mubr.bf16.mxu0 0
        %1660 = vmatmul.mubr.bf16.gmra.mrb[0].mxu0 %v1512
        %v1661 = vpop.f32.mrb[0].mxu0
        %v1662 = vadd.f32 %v1545, %v1661
        %v1663 = vpop.f32.mrb[0].mxu0
        %v1664 = vpop.f32.mrb[0].mxu0
        %v1665 = vadd.f32 %v1545, %v1664
        %v1666 = vpop.f32.mrb[0].mxu0
        %1667 = vmatprep.mubr.bf16.mxu0 0
        %1668 = vmatmul.mubr.bf16.gmra.mrb[0].mxu0 %v1513
        %v1669 = vpop.f32.mrb[0].mxu0
        %v1670 = vadd.f32 %v1545, %v1669
        %v1671 = vpop.f32.mrb[0].mxu0
        %v1672 = vpop.f32.mrb[0].mxu0
        %v1673 = vadd.f32 %v1545, %v1672
        %v1674 = vpop.f32.mrb[0].mxu0
        %1675 = vmatprep.mubr.bf16.mxu0 0
        %1676 = vmatmul.mubr.bf16.gmra.mrb[0].mxu0 %v1514
        %v1677 = vpop.f32.mrb[0].mxu0
        %v1678 = vadd.f32 %v1545, %v1677
        %v1679 = vpop.f32.mrb[0].mxu0
        %v1680 = vpop.f32.mrb[0].mxu0
        %v1681 = vadd.f32 %v1545, %v1680
        %v1682 = vpop.f32.mrb[0].mxu0
        %1683 = vmatprep.mubr.bf16.mxu0 0
        %1684 = vmatmul.mubr.bf16.gmra.mrb[0].mxu0 %v1515
        %v1685 = vpop.f32.mrb[0].mxu0
        %v1686 = vadd.f32 %v1545, %v1685
        %v1687 = vpop.f32.mrb[0].mxu0
        %v1688 = vpop.f32.mrb[0].mxu0
        %v1689 = vadd.f32 %v1545, %v1688
        %v1690 = vpop.f32.mrb[0].mxu0
        %1691 = vmatprep.mubr.bf16.mxu0 0
        %1692 = vmatmul.mubr.bf16.gmra.mrb[0].mxu0 %v1516
        %v1693 = vpop.f32.mrb[0].mxu0
        %v1694 = vadd.f32 %v1545, %v1693
        %v1695 = vpop.f32.mrb[0].mxu0
        %v1696 = vpop.f32.mrb[0].mxu0
        %v1697 = vadd.f32 %v1545, %v1696
        %v1698 = vpop.f32.mrb[0].mxu0
        %1699 = vmatprep.mubr.bf16.mxu0 0
        %1700 = vmatmul.mubr.bf16.gmra.mrb[0].mxu0 %v1517
        %v1701 = vpop.f32.mrb[0].mxu0
        %v1702 = vadd.f32 %v1545, %v1701
        %v1703 = vpop.f32.mrb[0].mxu0
        %v1704 = vpop.f32.mrb[0].mxu0
        %v1705 = vadd.f32 %v1545, %v1704
        %v1706 = vpop.f32.mrb[0].mxu0
        %1707 = vmatprep.mubr.bf16.mxu0 0
        %1708 = vmatmul.mubr.bf16.gmra.mrb[0].mxu0 %v1518
        %v1709 = vpop.f32.mrb[0].mxu0
        %v1710 = vadd.f32 %v1545, %v1709
        %v1711 = vpop.f32.mrb[0].mxu0
        %v1712 = vpop.f32.mrb[0].mxu0
        %v1713 = vadd.f32 %v1545, %v1712
        %v1714 = vpop.f32.mrb[0].mxu0
        %1715 = vmatprep.mubr.bf16.mxu0 0
        %1716 = vmatmul.mubr.bf16.gmra.mrb[0].mxu0 %v1519
        %v1717 = vpop.f32.mrb[0].mxu0
        %v1718 = vadd.f32 %v1545, %v1717
        %v1719 = vpop.f32.mrb[0].mxu0
        %v1720 = vpop.f32.mrb[0].mxu0
        %v1721 = vadd.f32 %v1545, %v1720
        %v1722 = vpop.f32.mrb[0].mxu0
        %1723 = vmatprep.mubr.bf16.mxu0 0
        %1724 = vmatmul.mubr.bf16.gmra.mrb[0].mxu0 %v1520
        %v1725 = vpop.f32.mrb[0].mxu0
        %v1726 = vadd.f32 %v1545, %v1725
        %v1727 = vpop.f32.mrb[0].mxu0
        %v1728 = vpop.f32.mrb[0].mxu0
        %v1729 = vadd.f32 %v1545, %v1728
        %v1730 = vpop.f32.mrb[0].mxu0
        %1731 = vmatprep.mubr.bf16.mxu0 0
        %1732 = vmatmul.mubr.bf16.gmra.mrb[0].mxu0 %v1521
        %v1733 = vpop.f32.mrb[0].mxu0
        %v1734 = vadd.f32 %v1545, %v1733
        %v1735 = vpop.f32.mrb[0].mxu0
        %v1736 = vpop.f32.mrb[0].mxu0
        %v1737 = vadd.f32 %v1545, %v1736
        %v1738 = vpop.f32.mrb[0].mxu0
        %1739 = vmatprep.mubr.bf16.mxu0 0
        %1740 = vmatmul.mubr.bf16.gmra.mrb[0].mxu0 %v1522
        %v1741 = vpop.f32.mrb[0].mxu0
        %v1742 = vadd.f32 %v1545, %v1741
        %v1743 = vpop.f32.mrb[0].mxu0
        %v1744 = vpop.f32.mrb[0].mxu0
        %v1745 = vadd.f32 %v1545, %v1744
        %v1746 = vpop.f32.mrb[0].mxu0
        %1747 = vmatprep.mubr.bf16.mxu0 0
        %1748 = vmatmul.mubr.bf16.gmra.mrb[0].mxu0 %v1523
        %v1749 = vpop.f32.mrb[0].mxu0
        %v1750 = vadd.f32 %v1545, %v1749
        %v1751 = vpop.f32.mrb[0].mxu0
        %v1752 = vpop.f32.mrb[0].mxu0
        %v1753 = vadd.f32 %v1545, %v1752
        %v1754 = vpop.f32.mrb[0].mxu0
        %1755 = vdwg.mxu0
        %v1756 = vmax.f32 %v1630, 0.0
        %v1757 = vmax.f32 %v1633, 0.0
        %v1758 = vmax.f32 %v1638, 0.0
        %v1759 = vmax.f32 %v1641, 0.0
        %v1760 = vmax.f32 %v1646, 0.0
        %v1761 = vmax.f32 %v1649, 0.0
        %v1762 = vmax.f32 %v1654, 0.0
        %v1763 = vmax.f32 %v1657, 0.0
        %v1764 = vmax.f32 %v1662, 0.0
        %v1765 = vmax.f32 %v1665, 0.0
        %v1766 = vmax.f32 %v1670, 0.0
        %v1767 = vmax.f32 %v1673, 0.0
        %v1768 = vmax.f32 %v1678, 0.0
        %v1769 = vmax.f32 %v1681, 0.0
        %v1770 = vmax.f32 %v1686, 0.0
        %v1771 = vmax.f32 %v1689, 0.0
        %v1772 = vmax.f32 %v1694, 0.0
        %v1773 = vmax.f32 %v1697, 0.0
        %v1774 = vmax.f32 %v1702, 0.0
        %v1775 = vmax.f32 %v1705, 0.0
        %v1776 = vmax.f32 %v1710, 0.0
        %v1777 = vmax.f32 %v1713, 0.0
        %v1778 = vmax.f32 %v1718, 0.0
        %v1779 = vmax.f32 %v1721, 0.0
        %v1780 = vmax.f32 %v1726, 0.0
        %v1781 = vmax.f32 %v1729, 0.0
        %v1782 = vmax.f32 %v1734, 0.0
        %v1783 = vmax.f32 %v1737, 0.0
        %v1784 = vmax.f32 %v1742, 0.0
        %v1785 = vmax.f32 %v1745, 0.0
        %v1786 = vmax.f32 %v1750, 0.0
        %v1787 = vmax.f32 %v1753, 0.0
        %v1788 = vpack.c.bf16 %v1757, %v1756
        %v1789 = vpack.c.bf16 %v1759, %v1758
        %v1790 = vpack.c.bf16 %v1761, %v1760
        %v1791 = vpack.c.bf16 %v1763, %v1762
        %v1792 = vpack.c.bf16 %v1765, %v1764
        %v1793 = vpack.c.bf16 %v1767, %v1766
        %v1794 = vpack.c.bf16 %v1769, %v1768
        %v1795 = vpack.c.bf16 %v1771, %v1770
        %v1796 = vpack.c.bf16 %v1773, %v1772
        %v1797 = vpack.c.bf16 %v1775, %v1774
        %v1798 = vpack.c.bf16 %v1777, %v1776
        %v1799 = vpack.c.bf16 %v1779, %v1778
        %v1800 = vpack.c.bf16 %v1781, %v1780
        %v1801 = vpack.c.bf16 %v1783, %v1782
        %v1802 = vpack.c.bf16 %v1785, %v1784
        %v1803 = vpack.c.bf16 %v1787, %v1786
        %v1804 = vld [vmem:[%s6] sm:$0xf]
        %v1805 = vld [vmem:[%s6 + $0x4] sm:$0xf]
        %v1806 = vld [vmem:[%s6 + $0x8] sm:$0xf]
        %v1807 = vld [vmem:[%s6 + $0xc] sm:$0xf]
        %v1808 = vld [vmem:[%s6 + $0x10] sm:$0xf]
        %v1809 = vld [vmem:[%s6 + $0x14] sm:$0xf]
        %v1810 = vld [vmem:[%s6 + $0x18] sm:$0xf]
        %v1811 = vld [vmem:[%s6 + $0x1c] sm:$0xf]
        %v1812 = vld [vmem:[%s6 + $0x20] sm:$0xf]
        %v1813 = vld [vmem:[%s6 + $0x24] sm:$0xf]
        %v1814 = vld [vmem:[%s6 + $0x28] sm:$0xf]
        %v1815 = vld [vmem:[%s6 + $0x2c] sm:$0xf]
        %v1816 = vld [vmem:[%s6 + $0x30] sm:$0xf]
        %v1817 = vld [vmem:[%s6 + $0x34] sm:$0xf]
        %v1818 = vld [vmem:[%s6 + $0x38] sm:$0xf]
        %v1819 = vld [vmem:[%s6 + $0x3c] sm:$0xf]
        %v1820 = vld [vmem:[#allocation10] sm:$0x1]
        %v1822 = vlaneseq
        %v1823 = vshrl.u32 %v1822, 7
        %v1824 = vsub.s32 0, %v1823
        %v1825 = vrot.slane %v1820, %v1824
        %v1843 = vunpack.c.l.b16 %v1804
        %v1844 = vunpack.c.l.b16 %v1805
        %v1845 = vunpack.c.l.b16 %v1806
        %v1846 = vunpack.c.l.b16 %v1807
        %v1847 = vunpack.c.l.b16 %v1808
        %v1848 = vunpack.c.l.b16 %v1809
        %v1849 = vunpack.c.l.b16 %v1810
        %v1850 = vunpack.c.l.b16 %v1811
        %v1851 = vunpack.c.l.b16 %v1812
        %v1852 = vunpack.c.l.b16 %v1813
        %v1853 = vunpack.c.l.b16 %v1814
        %v1854 = vunpack.c.l.b16 %v1815
        %v1855 = vunpack.c.l.b16 %v1816
        %v1856 = vunpack.c.l.b16 %v1817
        %v1857 = vunpack.c.l.b16 %v1818
        %v1858 = vunpack.c.l.b16 %v1819
        %v1859 = vpack.c.b16 %v1844, %v1843
        %v1860 = vpack.c.b16 %v1846, %v1845
        %v1861 = vpack.c.b16 %v1848, %v1847
        %v1862 = vpack.c.b16 %v1850, %v1849
        %v1863 = vpack.c.b16 %v1852, %v1851
        %v1864 = vpack.c.b16 %v1854, %v1853
        %v1865 = vpack.c.b16 %v1856, %v1855
        %v1866 = vpack.c.b16 %v1858, %v1857
        %1875 = vmatprep.subr.bf16.mxu0 0
        %1876 = vmatpush1.bf16.msra.mxu0 %v1859
        %1877 = vmatprep.subr.bf16.mxu0 0
        %1878 = vmatpush1.bf16.msra.mxu0 %v1860
        %1879 = vmatprep.subr.bf16.mxu0 0
        %1880 = vmatpush1.bf16.msra.mxu0 %v1861
        %1881 = vmatprep.subr.bf16.mxu0 0
        %1882 = vmatpush1.bf16.msra.mxu0 %v1862
        %1883 = vmatprep.subr.bf16.mxu0 0
        %1884 = vmatpush1.bf16.msra.mxu0 %v1863
        %1885 = vmatprep.subr.bf16.mxu0 0
        %1886 = vmatpush1.bf16.msra.mxu0 %v1864
        %1887 = vmatprep.subr.bf16.mxu0 0
        %1888 = vmatpush1.bf16.msra.mxu0 %v1865
        %1889 = vmatprep.subr.bf16.mxu0 0
        %1890 = vmatpush1.bf16.msra.mxu0 %v1866
        %1891 = vmatprep.subr.bf16.mxu0 0
        %1892 = vmatpush1.bf16.msra.mxu0 0
        %1893 = vmatprep.subr.bf16.mxu0 0
        %1894 = vmatpush1.bf16.msra.mxu0 0
        %1895 = vmatprep.subr.bf16.mxu0 0
        %1896 = vmatpush1.bf16.msra.mxu0 0
        %1897 = vmatprep.subr.bf16.mxu0 0
        %1898 = vmatpush1.bf16.msra.mxu0 0
        %1899 = vmatprep.subr.bf16.mxu0 0
        %1900 = vmatpush1.bf16.msra.mxu0 0
        %1901 = vmatprep.subr.bf16.mxu0 0
        %1902 = vmatpush1.bf16.msra.mxu0 0
        %1903 = vmatprep.subr.bf16.mxu0 0
        %1904 = vmatpush1.bf16.msra.mxu0 0
        %1905 = vmatprep.subr.bf16.mxu0 0
        %1906 = vmatpush1.bf16.msra.mxu0 0
        %1907 = vmatprep.mubr.bf16.mxu0 0
        %1908 = vmatmul.mubr.bf16.gmra.mrb[0].mxu0 %v1788
        %v1909 = vpop.f32.mrb[0].mxu0
        %v1910 = vadd.f32 %v1825, %v1909
        %v1911 = vpop.f32.mrb[0].mxu0
        %v1912 = vpop.f32.mrb[0].mxu0
        %v1913 = vadd.f32 %v1825, %v1912
        %v1914 = vpop.f32.mrb[0].mxu0
        %1915 = vmatprep.mubr.bf16.mxu0 0
        %1916 = vmatmul.mubr.bf16.gmra.mrb[0].mxu0 %v1789
        %v1917 = vpop.f32.mrb[0].mxu0
        %v1918 = vadd.f32 %v1825, %v1917
        %v1919 = vpop.f32.mrb[0].mxu0
        %v1920 = vpop.f32.mrb[0].mxu0
        %v1921 = vadd.f32 %v1825, %v1920
        %v1922 = vpop.f32.mrb[0].mxu0
        %1923 = vmatprep.mubr.bf16.mxu0 0
        %1924 = vmatmul.mubr.bf16.gmra.mrb[0].mxu0 %v1790
        %v1925 = vpop.f32.mrb[0].mxu0
        %v1926 = vadd.f32 %v1825, %v1925
        %v1927 = vpop.f32.mrb[0].mxu0
        %v1928 = vpop.f32.mrb[0].mxu0
        %v1929 = vadd.f32 %v1825, %v1928
        %v1930 = vpop.f32.mrb[0].mxu0
        %1931 = vmatprep.mubr.bf16.mxu0 0
        %1932 = vmatmul.mubr.bf16.gmra.mrb[0].mxu0 %v1791
        %v1933 = vpop.f32.mrb[0].mxu0
        %v1934 = vadd.f32 %v1825, %v1933
        %v1935 = vpop.f32.mrb[0].mxu0
        %v1936 = vpop.f32.mrb[0].mxu0
        %v1937 = vadd.f32 %v1825, %v1936
        %v1938 = vpop.f32.mrb[0].mxu0
        %1939 = vmatprep.mubr.bf16.mxu0 0
        %1940 = vmatmul.mubr.bf16.gmra.mrb[0].mxu0 %v1792
        %v1941 = vpop.f32.mrb[0].mxu0
        %v1942 = vadd.f32 %v1825, %v1941
        %v1943 = vpop.f32.mrb[0].mxu0
        %v1944 = vpop.f32.mrb[0].mxu0
        %v1945 = vadd.f32 %v1825, %v1944
        %v1946 = vpop.f32.mrb[0].mxu0
        %1947 = vmatprep.mubr.bf16.mxu0 0
        %1948 = vmatmul.mubr.bf16.gmra.mrb[0].mxu0 %v1793
        %v1949 = vpop.f32.mrb[0].mxu0
        %v1950 = vadd.f32 %v1825, %v1949
        %v1951 = vpop.f32.mrb[0].mxu0
        %v1952 = vpop.f32.mrb[0].mxu0
        %v1953 = vadd.f32 %v1825, %v1952
        %v1954 = vpop.f32.mrb[0].mxu0
        %1955 = vmatprep.mubr.bf16.mxu0 0
        %1956 = vmatmul.mubr.bf16.gmra.mrb[0].mxu0 %v1794
        %v1957 = vpop.f32.mrb[0].mxu0
        %v1958 = vadd.f32 %v1825, %v1957
        %v1959 = vpop.f32.mrb[0].mxu0
        %v1960 = vpop.f32.mrb[0].mxu0
        %v1961 = vadd.f32 %v1825, %v1960
        %v1962 = vpop.f32.mrb[0].mxu0
        %1963 = vmatprep.mubr.bf16.mxu0 0
        %1964 = vmatmul.mubr.bf16.gmra.mrb[0].mxu0 %v1795
        %v1965 = vpop.f32.mrb[0].mxu0
        %v1966 = vadd.f32 %v1825, %v1965
        %v1967 = vpop.f32.mrb[0].mxu0
        %v1968 = vpop.f32.mrb[0].mxu0
        %v1969 = vadd.f32 %v1825, %v1968
        %v1970 = vpop.f32.mrb[0].mxu0
        %1971 = vmatprep.mubr.bf16.mxu0 0
        %1972 = vmatmul.mubr.bf16.gmra.mrb[0].mxu0 %v1796
        %v1973 = vpop.f32.mrb[0].mxu0
        %v1974 = vadd.f32 %v1825, %v1973
        %v1975 = vpop.f32.mrb[0].mxu0
        %v1976 = vpop.f32.mrb[0].mxu0
        %v1977 = vadd.f32 %v1825, %v1976
        %v1978 = vpop.f32.mrb[0].mxu0
        %1979 = vmatprep.mubr.bf16.mxu0 0
        %1980 = vmatmul.mubr.bf16.gmra.mrb[0].mxu0 %v1797
        %v1981 = vpop.f32.mrb[0].mxu0
        %v1982 = vadd.f32 %v1825, %v1981
        %v1983 = vpop.f32.mrb[0].mxu0
        %v1984 = vpop.f32.mrb[0].mxu0
        %v1985 = vadd.f32 %v1825, %v1984
        %v1986 = vpop.f32.mrb[0].mxu0
        %1987 = vmatprep.mubr.bf16.mxu0 0
        %1988 = vmatmul.mubr.bf16.gmra.mrb[0].mxu0 %v1798
        %v1989 = vpop.f32.mrb[0].mxu0
        %v1990 = vadd.f32 %v1825, %v1989
        %v1991 = vpop.f32.mrb[0].mxu0
        %v1992 = vpop.f32.mrb[0].mxu0
        %v1993 = vadd.f32 %v1825, %v1992
        %v1994 = vpop.f32.mrb[0].mxu0
        %1995 = vmatprep.mubr.bf16.mxu0 0
        %1996 = vmatmul.mubr.bf16.gmra.mrb[0].mxu0 %v1799
        %v1997 = vpop.f32.mrb[0].mxu0
        %v1998 = vadd.f32 %v1825, %v1997
        %v1999 = vpop.f32.mrb[0].mxu0
        %v2000 = vpop.f32.mrb[0].mxu0
        %v2001 = vadd.f32 %v1825, %v2000
        %v2002 = vpop.f32.mrb[0].mxu0
        %2003 = vmatprep.mubr.bf16.mxu0 0
        %2004 = vmatmul.mubr.bf16.gmra.mrb[0].mxu0 %v1800
        %v2005 = vpop.f32.mrb[0].mxu0
        %v2006 = vadd.f32 %v1825, %v2005
        %v2007 = vpop.f32.mrb[0].mxu0
        %v2008 = vpop.f32.mrb[0].mxu0
        %v2009 = vadd.f32 %v1825, %v2008
        %v2010 = vpop.f32.mrb[0].mxu0
        %2011 = vmatprep.mubr.bf16.mxu0 0
        %2012 = vmatmul.mubr.bf16.gmra.mrb[0].mxu0 %v1801
        %v2013 = vpop.f32.mrb[0].mxu0
        %v2014 = vadd.f32 %v1825, %v2013
        %v2015 = vpop.f32.mrb[0].mxu0
        %v2016 = vpop.f32.mrb[0].mxu0
        %v2017 = vadd.f32 %v1825, %v2016
        %v2018 = vpop.f32.mrb[0].mxu0
        %2019 = vmatprep.mubr.bf16.mxu0 0
        %2020 = vmatmul.mubr.bf16.gmra.mrb[0].mxu0 %v1802
        %v2021 = vpop.f32.mrb[0].mxu0
        %v2022 = vadd.f32 %v1825, %v2021
        %v2023 = vpop.f32.mrb[0].mxu0
        %v2024 = vpop.f32.mrb[0].mxu0
        %v2025 = vadd.f32 %v1825, %v2024
        %v2026 = vpop.f32.mrb[0].mxu0
        %2027 = vmatprep.mubr.bf16.mxu0 0
        %2028 = vmatmul.mubr.bf16.gmra.mrb[0].mxu0 %v1803
        %v2029 = vpop.f32.mrb[0].mxu0
        %v2030 = vadd.f32 %v1825, %v2029
        %v2031 = vpop.f32.mrb[0].mxu0
        %v2032 = vpop.f32.mrb[0].mxu0
        %v2033 = vadd.f32 %v1825, %v2032
        %v2034 = vpop.f32.mrb[0].mxu0
        %2035 = vdwg.mxu0
        %v2036 = vmax.f32 %v1910, 0.0
        %v2037 = vmax.f32 %v1913, 0.0
        %v2038 = vmax.f32 %v1918, 0.0
        %v2039 = vmax.f32 %v1921, 0.0
        %v2040 = vmax.f32 %v1926, 0.0
        %v2041 = vmax.f32 %v1929, 0.0
        %v2042 = vmax.f32 %v1934, 0.0
        %v2043 = vmax.f32 %v1937, 0.0
        %v2044 = vmax.f32 %v1942, 0.0
        %v2045 = vmax.f32 %v1945, 0.0
        %v2046 = vmax.f32 %v1950, 0.0
        %v2047 = vmax.f32 %v1953, 0.0
        %v2048 = vmax.f32 %v1958, 0.0
        %v2049 = vmax.f32 %v1961, 0.0
        %v2050 = vmax.f32 %v1966, 0.0
        %v2051 = vmax.f32 %v1969, 0.0
        %v2052 = vmax.f32 %v1974, 0.0
        %v2053 = vmax.f32 %v1977, 0.0
        %v2054 = vmax.f32 %v1982, 0.0
        %v2055 = vmax.f32 %v1985, 0.0
        %v2056 = vmax.f32 %v1990, 0.0
        %v2057 = vmax.f32 %v1993, 0.0
        %v2058 = vmax.f32 %v1998, 0.0
        %v2059 = vmax.f32 %v2001, 0.0
        %v2060 = vmax.f32 %v2006, 0.0
        %v2061 = vmax.f32 %v2009, 0.0
        %v2062 = vmax.f32 %v2014, 0.0
        %v2063 = vmax.f32 %v2017, 0.0
        %v2064 = vmax.f32 %v2022, 0.0
        %v2065 = vmax.f32 %v2025, 0.0
        %v2066 = vmax.f32 %v2030, 0.0
        %v2067 = vmax.f32 %v2033, 0.0
        %v2068 = vpack.c.bf16 %v2037, %v2036
        %v2069 = vpack.c.bf16 %v2039, %v2038
        %v2070 = vpack.c.bf16 %v2041, %v2040
        %v2071 = vpack.c.bf16 %v2043, %v2042
        %v2072 = vpack.c.bf16 %v2045, %v2044
        %v2073 = vpack.c.bf16 %v2047, %v2046
        %v2074 = vpack.c.bf16 %v2049, %v2048
        %v2075 = vpack.c.bf16 %v2051, %v2050
        %v2076 = vpack.c.bf16 %v2053, %v2052
        %v2077 = vpack.c.bf16 %v2055, %v2054
        %v2078 = vpack.c.bf16 %v2057, %v2056
        %v2079 = vpack.c.bf16 %v2059, %v2058
        %v2080 = vpack.c.bf16 %v2061, %v2060
        %v2081 = vpack.c.bf16 %v2063, %v2062
        %v2082 = vpack.c.bf16 %v2065, %v2064
        %v2083 = vpack.c.bf16 %v2067, %v2066
        %v2084 = vld [vmem:[#allocation11] sm:$0xf]
        %v2085 = vld [vmem:[#allocation11 + $0x4] sm:$0xf]
        %v2086 = vld [vmem:[#allocation11 + $0x8] sm:$0xf]
        %v2087 = vld [vmem:[#allocation11 + $0xc] sm:$0xf]
        %v2088 = vld [vmem:[#allocation11 + $0x10] sm:$0xf]
        %v2089 = vld [vmem:[#allocation11 + $0x14] sm:$0xf]
        %v2090 = vld [vmem:[#allocation11 + $0x18] sm:$0xf]
        %v2091 = vld [vmem:[#allocation11 + $0x1c] sm:$0xf]
        %v2092 = vld [vmem:[#allocation11 + $0x20] sm:$0xf]
        %v2093 = vld [vmem:[#allocation11 + $0x24] sm:$0xf]
        %v2094 = vld [vmem:[#allocation11 + $0x28] sm:$0xf]
        %v2095 = vld [vmem:[#allocation11 + $0x2c] sm:$0xf]
        %v2096 = vld [vmem:[#allocation11 + $0x30] sm:$0xf]
        %v2097 = vld [vmem:[#allocation11 + $0x34] sm:$0xf]
        %v2098 = vld [vmem:[#allocation11 + $0x38] sm:$0xf]
        %v2099 = vld [vmem:[#allocation11 + $0x3c] sm:$0xf]
        %v2100 = vld [vmem:[#allocation13] sm:$0x1]
        %v2102 = vlaneseq
        %v2103 = vshrl.u32 %v2102, 7
        %v2104 = vsub.s32 0, %v2103
        %v2105 = vrot.slane %v2100, %v2104
        %v2123 = vunpack.c.l.b16 %v2084
        %v2124 = vunpack.c.l.b16 %v2085
        %v2125 = vunpack.c.l.b16 %v2086
        %v2126 = vunpack.c.l.b16 %v2087
        %v2127 = vunpack.c.l.b16 %v2088
        %v2128 = vunpack.c.l.b16 %v2089
        %v2129 = vunpack.c.l.b16 %v2090
        %v2130 = vunpack.c.l.b16 %v2091
        %v2131 = vunpack.c.l.b16 %v2092
        %v2132 = vunpack.c.l.b16 %v2093
        %v2133 = vunpack.c.l.b16 %v2094
        %v2134 = vunpack.c.l.b16 %v2095
        %v2135 = vunpack.c.l.b16 %v2096
        %v2136 = vunpack.c.l.b16 %v2097
        %v2137 = vunpack.c.l.b16 %v2098
        %v2138 = vunpack.c.l.b16 %v2099
        %v2139 = vpack.c.b16 %v2124, %v2123
        %v2140 = vpack.c.b16 %v2126, %v2125
        %v2141 = vpack.c.b16 %v2128, %v2127
        %v2142 = vpack.c.b16 %v2130, %v2129
        %v2143 = vpack.c.b16 %v2132, %v2131
        %v2144 = vpack.c.b16 %v2134, %v2133
        %v2145 = vpack.c.b16 %v2136, %v2135
        %v2146 = vpack.c.b16 %v2138, %v2137
        %2155 = vmatprep.subr.bf16.mxu0 0
        %2156 = vmatpush1.bf16.msra.mxu0 %v2139
        %2157 = vmatprep.subr.bf16.mxu0 0
        %2158 = vmatpush1.bf16.msra.mxu0 %v2140
        %2159 = vmatprep.subr.bf16.mxu0 0
        %2160 = vmatpush1.bf16.msra.mxu0 %v2141
        %2161 = vmatprep.subr.bf16.mxu0 0
        %2162 = vmatpush1.bf16.msra.mxu0 %v2142
        %2163 = vmatprep.subr.bf16.mxu0 0
        %2164 = vmatpush1.bf16.msra.mxu0 %v2143
        %2165 = vmatprep.subr.bf16.mxu0 0
        %2166 = vmatpush1.bf16.msra.mxu0 %v2144
        %2167 = vmatprep.subr.bf16.mxu0 0
        %2168 = vmatpush1.bf16.msra.mxu0 %v2145
        %2169 = vmatprep.subr.bf16.mxu0 0
        %2170 = vmatpush1.bf16.msra.mxu0 %v2146
        %2171 = vmatprep.subr.bf16.mxu0 0
        %2172 = vmatpush1.bf16.msra.mxu0 0
        %2173 = vmatprep.subr.bf16.mxu0 0
        %2174 = vmatpush1.bf16.msra.mxu0 0
        %2175 = vmatprep.subr.bf16.mxu0 0
        %2176 = vmatpush1.bf16.msra.mxu0 0
        %2177 = vmatprep.subr.bf16.mxu0 0
        %2178 = vmatpush1.bf16.msra.mxu0 0
        %2179 = vmatprep.subr.bf16.mxu0 0
        %2180 = vmatpush1.bf16.msra.mxu0 0
        %2181 = vmatprep.subr.bf16.mxu0 0
        %2182 = vmatpush1.bf16.msra.mxu0 0
        %2183 = vmatprep.subr.bf16.mxu0 0
        %2184 = vmatpush1.bf16.msra.mxu0 0
        %2185 = vmatprep.subr.bf16.mxu0 0
        %2186 = vmatpush1.bf16.msra.mxu0 0
        %2187 = vmatprep.mubr.bf16.mxu0 0
        %2188 = vmatmul.mubr.bf16.gmra.mrb[0].mxu0 %v2068
        %v2189 = vpop.f32.mrb[0].mxu0
        %v2190 = vadd.f32 %v2105, %v2189
        %v2191 = vpop.f32.mrb[0].mxu0
        %v2192 = vpop.f32.mrb[0].mxu0
        %v2193 = vadd.f32 %v2105, %v2192
        %v2194 = vpop.f32.mrb[0].mxu0
        %2195 = vmatprep.mubr.bf16.mxu0 0
        %2196 = vmatmul.mubr.bf16.gmra.mrb[0].mxu0 %v2069
        %v2197 = vpop.f32.mrb[0].mxu0
        %v2198 = vadd.f32 %v2105, %v2197
        %v2199 = vpop.f32.mrb[0].mxu0
        %v2200 = vpop.f32.mrb[0].mxu0
        %v2201 = vadd.f32 %v2105, %v2200
        %v2202 = vpop.f32.mrb[0].mxu0
        %2203 = vmatprep.mubr.bf16.mxu0 0
        %2204 = vmatmul.mubr.bf16.gmra.mrb[0].mxu0 %v2070
        %v2205 = vpop.f32.mrb[0].mxu0
        %v2206 = vadd.f32 %v2105, %v2205
        %v2207 = vpop.f32.mrb[0].mxu0
        %v2208 = vpop.f32.mrb[0].mxu0
        %v2209 = vadd.f32 %v2105, %v2208
        %v2210 = vpop.f32.mrb[0].mxu0
        %2211 = vmatprep.mubr.bf16.mxu0 0
        %2212 = vmatmul.mubr.bf16.gmra.mrb[0].mxu0 %v2071
        %v2213 = vpop.f32.mrb[0].mxu0
        %v2214 = vadd.f32 %v2105, %v2213
        %v2215 = vpop.f32.mrb[0].mxu0
        %v2216 = vpop.f32.mrb[0].mxu0
        %v2217 = vadd.f32 %v2105, %v2216
        %v2218 = vpop.f32.mrb[0].mxu0
        %2219 = vmatprep.mubr.bf16.mxu0 0
        %2220 = vmatmul.mubr.bf16.gmra.mrb[0].mxu0 %v2072
        %v2221 = vpop.f32.mrb[0].mxu0
        %v2222 = vadd.f32 %v2105, %v2221
        %v2223 = vpop.f32.mrb[0].mxu0
        %v2224 = vpop.f32.mrb[0].mxu0
        %v2225 = vadd.f32 %v2105, %v2224
        %v2226 = vpop.f32.mrb[0].mxu0
        %2227 = vmatprep.mubr.bf16.mxu0 0
        %2228 = vmatmul.mubr.bf16.gmra.mrb[0].mxu0 %v2073
        %v2229 = vpop.f32.mrb[0].mxu0
        %v2230 = vadd.f32 %v2105, %v2229
        %v2231 = vpop.f32.mrb[0].mxu0
        %v2232 = vpop.f32.mrb[0].mxu0
        %v2233 = vadd.f32 %v2105, %v2232
        %v2234 = vpop.f32.mrb[0].mxu0
        %2235 = vmatprep.mubr.bf16.mxu0 0
        %2236 = vmatmul.mubr.bf16.gmra.mrb[0].mxu0 %v2074
        %v2237 = vpop.f32.mrb[0].mxu0
        %v2238 = vadd.f32 %v2105, %v2237
        %v2239 = vpop.f32.mrb[0].mxu0
        %v2240 = vpop.f32.mrb[0].mxu0
        %v2241 = vadd.f32 %v2105, %v2240
        %v2242 = vpop.f32.mrb[0].mxu0
        %2243 = vmatprep.mubr.bf16.mxu0 0
        %2244 = vmatmul.mubr.bf16.gmra.mrb[0].mxu0 %v2075
        %v2245 = vpop.f32.mrb[0].mxu0
        %v2246 = vadd.f32 %v2105, %v2245
        %v2247 = vpop.f32.mrb[0].mxu0
        %v2248 = vpop.f32.mrb[0].mxu0
        %v2249 = vadd.f32 %v2105, %v2248
        %v2250 = vpop.f32.mrb[0].mxu0
        %2251 = vmatprep.mubr.bf16.mxu0 0
        %2252 = vmatmul.mubr.bf16.gmra.mrb[0].mxu0 %v2076
        %v2253 = vpop.f32.mrb[0].mxu0
        %v2254 = vadd.f32 %v2105, %v2253
        %v2255 = vpop.f32.mrb[0].mxu0
        %v2256 = vpop.f32.mrb[0].mxu0
        %v2257 = vadd.f32 %v2105, %v2256
        %v2258 = vpop.f32.mrb[0].mxu0
        %2259 = vmatprep.mubr.bf16.mxu0 0
        %2260 = vmatmul.mubr.bf16.gmra.mrb[0].mxu0 %v2077
        %v2261 = vpop.f32.mrb[0].mxu0
        %v2262 = vadd.f32 %v2105, %v2261
        %v2263 = vpop.f32.mrb[0].mxu0
        %v2264 = vpop.f32.mrb[0].mxu0
        %v2265 = vadd.f32 %v2105, %v2264
        %v2266 = vpop.f32.mrb[0].mxu0
        %2267 = vmatprep.mubr.bf16.mxu0 0
        %2268 = vmatmul.mubr.bf16.gmra.mrb[0].mxu0 %v2078
        %v2269 = vpop.f32.mrb[0].mxu0
        %v2270 = vadd.f32 %v2105, %v2269
        %v2271 = vpop.f32.mrb[0].mxu0
        %v2272 = vpop.f32.mrb[0].mxu0
        %v2273 = vadd.f32 %v2105, %v2272
        %v2274 = vpop.f32.mrb[0].mxu0
        %2275 = vmatprep.mubr.bf16.mxu0 0
        %2276 = vmatmul.mubr.bf16.gmra.mrb[0].mxu0 %v2079
        %v2277 = vpop.f32.mrb[0].mxu0
        %v2278 = vadd.f32 %v2105, %v2277
        %v2279 = vpop.f32.mrb[0].mxu0
        %v2280 = vpop.f32.mrb[0].mxu0
        %v2281 = vadd.f32 %v2105, %v2280
        %v2282 = vpop.f32.mrb[0].mxu0
        %2283 = vmatprep.mubr.bf16.mxu0 0
        %2284 = vmatmul.mubr.bf16.gmra.mrb[0].mxu0 %v2080
        %v2285 = vpop.f32.mrb[0].mxu0
        %v2286 = vadd.f32 %v2105, %v2285
        %v2287 = vpop.f32.mrb[0].mxu0
        %v2288 = vpop.f32.mrb[0].mxu0
        %v2289 = vadd.f32 %v2105, %v2288
        %v2290 = vpop.f32.mrb[0].mxu0
        %2291 = vmatprep.mubr.bf16.mxu0 0
        %2292 = vmatmul.mubr.bf16.gmra.mrb[0].mxu0 %v2081
        %v2293 = vpop.f32.mrb[0].mxu0
        %v2294 = vadd.f32 %v2105, %v2293
        %v2295 = vpop.f32.mrb[0].mxu0
        %v2296 = vpop.f32.mrb[0].mxu0
        %v2297 = vadd.f32 %v2105, %v2296
        %v2298 = vpop.f32.mrb[0].mxu0
        %2299 = vmatprep.mubr.bf16.mxu0 0
        %2300 = vmatmul.mubr.bf16.gmra.mrb[0].mxu0 %v2082
        %v2301 = vpop.f32.mrb[0].mxu0
        %v2302 = vadd.f32 %v2105, %v2301
        %v2303 = vpop.f32.mrb[0].mxu0
        %v2304 = vpop.f32.mrb[0].mxu0
        %v2305 = vadd.f32 %v2105, %v2304
        %v2306 = vpop.f32.mrb[0].mxu0
        %2307 = vmatprep.mubr.bf16.mxu0 0
        %2308 = vmatmul.mubr.bf16.gmra.mrb[0].mxu0 %v2083
        %v2309 = vpop.f32.mrb[0].mxu0
        %v2310 = vadd.f32 %v2105, %v2309
        %v2311 = vpop.f32.mrb[0].mxu0
        %v2312 = vpop.f32.mrb[0].mxu0
        %v2313 = vadd.f32 %v2105, %v2312
        %v2314 = vpop.f32.mrb[0].mxu0
        %2315 = vdwg.mxu0
        %v2316 = vmax.f32 %v2190, 0.0
        %v2317 = vmax.f32 %v2193, 0.0
        %v2318 = vmax.f32 %v2198, 0.0
        %v2319 = vmax.f32 %v2201, 0.0
        %v2320 = vmax.f32 %v2206, 0.0
        %v2321 = vmax.f32 %v2209, 0.0
        %v2322 = vmax.f32 %v2214, 0.0
        %v2323 = vmax.f32 %v2217, 0.0
        %v2324 = vmax.f32 %v2222, 0.0
        %v2325 = vmax.f32 %v2225, 0.0
        %v2326 = vmax.f32 %v2230, 0.0
        %v2327 = vmax.f32 %v2233, 0.0
        %v2328 = vmax.f32 %v2238, 0.0
        %v2329 = vmax.f32 %v2241, 0.0
        %v2330 = vmax.f32 %v2246, 0.0
        %v2331 = vmax.f32 %v2249, 0.0
        %v2332 = vmax.f32 %v2254, 0.0
        %v2333 = vmax.f32 %v2257, 0.0
        %v2334 = vmax.f32 %v2262, 0.0
        %v2335 = vmax.f32 %v2265, 0.0
        %v2336 = vmax.f32 %v2270, 0.0
        %v2337 = vmax.f32 %v2273, 0.0
        %v2338 = vmax.f32 %v2278, 0.0
        %v2339 = vmax.f32 %v2281, 0.0
        %v2340 = vmax.f32 %v2286, 0.0
        %v2341 = vmax.f32 %v2289, 0.0
        %v2342 = vmax.f32 %v2294, 0.0
        %v2343 = vmax.f32 %v2297, 0.0
        %v2344 = vmax.f32 %v2302, 0.0
        %v2345 = vmax.f32 %v2305, 0.0
        %v2346 = vmax.f32 %v2310, 0.0
        %v2347 = vmax.f32 %v2313, 0.0
        %v2348 = vpack.c.bf16 %v2317, %v2316
        %v2349 = vpack.c.bf16 %v2319, %v2318
        %v2350 = vpack.c.bf16 %v2321, %v2320
        %v2351 = vpack.c.bf16 %v2323, %v2322
        %v2352 = vpack.c.bf16 %v2325, %v2324
        %v2353 = vpack.c.bf16 %v2327, %v2326
        %v2354 = vpack.c.bf16 %v2329, %v2328
        %v2355 = vpack.c.bf16 %v2331, %v2330
        %v2356 = vpack.c.bf16 %v2333, %v2332
        %v2357 = vpack.c.bf16 %v2335, %v2334
        %v2358 = vpack.c.bf16 %v2337, %v2336
        %v2359 = vpack.c.bf16 %v2339, %v2338
        %v2360 = vpack.c.bf16 %v2341, %v2340
        %v2361 = vpack.c.bf16 %v2343, %v2342
        %v2362 = vpack.c.bf16 %v2345, %v2344
        %v2363 = vpack.c.bf16 %v2347, %v2346
        %v2364 = vld [vmem:[#allocation14] sm:$0xf]
        %v2365 = vld [vmem:[#allocation14 + $0x4] sm:$0xf]
        %v2366 = vld [vmem:[#allocation14 + $0x8] sm:$0xf]
        %v2367 = vld [vmem:[#allocation14 + $0xc] sm:$0xf]
        %v2368 = vld [vmem:[#allocation14 + $0x10] sm:$0xf]
        %v2369 = vld [vmem:[#allocation14 + $0x14] sm:$0xf]
        %v2370 = vld [vmem:[#allocation14 + $0x18] sm:$0xf]
        %v2371 = vld [vmem:[#allocation14 + $0x1c] sm:$0xf]
        %v2372 = vld [vmem:[#allocation14 + $0x20] sm:$0xf]
        %v2373 = vld [vmem:[#allocation14 + $0x24] sm:$0xf]
        %v2374 = vld [vmem:[#allocation14 + $0x28] sm:$0xf]
        %v2375 = vld [vmem:[#allocation14 + $0x2c] sm:$0xf]
        %v2376 = vld [vmem:[#allocation14 + $0x30] sm:$0xf]
        %v2377 = vld [vmem:[#allocation14 + $0x34] sm:$0xf]
        %v2378 = vld [vmem:[#allocation14 + $0x38] sm:$0xf]
        %v2379 = vld [vmem:[#allocation14 + $0x3c] sm:$0xf]
        %v2380 = vld [vmem:[#allocation16] sm:$0x1]
        %v2382 = vlaneseq
        %v2383 = vshrl.u32 %v2382, 7
        %v2384 = vsub.s32 0, %v2383
        %v2385 = vrot.slane %v2380, %v2384
        %v2403 = vunpack.c.l.b16 %v2364
        %v2404 = vunpack.c.l.b16 %v2365
        %v2405 = vunpack.c.l.b16 %v2366
        %v2406 = vunpack.c.l.b16 %v2367
        %v2407 = vunpack.c.l.b16 %v2368
        %v2408 = vunpack.c.l.b16 %v2369
        %v2409 = vunpack.c.l.b16 %v2370
        %v2410 = vunpack.c.l.b16 %v2371
        %v2411 = vunpack.c.l.b16 %v2372
        %v2412 = vunpack.c.l.b16 %v2373
        %v2413 = vunpack.c.l.b16 %v2374
        %v2414 = vunpack.c.l.b16 %v2375
        %v2415 = vunpack.c.l.b16 %v2376
        %v2416 = vunpack.c.l.b16 %v2377
        %v2417 = vunpack.c.l.b16 %v2378
        %v2418 = vunpack.c.l.b16 %v2379
        %v2419 = vpack.c.b16 %v2404, %v2403
        %v2420 = vpack.c.b16 %v2406, %v2405
        %v2421 = vpack.c.b16 %v2408, %v2407
        %v2422 = vpack.c.b16 %v2410, %v2409
        %v2423 = vpack.c.b16 %v2412, %v2411
        %v2424 = vpack.c.b16 %v2414, %v2413
        %v2425 = vpack.c.b16 %v2416, %v2415
        %v2426 = vpack.c.b16 %v2418, %v2417
        %2435 = vmatprep.subr.bf16.mxu0 0
        %2436 = vmatpush1.bf16.msra.mxu0 %v2419
        %2437 = vmatprep.subr.bf16.mxu0 0
        %2438 = vmatpush1.bf16.msra.mxu0 %v2420
        %2439 = vmatprep.subr.bf16.mxu0 0
        %2440 = vmatpush1.bf16.msra.mxu0 %v2421
        %2441 = vmatprep.subr.bf16.mxu0 0
        %2442 = vmatpush1.bf16.msra.mxu0 %v2422
        %2443 = vmatprep.subr.bf16.mxu0 0
        %2444 = vmatpush1.bf16.msra.mxu0 %v2423
        %2445 = vmatprep.subr.bf16.mxu0 0
        %2446 = vmatpush1.bf16.msra.mxu0 %v2424
        %2447 = vmatprep.subr.bf16.mxu0 0
        %2448 = vmatpush1.bf16.msra.mxu0 %v2425
        %2449 = vmatprep.subr.bf16.mxu0 0
        %2450 = vmatpush1.bf16.msra.mxu0 %v2426
        %2451 = vmatprep.subr.bf16.mxu0 0
        %2452 = vmatpush1.bf16.msra.mxu0 0
        %2453 = vmatprep.subr.bf16.mxu0 0
        %2454 = vmatpush1.bf16.msra.mxu0 0
        %2455 = vmatprep.subr.bf16.mxu0 0
        %2456 = vmatpush1.bf16.msra.mxu0 0
        %2457 = vmatprep.subr.bf16.mxu0 0
        %2458 = vmatpush1.bf16.msra.mxu0 0
        %2459 = vmatprep.subr.bf16.mxu0 0
        %2460 = vmatpush1.bf16.msra.mxu0 0
        %2461 = vmatprep.subr.bf16.mxu0 0
        %2462 = vmatpush1.bf16.msra.mxu0 0
        %2463 = vmatprep.subr.bf16.mxu0 0
        %2464 = vmatpush1.bf16.msra.mxu0 0
        %2465 = vmatprep.subr.bf16.mxu0 0
        %2466 = vmatpush1.bf16.msra.mxu0 0
        %2467 = vmatprep.mubr.bf16.mxu0 0
        %2468 = vmatmul.mubr.bf16.gmra.mrb[0].mxu0 %v2348
        %v2469 = vpop.f32.mrb[0].mxu0
        %v2470 = vadd.f32 %v2385, %v2469
        %v2471 = vpop.f32.mrb[0].mxu0
        %v2472 = vpop.f32.mrb[0].mxu0
        %v2473 = vadd.f32 %v2385, %v2472
        %v2474 = vpop.f32.mrb[0].mxu0
        %2475 = vmatprep.mubr.bf16.mxu0 0
        %2476 = vmatmul.mubr.bf16.gmra.mrb[0].mxu0 %v2349
        %v2477 = vpop.f32.mrb[0].mxu0
        %v2478 = vadd.f32 %v2385, %v2477
        %v2479 = vpop.f32.mrb[0].mxu0
        %v2480 = vpop.f32.mrb[0].mxu0
        %v2481 = vadd.f32 %v2385, %v2480
        %v2482 = vpop.f32.mrb[0].mxu0
        %2483 = vmatprep.mubr.bf16.mxu0 0
        %2484 = vmatmul.mubr.bf16.gmra.mrb[0].mxu0 %v2350
        %v2485 = vpop.f32.mrb[0].mxu0
        %v2486 = vadd.f32 %v2385, %v2485
        %v2487 = vpop.f32.mrb[0].mxu0
        %v2488 = vpop.f32.mrb[0].mxu0
        %v2489 = vadd.f32 %v2385, %v2488
        %v2490 = vpop.f32.mrb[0].mxu0
        %2491 = vmatprep.mubr.bf16.mxu0 0
        %2492 = vmatmul.mubr.bf16.gmra.mrb[0].mxu0 %v2351
        %v2493 = vpop.f32.mrb[0].mxu0
        %v2494 = vadd.f32 %v2385, %v2493
        %v2495 = vpop.f32.mrb[0].mxu0
        %v2496 = vpop.f32.mrb[0].mxu0
        %v2497 = vadd.f32 %v2385, %v2496
        %v2498 = vpop.f32.mrb[0].mxu0
        %2499 = vmatprep.mubr.bf16.mxu0 0
        %2500 = vmatmul.mubr.bf16.gmra.mrb[0].mxu0 %v2352
        %v2501 = vpop.f32.mrb[0].mxu0
        %v2502 = vadd.f32 %v2385, %v2501
        %v2503 = vpop.f32.mrb[0].mxu0
        %v2504 = vpop.f32.mrb[0].mxu0
        %v2505 = vadd.f32 %v2385, %v2504
        %v2506 = vpop.f32.mrb[0].mxu0
        %2507 = vmatprep.mubr.bf16.mxu0 0
        %2508 = vmatmul.mubr.bf16.gmra.mrb[0].mxu0 %v2353
        %v2509 = vpop.f32.mrb[0].mxu0
        %v2510 = vadd.f32 %v2385, %v2509
        %v2511 = vpop.f32.mrb[0].mxu0
        %v2512 = vpop.f32.mrb[0].mxu0
        %v2513 = vadd.f32 %v2385, %v2512
        %v2514 = vpop.f32.mrb[0].mxu0
        %2515 = vmatprep.mubr.bf16.mxu0 0
        %2516 = vmatmul.mubr.bf16.gmra.mrb[0].mxu0 %v2354
        %v2517 = vpop.f32.mrb[0].mxu0
        %v2518 = vadd.f32 %v2385, %v2517
        %v2519 = vpop.f32.mrb[0].mxu0
        %v2520 = vpop.f32.mrb[0].mxu0
        %v2521 = vadd.f32 %v2385, %v2520
        %v2522 = vpop.f32.mrb[0].mxu0
        %2523 = vmatprep.mubr.bf16.mxu0 0
        %2524 = vmatmul.mubr.bf16.gmra.mrb[0].mxu0 %v2355
        %v2525 = vpop.f32.mrb[0].mxu0
        %v2526 = vadd.f32 %v2385, %v2525
        %v2527 = vpop.f32.mrb[0].mxu0
        %v2528 = vpop.f32.mrb[0].mxu0
        %v2529 = vadd.f32 %v2385, %v2528
        %v2530 = vpop.f32.mrb[0].mxu0
        %2531 = vmatprep.mubr.bf16.mxu0 0
        %2532 = vmatmul.mubr.bf16.gmra.mrb[0].mxu0 %v2356
        %v2533 = vpop.f32.mrb[0].mxu0
        %v2534 = vadd.f32 %v2385, %v2533
        %v2535 = vpop.f32.mrb[0].mxu0
        %v2536 = vpop.f32.mrb[0].mxu0
        %v2537 = vadd.f32 %v2385, %v2536
        %v2538 = vpop.f32.mrb[0].mxu0
        %2539 = vmatprep.mubr.bf16.mxu0 0
        %2540 = vmatmul.mubr.bf16.gmra.mrb[0].mxu0 %v2357
        %v2541 = vpop.f32.mrb[0].mxu0
        %v2542 = vadd.f32 %v2385, %v2541
        %v2543 = vpop.f32.mrb[0].mxu0
        %v2544 = vpop.f32.mrb[0].mxu0
        %v2545 = vadd.f32 %v2385, %v2544
        %v2546 = vpop.f32.mrb[0].mxu0
        %2547 = vmatprep.mubr.bf16.mxu0 0
        %2548 = vmatmul.mubr.bf16.gmra.mrb[0].mxu0 %v2358
        %v2549 = vpop.f32.mrb[0].mxu0
        %v2550 = vadd.f32 %v2385, %v2549
        %v2551 = vpop.f32.mrb[0].mxu0
        %v2552 = vpop.f32.mrb[0].mxu0
        %v2553 = vadd.f32 %v2385, %v2552
        %v2554 = vpop.f32.mrb[0].mxu0
        %2555 = vmatprep.mubr.bf16.mxu0 0
        %2556 = vmatmul.mubr.bf16.gmra.mrb[0].mxu0 %v2359
        %v2557 = vpop.f32.mrb[0].mxu0
        %v2558 = vadd.f32 %v2385, %v2557
        %v2559 = vpop.f32.mrb[0].mxu0
        %v2560 = vpop.f32.mrb[0].mxu0
        %v2561 = vadd.f32 %v2385, %v2560
        %v2562 = vpop.f32.mrb[0].mxu0
        %2563 = vmatprep.mubr.bf16.mxu0 0
        %2564 = vmatmul.mubr.bf16.gmra.mrb[0].mxu0 %v2360
        %v2565 = vpop.f32.mrb[0].mxu0
        %v2566 = vadd.f32 %v2385, %v2565
        %v2567 = vpop.f32.mrb[0].mxu0
        %v2568 = vpop.f32.mrb[0].mxu0
        %v2569 = vadd.f32 %v2385, %v2568
        %v2570 = vpop.f32.mrb[0].mxu0
        %2571 = vmatprep.mubr.bf16.mxu0 0
        %2572 = vmatmul.mubr.bf16.gmra.mrb[0].mxu0 %v2361
        %v2573 = vpop.f32.mrb[0].mxu0
        %v2574 = vadd.f32 %v2385, %v2573
        %v2575 = vpop.f32.mrb[0].mxu0
        %v2576 = vpop.f32.mrb[0].mxu0
        %v2577 = vadd.f32 %v2385, %v2576
        %v2578 = vpop.f32.mrb[0].mxu0
        %2579 = vmatprep.mubr.bf16.mxu0 0
        %2580 = vmatmul.mubr.bf16.gmra.mrb[0].mxu0 %v2362
        %v2581 = vpop.f32.mrb[0].mxu0
        %v2582 = vadd.f32 %v2385, %v2581
        %v2583 = vpop.f32.mrb[0].mxu0
        %v2584 = vpop.f32.mrb[0].mxu0
        %v2585 = vadd.f32 %v2385, %v2584
        %v2586 = vpop.f32.mrb[0].mxu0
        %2587 = vmatprep.mubr.bf16.mxu0 0
        %2588 = vmatmul.mubr.bf16.gmra.mrb[0].mxu0 %v2363
        %v2589 = vpop.f32.mrb[0].mxu0
        %v2590 = vadd.f32 %v2385, %v2589
        %v2591 = vpop.f32.mrb[0].mxu0
        %v2592 = vpop.f32.mrb[0].mxu0
        %v2593 = vadd.f32 %v2385, %v2592
        %v2594 = vpop.f32.mrb[0].mxu0
        %2595 = vdwg.mxu0
        %v2596 = vmax.f32 %v2470, 0.0
        %v2597 = vmax.f32 %v2473, 0.0
        %v2598 = vmax.f32 %v2478, 0.0
        %v2599 = vmax.f32 %v2481, 0.0
        %v2600 = vmax.f32 %v2486, 0.0
        %v2601 = vmax.f32 %v2489, 0.0
        %v2602 = vmax.f32 %v2494, 0.0
        %v2603 = vmax.f32 %v2497, 0.0
        %v2604 = vmax.f32 %v2502, 0.0
        %v2605 = vmax.f32 %v2505, 0.0
        %v2606 = vmax.f32 %v2510, 0.0
        %v2607 = vmax.f32 %v2513, 0.0
        %v2608 = vmax.f32 %v2518, 0.0
        %v2609 = vmax.f32 %v2521, 0.0
        %v2610 = vmax.f32 %v2526, 0.0
        %v2611 = vmax.f32 %v2529, 0.0
        %v2612 = vmax.f32 %v2534, 0.0
        %v2613 = vmax.f32 %v2537, 0.0
        %v2614 = vmax.f32 %v2542, 0.0
        %v2615 = vmax.f32 %v2545, 0.0
        %v2616 = vmax.f32 %v2550, 0.0
        %v2617 = vmax.f32 %v2553, 0.0
        %v2618 = vmax.f32 %v2558, 0.0
        %v2619 = vmax.f32 %v2561, 0.0
        %v2620 = vmax.f32 %v2566, 0.0
        %v2621 = vmax.f32 %v2569, 0.0
        %v2622 = vmax.f32 %v2574, 0.0
        %v2623 = vmax.f32 %v2577, 0.0
        %v2624 = vmax.f32 %v2582, 0.0
        %v2625 = vmax.f32 %v2585, 0.0
        %v2626 = vmax.f32 %v2590, 0.0
        %v2627 = vmax.f32 %v2593, 0.0
        %v2628 = vld [vmem:[#allocation17] sm:$0xf]
        %v2629 = vld [vmem:[#allocation17 + $0x4] sm:$0xf]
        %v2630 = vld [vmem:[#allocation17 + $0x8] sm:$0xf]
        %v2631 = vld [vmem:[#allocation17 + $0xc] sm:$0xf]
        %v2632 = vld [vmem:[#allocation17 + $0x10] sm:$0xf]
        %v2633 = vld [vmem:[#allocation17 + $0x14] sm:$0xf]
        %v2634 = vld [vmem:[#allocation17 + $0x18] sm:$0xf]
        %v2635 = vld [vmem:[#allocation17 + $0x1c] sm:$0xf]
        %v2636 = vld [vmem:[#allocation17 + $0x20] sm:$0xf]
        %v2637 = vld [vmem:[#allocation17 + $0x24] sm:$0xf]
        %v2638 = vld [vmem:[#allocation17 + $0x28] sm:$0xf]
        %v2639 = vld [vmem:[#allocation17 + $0x2c] sm:$0xf]
        %v2640 = vld [vmem:[#allocation17 + $0x30] sm:$0xf]
        %v2641 = vld [vmem:[#allocation17 + $0x34] sm:$0xf]
        %v2642 = vld [vmem:[#allocation17 + $0x38] sm:$0xf]
        %v2643 = vld [vmem:[#allocation17 + $0x3c] sm:$0xf]
        %v2644 = vpack.c.bf16 %v2597, %v2596
        %v2645 = vpack.c.bf16 %v2599, %v2598
        %v2646 = vpack.c.bf16 %v2601, %v2600
        %v2647 = vpack.c.bf16 %v2603, %v2602
        %v2648 = vpack.c.bf16 %v2605, %v2604
        %v2649 = vpack.c.bf16 %v2607, %v2606
        %v2650 = vpack.c.bf16 %v2609, %v2608
        %v2651 = vpack.c.bf16 %v2611, %v2610
        %v2652 = vpack.c.bf16 %v2613, %v2612
        %v2653 = vpack.c.bf16 %v2615, %v2614
        %v2654 = vpack.c.bf16 %v2617, %v2616
        %v2655 = vpack.c.bf16 %v2619, %v2618
        %v2656 = vpack.c.bf16 %v2621, %v2620
        %v2657 = vpack.c.bf16 %v2623, %v2622
        %v2658 = vpack.c.bf16 %v2625, %v2624
        %v2659 = vpack.c.bf16 %v2627, %v2626
        %v2660 = vld [vmem:[#allocation19] sm:$0xf]
        %v2661 = vld [vmem:[#allocation19 + $0x4] sm:$0xf]
        %v2662 = vld [vmem:[#allocation19 + $0x8] sm:$0xf]
        %v2663 = vld [vmem:[#allocation19 + $0xc] sm:$0xf]
        %v2664 = vld [vmem:[#allocation19 + $0x10] sm:$0xf]
        %v2665 = vld [vmem:[#allocation19 + $0x14] sm:$0xf]
        %v2666 = vld [vmem:[#allocation19 + $0x18] sm:$0xf]
        %v2667 = vld [vmem:[#allocation19 + $0x1c] sm:$0xf]
        %v2668 = vld [vmem:[#allocation19 + $0x20] sm:$0xf]
        %v2669 = vld [vmem:[#allocation19 + $0x24] sm:$0xf]
        %v2670 = vld [vmem:[#allocation19 + $0x28] sm:$0xf]
        %v2671 = vld [vmem:[#allocation19 + $0x2c] sm:$0xf]
        %v2672 = vld [vmem:[#allocation19 + $0x30] sm:$0xf]
        %v2673 = vld [vmem:[#allocation19 + $0x34] sm:$0xf]
        %v2674 = vld [vmem:[#allocation19 + $0x38] sm:$0xf]
        %v2675 = vld [vmem:[#allocation19 + $0x3c] sm:$0xf]
        %v2692 = vunpack.c.l.b16 %v2660
        %v2693 = vunpack.c.l.b16 %v2661
        %v2694 = vunpack.c.l.b16 %v2662
        %v2695 = vunpack.c.l.b16 %v2663
        %v2696 = vunpack.c.l.b16 %v2664
        %v2697 = vunpack.c.l.b16 %v2665
        %v2698 = vunpack.c.l.b16 %v2666
        %v2699 = vunpack.c.l.b16 %v2667
        %v2700 = vunpack.c.l.b16 %v2668
        %v2701 = vunpack.c.l.b16 %v2669
        %v2702 = vunpack.c.l.b16 %v2670
        %v2703 = vunpack.c.l.b16 %v2671
        %v2704 = vunpack.c.l.b16 %v2672
        %v2705 = vunpack.c.l.b16 %v2673
        %v2706 = vunpack.c.l.b16 %v2674
        %v2707 = vunpack.c.l.b16 %v2675
        %v2708 = vpack.c.b16 %v2693, %v2692
        %v2709 = vpack.c.b16 %v2695, %v2694
        %v2710 = vpack.c.b16 %v2697, %v2696
        %v2711 = vpack.c.b16 %v2699, %v2698
        %v2712 = vpack.c.b16 %v2701, %v2700
        %v2713 = vpack.c.b16 %v2703, %v2702
        %v2714 = vpack.c.b16 %v2705, %v2704
        %v2715 = vpack.c.b16 %v2707, %v2706
        %2724 = vmatprep.subr.bf16.mxu0 0
        %2725 = vmatpush1.bf16.msra.mxu0 %v2708
        %2726 = vmatprep.subr.bf16.mxu0 0
        %2727 = vmatpush1.bf16.msra.mxu0 %v2709
        %2728 = vmatprep.subr.bf16.mxu0 0
        %2729 = vmatpush1.bf16.msra.mxu0 %v2710
        %2730 = vmatprep.subr.bf16.mxu0 0
        %2731 = vmatpush1.bf16.msra.mxu0 %v2711
        %2732 = vmatprep.subr.bf16.mxu0 0
        %2733 = vmatpush1.bf16.msra.mxu0 %v2712
        %2734 = vmatprep.subr.bf16.mxu0 0
        %2735 = vmatpush1.bf16.msra.mxu0 %v2713
        %2736 = vmatprep.subr.bf16.mxu0 0
        %2737 = vmatpush1.bf16.msra.mxu0 %v2714
        %2738 = vmatprep.subr.bf16.mxu0 0
        %2739 = vmatpush1.bf16.msra.mxu0 %v2715
        %2740 = vmatprep.subr.bf16.mxu0 0
        %2741 = vmatpush1.bf16.msra.mxu0 0
        %2742 = vmatprep.subr.bf16.mxu0 0
        %2743 = vmatpush1.bf16.msra.mxu0 0
        %2744 = vmatprep.subr.bf16.mxu0 0
        %2745 = vmatpush1.bf16.msra.mxu0 0
        %2746 = vmatprep.subr.bf16.mxu0 0
        %2747 = vmatpush1.bf16.msra.mxu0 0
        %2748 = vmatprep.subr.bf16.mxu0 0
        %2749 = vmatpush1.bf16.msra.mxu0 0
        %2750 = vmatprep.subr.bf16.mxu0 0
        %2751 = vmatpush1.bf16.msra.mxu0 0
        %2752 = vmatprep.subr.bf16.mxu0 0
        %2753 = vmatpush1.bf16.msra.mxu0 0
        %2754 = vmatprep.subr.bf16.mxu0 0
        %2755 = vmatpush1.bf16.msra.mxu0 0
        %2756 = vmatprep.mubr.bf16.mxu0 0
        %2757 = vmatmul.mubr.bf16.gmra.mrb[0].mxu0 %v2644
        %v2758 = vpop.f32.mrb[0].mxu0
        %v2759 = vadd.f32 0.0, %v2758
        %v2760 = vpop.f32.mrb[0].mxu0
        %v2761 = vpop.f32.mrb[0].mxu0
        %v2762 = vadd.f32 0.0, %v2761
        %v2763 = vpop.f32.mrb[0].mxu0
        %2764 = vmatprep.mubr.bf16.mxu0 0
        %2765 = vmatmul.mubr.bf16.gmra.mrb[0].mxu0 %v2645
        %v2766 = vpop.f32.mrb[0].mxu0
        %v2767 = vadd.f32 0.0, %v2766
        %v2768 = vpop.f32.mrb[0].mxu0
        %v2769 = vpop.f32.mrb[0].mxu0
        %v2770 = vadd.f32 0.0, %v2769
        %v2771 = vpop.f32.mrb[0].mxu0
        %2772 = vmatprep.mubr.bf16.mxu0 0
        %2773 = vmatmul.mubr.bf16.gmra.mrb[0].mxu0 %v2646
        %v2774 = vpop.f32.mrb[0].mxu0
        %v2775 = vadd.f32 0.0, %v2774
        %v2776 = vpop.f32.mrb[0].mxu0
        %v2777 = vpop.f32.mrb[0].mxu0
        %v2778 = vadd.f32 0.0, %v2777
        %v2779 = vpop.f32.mrb[0].mxu0
        %2780 = vmatprep.mubr.bf16.mxu0 0
        %2781 = vmatmul.mubr.bf16.gmra.mrb[0].mxu0 %v2647
        %v2782 = vpop.f32.mrb[0].mxu0
        %v2783 = vadd.f32 0.0, %v2782
        %v2784 = vpop.f32.mrb[0].mxu0
        %v2785 = vpop.f32.mrb[0].mxu0
        %v2786 = vadd.f32 0.0, %v2785
        %v2787 = vpop.f32.mrb[0].mxu0
        %2788 = vmatprep.mubr.bf16.mxu0 0
        %2789 = vmatmul.mubr.bf16.gmra.mrb[0].mxu0 %v2648
        %v2790 = vpop.f32.mrb[0].mxu0
        %v2791 = vadd.f32 0.0, %v2790
        %v2792 = vpop.f32.mrb[0].mxu0
        %v2793 = vpop.f32.mrb[0].mxu0
        %v2794 = vadd.f32 0.0, %v2793
        %v2795 = vpop.f32.mrb[0].mxu0
        %2796 = vmatprep.mubr.bf16.mxu0 0
        %2797 = vmatmul.mubr.bf16.gmra.mrb[0].mxu0 %v2649
        %v2798 = vpop.f32.mrb[0].mxu0
        %v2799 = vadd.f32 0.0, %v2798
        %v2800 = vpop.f32.mrb[0].mxu0
        %v2801 = vpop.f32.mrb[0].mxu0
        %v2802 = vadd.f32 0.0, %v2801
        %v2803 = vpop.f32.mrb[0].mxu0
        %2804 = vmatprep.mubr.bf16.mxu0 0
        %2805 = vmatmul.mubr.bf16.gmra.mrb[0].mxu0 %v2650
        %v2806 = vpop.f32.mrb[0].mxu0
        %v2807 = vadd.f32 0.0, %v2806
        %v2808 = vpop.f32.mrb[0].mxu0
        %v2809 = vpop.f32.mrb[0].mxu0
        %v2810 = vadd.f32 0.0, %v2809
        %v2811 = vpop.f32.mrb[0].mxu0
        %2812 = vmatprep.mubr.bf16.mxu0 0
        %2813 = vmatmul.mubr.bf16.gmra.mrb[0].mxu0 %v2651
        %v2814 = vpop.f32.mrb[0].mxu0
        %v2815 = vadd.f32 0.0, %v2814
        %v2816 = vpop.f32.mrb[0].mxu0
        %v2817 = vpop.f32.mrb[0].mxu0
        %v2818 = vadd.f32 0.0, %v2817
        %v2819 = vpop.f32.mrb[0].mxu0
        %2820 = vmatprep.mubr.bf16.mxu0 0
        %2821 = vmatmul.mubr.bf16.gmra.mrb[0].mxu0 %v2652
        %v2822 = vpop.f32.mrb[0].mxu0
        %v2823 = vadd.f32 0.0, %v2822
        %v2824 = vpop.f32.mrb[0].mxu0
        %v2825 = vpop.f32.mrb[0].mxu0
        %v2826 = vadd.f32 0.0, %v2825
        %v2827 = vpop.f32.mrb[0].mxu0
        %2828 = vmatprep.mubr.bf16.mxu0 0
        %2829 = vmatmul.mubr.bf16.gmra.mrb[0].mxu0 %v2653
        %v2830 = vpop.f32.mrb[0].mxu0
        %v2831 = vadd.f32 0.0, %v2830
        %v2832 = vpop.f32.mrb[0].mxu0
        %v2833 = vpop.f32.mrb[0].mxu0
        %v2834 = vadd.f32 0.0, %v2833
        %v2835 = vpop.f32.mrb[0].mxu0
        %2836 = vmatprep.mubr.bf16.mxu0 0
        %2837 = vmatmul.mubr.bf16.gmra.mrb[0].mxu0 %v2654
        %v2838 = vpop.f32.mrb[0].mxu0
        %v2839 = vadd.f32 0.0, %v2838
        %v2840 = vpop.f32.mrb[0].mxu0
        %v2841 = vpop.f32.mrb[0].mxu0
        %v2842 = vadd.f32 0.0, %v2841
        %v2843 = vpop.f32.mrb[0].mxu0
        %2844 = vmatprep.mubr.bf16.mxu0 0
        %2845 = vmatmul.mubr.bf16.gmra.mrb[0].mxu0 %v2655
        %v2846 = vpop.f32.mrb[0].mxu0
        %v2847 = vadd.f32 0.0, %v2846
        %v2848 = vpop.f32.mrb[0].mxu0
        %v2849 = vpop.f32.mrb[0].mxu0
        %v2850 = vadd.f32 0.0, %v2849
        %v2851 = vpop.f32.mrb[0].mxu0
        %2852 = vmatprep.mubr.bf16.mxu0 0
        %2853 = vmatmul.mubr.bf16.gmra.mrb[0].mxu0 %v2656
        %v2854 = vpop.f32.mrb[0].mxu0
        %v2855 = vadd.f32 0.0, %v2854
        %v2856 = vpop.f32.mrb[0].mxu0
        %v2857 = vpop.f32.mrb[0].mxu0
        %v2858 = vadd.f32 0.0, %v2857
        %v2859 = vpop.f32.mrb[0].mxu0
        %2860 = vmatprep.mubr.bf16.mxu0 0
        %2861 = vmatmul.mubr.bf16.gmra.mrb[0].mxu0 %v2657
        %v2862 = vpop.f32.mrb[0].mxu0
        %v2863 = vadd.f32 0.0, %v2862
        %v2864 = vpop.f32.mrb[0].mxu0
        %v2865 = vpop.f32.mrb[0].mxu0
        %v2866 = vadd.f32 0.0, %v2865
        %v2867 = vpop.f32.mrb[0].mxu0
        %2868 = vmatprep.mubr.bf16.mxu0 0
        %2869 = vmatmul.mubr.bf16.gmra.mrb[0].mxu0 %v2658
        %v2870 = vpop.f32.mrb[0].mxu0
        %v2871 = vadd.f32 0.0, %v2870
        %v2872 = vpop.f32.mrb[0].mxu0
        %v2873 = vpop.f32.mrb[0].mxu0
        %v2874 = vadd.f32 0.0, %v2873
        %v2875 = vpop.f32.mrb[0].mxu0
        %2876 = vmatprep.mubr.bf16.mxu0 0
        %2877 = vmatmul.mubr.bf16.gmra.mrb[0].mxu0 %v2659
        %v2878 = vpop.f32.mrb[0].mxu0
        %v2879 = vadd.f32 0.0, %v2878
        %v2880 = vpop.f32.mrb[0].mxu0
        %v2881 = vpop.f32.mrb[0].mxu0
        %v2882 = vadd.f32 0.0, %v2881
        %v2883 = vpop.f32.mrb[0].mxu0
        %2884 = vdwg.mxu0
        %v2901 = vunpack.c.l.b16 %v2628
        %v2902 = vunpack.c.l.b16 %v2629
        %v2903 = vunpack.c.l.b16 %v2630
        %v2904 = vunpack.c.l.b16 %v2631
        %v2905 = vunpack.c.l.b16 %v2632
        %v2906 = vunpack.c.l.b16 %v2633
        %v2907 = vunpack.c.l.b16 %v2634
        %v2908 = vunpack.c.l.b16 %v2635
        %v2909 = vunpack.c.l.b16 %v2636
        %v2910 = vunpack.c.l.b16 %v2637
        %v2911 = vunpack.c.l.b16 %v2638
        %v2912 = vunpack.c.l.b16 %v2639
        %v2913 = vunpack.c.l.b16 %v2640
        %v2914 = vunpack.c.l.b16 %v2641
        %v2915 = vunpack.c.l.b16 %v2642
        %v2916 = vunpack.c.l.b16 %v2643
        %v2917 = vpack.c.b16 %v2902, %v2901
        %v2918 = vpack.c.b16 %v2904, %v2903
        %v2919 = vpack.c.b16 %v2906, %v2905
        %v2920 = vpack.c.b16 %v2908, %v2907
        %v2921 = vpack.c.b16 %v2910, %v2909
        %v2922 = vpack.c.b16 %v2912, %v2911
        %v2923 = vpack.c.b16 %v2914, %v2913
        %v2924 = vpack.c.b16 %v2916, %v2915
        %2933 = vmatprep.subr.bf16.mxu0 0
        %2934 = vmatpush1.bf16.msra.mxu0 %v2917
        %2935 = vmatprep.subr.bf16.mxu0 0
        %2936 = vmatpush1.bf16.msra.mxu0 %v2918
        %2937 = vmatprep.subr.bf16.mxu0 0
        %2938 = vmatpush1.bf16.msra.mxu0 %v2919
        %2939 = vmatprep.subr.bf16.mxu0 0
        %2940 = vmatpush1.bf16.msra.mxu0 %v2920
        %2941 = vmatprep.subr.bf16.mxu0 0
        %2942 = vmatpush1.bf16.msra.mxu0 %v2921
        %2943 = vmatprep.subr.bf16.mxu0 0
        %2944 = vmatpush1.bf16.msra.mxu0 %v2922
        %2945 = vmatprep.subr.bf16.mxu0 0
        %2946 = vmatpush1.bf16.msra.mxu0 %v2923
        %2947 = vmatprep.subr.bf16.mxu0 0
        %2948 = vmatpush1.bf16.msra.mxu0 %v2924
        %2949 = vmatprep.subr.bf16.mxu0 0
        %2950 = vmatpush1.bf16.msra.mxu0 0
        %2951 = vmatprep.subr.bf16.mxu0 0
        %2952 = vmatpush1.bf16.msra.mxu0 0
        %2953 = vmatprep.subr.bf16.mxu0 0
        %2954 = vmatpush1.bf16.msra.mxu0 0
        %2955 = vmatprep.subr.bf16.mxu0 0
        %2956 = vmatpush1.bf16.msra.mxu0 0
        %2957 = vmatprep.subr.bf16.mxu0 0
        %2958 = vmatpush1.bf16.msra.mxu0 0
        %2959 = vmatprep.subr.bf16.mxu0 0
        %2960 = vmatpush1.bf16.msra.mxu0 0
        %2961 = vmatprep.subr.bf16.mxu0 0
        %2962 = vmatpush1.bf16.msra.mxu0 0
        %2963 = vmatprep.subr.bf16.mxu0 0
        %2964 = vmatpush1.bf16.msra.mxu0 0
        %2965 = vmatprep.mubr.bf16.mxu0 0
        %2966 = vmatmul.mubr.bf16.gmra.mrb[0].mxu0 %v1235
        %v2967 = vpop.f32.mrb[0].mxu0
        %v2968 = vadd.f32 %v2759, %v2967
        %v2969 = vpop.f32.mrb[0].mxu0
        %v2970 = vpop.f32.mrb[0].mxu0
        %v2971 = vadd.f32 %v2762, %v2970
        %v2972 = vpop.f32.mrb[0].mxu0
        %2973 = vmatprep.mubr.bf16.mxu0 0
        %2974 = vmatmul.mubr.bf16.gmra.mrb[0].mxu0 %v1236
        %v2975 = vpop.f32.mrb[0].mxu0
        %v2976 = vadd.f32 %v2767, %v2975
        %v2977 = vpop.f32.mrb[0].mxu0
        %v2978 = vpop.f32.mrb[0].mxu0
        %v2979 = vadd.f32 %v2770, %v2978
        %v2980 = vpop.f32.mrb[0].mxu0
        %2981 = vmatprep.mubr.bf16.mxu0 0
        %2982 = vmatmul.mubr.bf16.gmra.mrb[0].mxu0 %v1237
        %v2983 = vpop.f32.mrb[0].mxu0
        %v2984 = vadd.f32 %v2775, %v2983
        %v2985 = vpop.f32.mrb[0].mxu0
        %v2986 = vpop.f32.mrb[0].mxu0
        %v2987 = vadd.f32 %v2778, %v2986
        %v2988 = vpop.f32.mrb[0].mxu0
        %2989 = vmatprep.mubr.bf16.mxu0 0
        %2990 = vmatmul.mubr.bf16.gmra.mrb[0].mxu0 %v1238
        %v2991 = vpop.f32.mrb[0].mxu0
        %v2992 = vadd.f32 %v2783, %v2991
        %v2993 = vpop.f32.mrb[0].mxu0
        %v2994 = vpop.f32.mrb[0].mxu0
        %v2995 = vadd.f32 %v2786, %v2994
        %v2996 = vpop.f32.mrb[0].mxu0
        %2997 = vmatprep.mubr.bf16.mxu0 0
        %2998 = vmatmul.mubr.bf16.gmra.mrb[0].mxu0 %v1239
        %v2999 = vpop.f32.mrb[0].mxu0
        %v3000 = vadd.f32 %v2791, %v2999
        %v3001 = vpop.f32.mrb[0].mxu0
        %v3002 = vpop.f32.mrb[0].mxu0
        %v3003 = vadd.f32 %v2794, %v3002
        %v3004 = vpop.f32.mrb[0].mxu0
        %3005 = vmatprep.mubr.bf16.mxu0 0
        %3006 = vmatmul.mubr.bf16.gmra.mrb[0].mxu0 %v1240
        %v3007 = vpop.f32.mrb[0].mxu0
        %v3008 = vadd.f32 %v2799, %v3007
        %v3009 = vpop.f32.mrb[0].mxu0
        %v3010 = vpop.f32.mrb[0].mxu0
        %v3011 = vadd.f32 %v2802, %v3010
        %v3012 = vpop.f32.mrb[0].mxu0
        %3013 = vmatprep.mubr.bf16.mxu0 0
        %3014 = vmatmul.mubr.bf16.gmra.mrb[0].mxu0 %v1241
        %v3015 = vpop.f32.mrb[0].mxu0
        %v3016 = vadd.f32 %v2807, %v3015
        %v3017 = vpop.f32.mrb[0].mxu0
        %v3018 = vpop.f32.mrb[0].mxu0
        %v3019 = vadd.f32 %v2810, %v3018
        %v3020 = vpop.f32.mrb[0].mxu0
        %3021 = vmatprep.mubr.bf16.mxu0 0
        %3022 = vmatmul.mubr.bf16.gmra.mrb[0].mxu0 %v1242
        %v3023 = vpop.f32.mrb[0].mxu0
        %v3024 = vadd.f32 %v2815, %v3023
        %v3025 = vpop.f32.mrb[0].mxu0
        %v3026 = vpop.f32.mrb[0].mxu0
        %v3027 = vadd.f32 %v2818, %v3026
        %v3028 = vpop.f32.mrb[0].mxu0
        %3029 = vmatprep.mubr.bf16.mxu0 0
        %3030 = vmatmul.mubr.bf16.gmra.mrb[0].mxu0 %v1243
        %v3031 = vpop.f32.mrb[0].mxu0
        %v3032 = vadd.f32 %v2823, %v3031
        %v3033 = vpop.f32.mrb[0].mxu0
        %v3034 = vpop.f32.mrb[0].mxu0
        %v3035 = vadd.f32 %v2826, %v3034
        %v3036 = vpop.f32.mrb[0].mxu0
        %3037 = vmatprep.mubr.bf16.mxu0 0
        %3038 = vmatmul.mubr.bf16.gmra.mrb[0].mxu0 %v1244
        %v3039 = vpop.f32.mrb[0].mxu0
        %v3040 = vadd.f32 %v2831, %v3039
        %v3041 = vpop.f32.mrb[0].mxu0
        %v3042 = vpop.f32.mrb[0].mxu0
        %v3043 = vadd.f32 %v2834, %v3042
        %v3044 = vpop.f32.mrb[0].mxu0
        %3045 = vmatprep.mubr.bf16.mxu0 0
        %3046 = vmatmul.mubr.bf16.gmra.mrb[0].mxu0 %v1245
        %v3047 = vpop.f32.mrb[0].mxu0
        %v3048 = vadd.f32 %v2839, %v3047
        %v3049 = vpop.f32.mrb[0].mxu0
        %v3050 = vpop.f32.mrb[0].mxu0
        %v3051 = vadd.f32 %v2842, %v3050
        %v3052 = vpop.f32.mrb[0].mxu0
        %3053 = vmatprep.mubr.bf16.mxu0 0
        %3054 = vmatmul.mubr.bf16.gmra.mrb[0].mxu0 %v1246
        %v3055 = vpop.f32.mrb[0].mxu0
        %v3056 = vadd.f32 %v2847, %v3055
        %v3057 = vpop.f32.mrb[0].mxu0
        %v3058 = vpop.f32.mrb[0].mxu0
        %v3059 = vadd.f32 %v2850, %v3058
        %v3060 = vpop.f32.mrb[0].mxu0
        %3061 = vmatprep.mubr.bf16.mxu0 0
        %3062 = vmatmul.mubr.bf16.gmra.mrb[0].mxu0 %v1247
        %v3063 = vpop.f32.mrb[0].mxu0
        %v3064 = vadd.f32 %v2855, %v3063
        %v3065 = vpop.f32.mrb[0].mxu0
        %v3066 = vpop.f32.mrb[0].mxu0
        %v3067 = vadd.f32 %v2858, %v3066
        %v3068 = vpop.f32.mrb[0].mxu0
        %3069 = vmatprep.mubr.bf16.mxu0 0
        %3070 = vmatmul.mubr.bf16.gmra.mrb[0].mxu0 %v1248
        %v3071 = vpop.f32.mrb[0].mxu0
        %v3072 = vadd.f32 %v2863, %v3071
        %v3073 = vpop.f32.mrb[0].mxu0
        %v3074 = vpop.f32.mrb[0].mxu0
        %v3075 = vadd.f32 %v2866, %v3074
        %v3076 = vpop.f32.mrb[0].mxu0
        %3077 = vmatprep.mubr.bf16.mxu0 0
        %3078 = vmatmul.mubr.bf16.gmra.mrb[0].mxu0 %v1249
        %v3079 = vpop.f32.mrb[0].mxu0
        %v3080 = vadd.f32 %v2871, %v3079
        %v3081 = vpop.f32.mrb[0].mxu0
        %v3082 = vpop.f32.mrb[0].mxu0
        %v3083 = vadd.f32 %v2874, %v3082
        %v3084 = vpop.f32.mrb[0].mxu0
        %3085 = vmatprep.mubr.bf16.mxu0 0
        %3086 = vmatmul.mubr.bf16.gmra.mrb[0].mxu0 %v1250
        %v3087 = vpop.f32.mrb[0].mxu0
        %v3088 = vadd.f32 %v2879, %v3087
        %v3089 = vpop.f32.mrb[0].mxu0
        %v3090 = vpop.f32.mrb[0].mxu0
        %v3091 = vadd.f32 %v2882, %v3090
        %v3092 = vpop.f32.mrb[0].mxu0
        %3093 = vdwg.mxu0
        %v3094 = vld [vmem:[#allocation20] sm:$0x1]
        %v3096 = vlaneseq
        %v3097 = vshrl.u32 %v3096, 7
        %v3098 = vsub.s32 0, %v3097
        %v3099 = vrot.slane %v3094, %v3098
        %v3101 = vadd.f32 %v2968, %v3099
        %v3102 = vadd.f32 %v2971, %v3099
        %v3103 = vadd.f32 %v2976, %v3099
        %v3104 = vadd.f32 %v2979, %v3099
        %v3105 = vadd.f32 %v2984, %v3099
        %v3106 = vadd.f32 %v2987, %v3099
        %v3107 = vadd.f32 %v2992, %v3099
        %v3108 = vadd.f32 %v2995, %v3099
        %v3109 = vadd.f32 %v3000, %v3099
        %v3110 = vadd.f32 %v3003, %v3099
        %v3111 = vadd.f32 %v3008, %v3099
        %v3112 = vadd.f32 %v3011, %v3099
        %v3113 = vadd.f32 %v3016, %v3099
        %v3114 = vadd.f32 %v3019, %v3099
        %v3115 = vadd.f32 %v3024, %v3099
        %v3116 = vadd.f32 %v3027, %v3099
        %v3117 = vadd.f32 %v3032, %v3099
        %v3118 = vadd.f32 %v3035, %v3099
        %v3119 = vadd.f32 %v3040, %v3099
        %v3120 = vadd.f32 %v3043, %v3099
        %v3121 = vadd.f32 %v3048, %v3099
        %v3122 = vadd.f32 %v3051, %v3099
        %v3123 = vadd.f32 %v3056, %v3099
        %v3124 = vadd.f32 %v3059, %v3099
        %v3125 = vadd.f32 %v3064, %v3099
        %v3126 = vadd.f32 %v3067, %v3099
        %v3127 = vadd.f32 %v3072, %v3099
        %v3128 = vadd.f32 %v3075, %v3099
        %v3129 = vadd.f32 %v3080, %v3099
        %v3130 = vadd.f32 %v3083, %v3099
        %v3131 = vadd.f32 %v3088, %v3099
        %v3132 = vadd.f32 %v3091, %v3099
        %v3133 = vmax.f32 %v3101, 0.0
        %v3134 = vmax.f32 %v3102, 0.0
        %v3135 = vmax.f32 %v3103, 0.0
        %v3136 = vmax.f32 %v3104, 0.0
        %v3137 = vmax.f32 %v3105, 0.0
        %v3138 = vmax.f32 %v3106, 0.0
        %v3139 = vmax.f32 %v3107, 0.0
        %v3140 = vmax.f32 %v3108, 0.0
        %v3141 = vmax.f32 %v3109, 0.0
        %v3142 = vmax.f32 %v3110, 0.0
        %v3143 = vmax.f32 %v3111, 0.0
        %v3144 = vmax.f32 %v3112, 0.0
        %v3145 = vmax.f32 %v3113, 0.0
        %v3146 = vmax.f32 %v3114, 0.0
        %v3147 = vmax.f32 %v3115, 0.0
        %v3148 = vmax.f32 %v3116, 0.0
        %v3149 = vmax.f32 %v3117, 0.0
        %v3150 = vmax.f32 %v3118, 0.0
        %v3151 = vmax.f32 %v3119, 0.0
        %v3152 = vmax.f32 %v3120, 0.0
        %v3153 = vmax.f32 %v3121, 0.0
        %v3154 = vmax.f32 %v3122, 0.0
        %v3155 = vmax.f32 %v3123, 0.0
        %v3156 = vmax.f32 %v3124, 0.0
        %v3157 = vmax.f32 %v3125, 0.0
        %v3158 = vmax.f32 %v3126, 0.0
        %v3159 = vmax.f32 %v3127, 0.0
        %v3160 = vmax.f32 %v3128, 0.0
        %v3161 = vmax.f32 %v3129, 0.0
        %v3162 = vmax.f32 %v3130, 0.0
        %v3163 = vmax.f32 %v3131, 0.0
        %v3164 = vmax.f32 %v3132, 0.0
        %v3165 = vpack.c.bf16 %v3134, %v3133
        %v3166 = vpack.c.bf16 %v3136, %v3135
        %v3167 = vpack.c.bf16 %v3138, %v3137
        %v3168 = vpack.c.bf16 %v3140, %v3139
        %v3169 = vpack.c.bf16 %v3142, %v3141
        %v3170 = vpack.c.bf16 %v3144, %v3143
        %v3171 = vpack.c.bf16 %v3146, %v3145
        %v3172 = vpack.c.bf16 %v3148, %v3147
        %v3173 = vpack.c.bf16 %v3150, %v3149
        %v3174 = vpack.c.bf16 %v3152, %v3151
        %v3175 = vpack.c.bf16 %v3154, %v3153
        %v3176 = vpack.c.bf16 %v3156, %v3155
        %v3177 = vpack.c.bf16 %v3158, %v3157
        %v3178 = vpack.c.bf16 %v3160, %v3159
        %v3179 = vpack.c.bf16 %v3162, %v3161
        %v3180 = vpack.c.bf16 %v3164, %v3163
        %v3181 = vld [vmem:[#allocation22] sm:$0xf]
        %v3182 = vld [vmem:[#allocation22 + $0x4] sm:$0xf]
        %v3183 = vld [vmem:[#allocation22 + $0x8] sm:$0xf]
        %v3184 = vld [vmem:[#allocation22 + $0xc] sm:$0xf]
        %v3185 = vld [vmem:[#allocation22 + $0x10] sm:$0xf]
        %v3186 = vld [vmem:[#allocation22 + $0x14] sm:$0xf]
        %v3187 = vld [vmem:[#allocation22 + $0x18] sm:$0xf]
        %v3188 = vld [vmem:[#allocation22 + $0x1c] sm:$0xf]
        %v3189 = vld [vmem:[#allocation22 + $0x20] sm:$0xf]
        %v3190 = vld [vmem:[#allocation22 + $0x24] sm:$0xf]
        %v3191 = vld [vmem:[#allocation22 + $0x28] sm:$0xf]
        %v3192 = vld [vmem:[#allocation22 + $0x2c] sm:$0xf]
        %v3193 = vld [vmem:[#allocation22 + $0x30] sm:$0xf]
        %v3194 = vld [vmem:[#allocation22 + $0x34] sm:$0xf]
        %v3195 = vld [vmem:[#allocation22 + $0x38] sm:$0xf]
        %v3196 = vld [vmem:[#allocation22 + $0x3c] sm:$0xf]
        %v3197 = vld [vmem:[#allocation23] sm:$0x1]
        %v3199 = vlaneseq
        %v3200 = vshrl.u32 %v3199, 7
        %v3201 = vsub.s32 0, %v3200
        %v3202 = vrot.slane %v3197, %v3201
        %v3220 = vunpack.c.l.b16 %v3181
        %v3221 = vunpack.c.l.b16 %v3182
        %v3222 = vunpack.c.l.b16 %v3183
        %v3223 = vunpack.c.l.b16 %v3184
        %v3224 = vunpack.c.l.b16 %v3185
        %v3225 = vunpack.c.l.b16 %v3186
        %v3226 = vunpack.c.l.b16 %v3187
        %v3227 = vunpack.c.l.b16 %v3188
        %v3228 = vunpack.c.l.b16 %v3189
        %v3229 = vunpack.c.l.b16 %v3190
        %v3230 = vunpack.c.l.b16 %v3191
        %v3231 = vunpack.c.l.b16 %v3192
        %v3232 = vunpack.c.l.b16 %v3193
        %v3233 = vunpack.c.l.b16 %v3194
        %v3234 = vunpack.c.l.b16 %v3195
        %v3235 = vunpack.c.l.b16 %v3196
        %v3236 = vpack.c.b16 %v3221, %v3220
        %v3237 = vpack.c.b16 %v3223, %v3222
        %v3238 = vpack.c.b16 %v3225, %v3224
        %v3239 = vpack.c.b16 %v3227, %v3226
        %v3240 = vpack.c.b16 %v3229, %v3228
        %v3241 = vpack.c.b16 %v3231, %v3230
        %v3242 = vpack.c.b16 %v3233, %v3232
        %v3243 = vpack.c.b16 %v3235, %v3234
        %3252 = vmatprep.subr.bf16.mxu0 0
        %3253 = vmatpush1.bf16.msra.mxu0 %v3236
        %3254 = vmatprep.subr.bf16.mxu0 0
        %3255 = vmatpush1.bf16.msra.mxu0 %v3237
        %3256 = vmatprep.subr.bf16.mxu0 0
        %3257 = vmatpush1.bf16.msra.mxu0 %v3238
        %3258 = vmatprep.subr.bf16.mxu0 0
        %3259 = vmatpush1.bf16.msra.mxu0 %v3239
        %3260 = vmatprep.subr.bf16.mxu0 0
        %3261 = vmatpush1.bf16.msra.mxu0 %v3240
        %3262 = vmatprep.subr.bf16.mxu0 0
        %3263 = vmatpush1.bf16.msra.mxu0 %v3241
        %3264 = vmatprep.subr.bf16.mxu0 0
        %3265 = vmatpush1.bf16.msra.mxu0 %v3242
        %3266 = vmatprep.subr.bf16.mxu0 0
        %3267 = vmatpush1.bf16.msra.mxu0 %v3243
        %3268 = vmatprep.subr.bf16.mxu0 0
        %3269 = vmatpush1.bf16.msra.mxu0 0
        %3270 = vmatprep.subr.bf16.mxu0 0
        %3271 = vmatpush1.bf16.msra.mxu0 0
        %3272 = vmatprep.subr.bf16.mxu0 0
        %3273 = vmatpush1.bf16.msra.mxu0 0
        %3274 = vmatprep.subr.bf16.mxu0 0
        %3275 = vmatpush1.bf16.msra.mxu0 0
        %3276 = vmatprep.subr.bf16.mxu0 0
        %3277 = vmatpush1.bf16.msra.mxu0 0
        %3278 = vmatprep.subr.bf16.mxu0 0
        %3279 = vmatpush1.bf16.msra.mxu0 0
        %3280 = vmatprep.subr.bf16.mxu0 0
        %3281 = vmatpush1.bf16.msra.mxu0 0
        %3282 = vmatprep.subr.bf16.mxu0 0
        %3283 = vmatpush1.bf16.msra.mxu0 0
        %3284 = vmatprep.mubr.bf16.mxu0 0
        %3285 = vmatmul.mubr.bf16.gmra.mrb[0].mxu0 %v3165
        %v3286 = vpop.f32.mrb[0].mxu0
        %v3287 = vadd.f32 %v3202, %v3286
        %v3288 = vpop.f32.mrb[0].mxu0
        %v3289 = vpop.f32.mrb[0].mxu0
        %v3290 = vadd.f32 %v3202, %v3289
        %v3291 = vpop.f32.mrb[0].mxu0
        %3292 = vmatprep.mubr.bf16.mxu0 0
        %3293 = vmatmul.mubr.bf16.gmra.mrb[0].mxu0 %v3166
        %v3294 = vpop.f32.mrb[0].mxu0
        %v3295 = vadd.f32 %v3202, %v3294
        %v3296 = vpop.f32.mrb[0].mxu0
        %v3297 = vpop.f32.mrb[0].mxu0
        %v3298 = vadd.f32 %v3202, %v3297
        %v3299 = vpop.f32.mrb[0].mxu0
        %3300 = vmatprep.mubr.bf16.mxu0 0
        %3301 = vmatmul.mubr.bf16.gmra.mrb[0].mxu0 %v3167
        %v3302 = vpop.f32.mrb[0].mxu0
        %v3303 = vadd.f32 %v3202, %v3302
        %v3304 = vpop.f32.mrb[0].mxu0
        %v3305 = vpop.f32.mrb[0].mxu0
        %v3306 = vadd.f32 %v3202, %v3305
        %v3307 = vpop.f32.mrb[0].mxu0
        %3308 = vmatprep.mubr.bf16.mxu0 0
        %3309 = vmatmul.mubr.bf16.gmra.mrb[0].mxu0 %v3168
        %v3310 = vpop.f32.mrb[0].mxu0
        %v3311 = vadd.f32 %v3202, %v3310
        %v3312 = vpop.f32.mrb[0].mxu0
        %v3313 = vpop.f32.mrb[0].mxu0
        %v3314 = vadd.f32 %v3202, %v3313
        %v3315 = vpop.f32.mrb[0].mxu0
        %3316 = vmatprep.mubr.bf16.mxu0 0
        %3317 = vmatmul.mubr.bf16.gmra.mrb[0].mxu0 %v3169
        %v3318 = vpop.f32.mrb[0].mxu0
        %v3319 = vadd.f32 %v3202, %v3318
        %v3320 = vpop.f32.mrb[0].mxu0
        %v3321 = vpop.f32.mrb[0].mxu0
        %v3322 = vadd.f32 %v3202, %v3321
        %v3323 = vpop.f32.mrb[0].mxu0
        %3324 = vmatprep.mubr.bf16.mxu0 0
        %3325 = vmatmul.mubr.bf16.gmra.mrb[0].mxu0 %v3170
        %v3326 = vpop.f32.mrb[0].mxu0
        %v3327 = vadd.f32 %v3202, %v3326
        %v3328 = vpop.f32.mrb[0].mxu0
        %v3329 = vpop.f32.mrb[0].mxu0
        %v3330 = vadd.f32 %v3202, %v3329
        %v3331 = vpop.f32.mrb[0].mxu0
        %3332 = vmatprep.mubr.bf16.mxu0 0
        %3333 = vmatmul.mubr.bf16.gmra.mrb[0].mxu0 %v3171
        %v3334 = vpop.f32.mrb[0].mxu0
        %v3335 = vadd.f32 %v3202, %v3334
        %v3336 = vpop.f32.mrb[0].mxu0
        %v3337 = vpop.f32.mrb[0].mxu0
        %v3338 = vadd.f32 %v3202, %v3337
        %v3339 = vpop.f32.mrb[0].mxu0
        %3340 = vmatprep.mubr.bf16.mxu0 0
        %3341 = vmatmul.mubr.bf16.gmra.mrb[0].mxu0 %v3172
        %v3342 = vpop.f32.mrb[0].mxu0
        %v3343 = vadd.f32 %v3202, %v3342
        %v3344 = vpop.f32.mrb[0].mxu0
        %v3345 = vpop.f32.mrb[0].mxu0
        %v3346 = vadd.f32 %v3202, %v3345
        %v3347 = vpop.f32.mrb[0].mxu0
        %3348 = vmatprep.mubr.bf16.mxu0 0
        %3349 = vmatmul.mubr.bf16.gmra.mrb[0].mxu0 %v3173
        %v3350 = vpop.f32.mrb[0].mxu0
        %v3351 = vadd.f32 %v3202, %v3350
        %v3352 = vpop.f32.mrb[0].mxu0
        %v3353 = vpop.f32.mrb[0].mxu0
        %v3354 = vadd.f32 %v3202, %v3353
        %v3355 = vpop.f32.mrb[0].mxu0
        %3356 = vmatprep.mubr.bf16.mxu0 0
        %3357 = vmatmul.mubr.bf16.gmra.mrb[0].mxu0 %v3174
        %v3358 = vpop.f32.mrb[0].mxu0
        %v3359 = vadd.f32 %v3202, %v3358
        %v3360 = vpop.f32.mrb[0].mxu0
        %v3361 = vpop.f32.mrb[0].mxu0
        %v3362 = vadd.f32 %v3202, %v3361
        %v3363 = vpop.f32.mrb[0].mxu0
        %3364 = vmatprep.mubr.bf16.mxu0 0
        %3365 = vmatmul.mubr.bf16.gmra.mrb[0].mxu0 %v3175
        %v3366 = vpop.f32.mrb[0].mxu0
        %v3367 = vadd.f32 %v3202, %v3366
        %v3368 = vpop.f32.mrb[0].mxu0
        %v3369 = vpop.f32.mrb[0].mxu0
        %v3370 = vadd.f32 %v3202, %v3369
        %v3371 = vpop.f32.mrb[0].mxu0
        %3372 = vmatprep.mubr.bf16.mxu0 0
        %3373 = vmatmul.mubr.bf16.gmra.mrb[0].mxu0 %v3176
        %v3374 = vpop.f32.mrb[0].mxu0
        %v3375 = vadd.f32 %v3202, %v3374
        %v3376 = vpop.f32.mrb[0].mxu0
        %v3377 = vpop.f32.mrb[0].mxu0
        %v3378 = vadd.f32 %v3202, %v3377
        %v3379 = vpop.f32.mrb[0].mxu0
        %3380 = vmatprep.mubr.bf16.mxu0 0
        %3381 = vmatmul.mubr.bf16.gmra.mrb[0].mxu0 %v3177
        %v3382 = vpop.f32.mrb[0].mxu0
        %v3383 = vadd.f32 %v3202, %v3382
        %v3384 = vpop.f32.mrb[0].mxu0
        %v3385 = vpop.f32.mrb[0].mxu0
        %v3386 = vadd.f32 %v3202, %v3385
        %v3387 = vpop.f32.mrb[0].mxu0
        %3388 = vmatprep.mubr.bf16.mxu0 0
        %3389 = vmatmul.mubr.bf16.gmra.mrb[0].mxu0 %v3178
        %v3390 = vpop.f32.mrb[0].mxu0
        %v3391 = vadd.f32 %v3202, %v3390
        %v3392 = vpop.f32.mrb[0].mxu0
        %v3393 = vpop.f32.mrb[0].mxu0
        %v3394 = vadd.f32 %v3202, %v3393
        %v3395 = vpop.f32.mrb[0].mxu0
        %3396 = vmatprep.mubr.bf16.mxu0 0
        %3397 = vmatmul.mubr.bf16.gmra.mrb[0].mxu0 %v3179
        %v3398 = vpop.f32.mrb[0].mxu0
        %v3399 = vadd.f32 %v3202, %v3398
        %v3400 = vpop.f32.mrb[0].mxu0
        %v3401 = vpop.f32.mrb[0].mxu0
        %v3402 = vadd.f32 %v3202, %v3401
        %v3403 = vpop.f32.mrb[0].mxu0
        %3404 = vmatprep.mubr.bf16.mxu0 0
        %3405 = vmatmul.mubr.bf16.gmra.mrb[0].mxu0 %v3180
        %v3406 = vpop.f32.mrb[0].mxu0
        %v3407 = vadd.f32 %v3202, %v3406
        %v3408 = vpop.f32.mrb[0].mxu0
        %v3409 = vpop.f32.mrb[0].mxu0
        %v3410 = vadd.f32 %v3202, %v3409
        %v3411 = vpop.f32.mrb[0].mxu0
        %3412 = vdwg.mxu0
        %v3413 = vmax.f32 %v3287, 0.0
        %v3414 = vmax.f32 %v3290, 0.0
        %v3415 = vmax.f32 %v3295, 0.0
        %v3416 = vmax.f32 %v3298, 0.0
        %v3417 = vmax.f32 %v3303, 0.0
        %v3418 = vmax.f32 %v3306, 0.0
        %v3419 = vmax.f32 %v3311, 0.0
        %v3420 = vmax.f32 %v3314, 0.0
        %v3421 = vmax.f32 %v3319, 0.0
        %v3422 = vmax.f32 %v3322, 0.0
        %v3423 = vmax.f32 %v3327, 0.0
        %v3424 = vmax.f32 %v3330, 0.0
        %v3425 = vmax.f32 %v3335, 0.0
        %v3426 = vmax.f32 %v3338, 0.0
        %v3427 = vmax.f32 %v3343, 0.0
        %v3428 = vmax.f32 %v3346, 0.0
        %v3429 = vmax.f32 %v3351, 0.0
        %v3430 = vmax.f32 %v3354, 0.0
        %v3431 = vmax.f32 %v3359, 0.0
        %v3432 = vmax.f32 %v3362, 0.0
        %v3433 = vmax.f32 %v3367, 0.0
        %v3434 = vmax.f32 %v3370, 0.0
        %v3435 = vmax.f32 %v3375, 0.0
        %v3436 = vmax.f32 %v3378, 0.0
        %v3437 = vmax.f32 %v3383, 0.0
        %v3438 = vmax.f32 %v3386, 0.0
        %v3439 = vmax.f32 %v3391, 0.0
        %v3440 = vmax.f32 %v3394, 0.0
        %v3441 = vmax.f32 %v3399, 0.0
        %v3442 = vmax.f32 %v3402, 0.0
        %v3443 = vmax.f32 %v3407, 0.0
        %v3444 = vmax.f32 %v3410, 0.0
        %v3445 = vpack.c.bf16 %v3414, %v3413
        %v3446 = vpack.c.bf16 %v3416, %v3415
        %v3447 = vpack.c.bf16 %v3418, %v3417
        %v3448 = vpack.c.bf16 %v3420, %v3419
        %v3449 = vpack.c.bf16 %v3422, %v3421
        %v3450 = vpack.c.bf16 %v3424, %v3423
        %v3451 = vpack.c.bf16 %v3426, %v3425
        %v3452 = vpack.c.bf16 %v3428, %v3427
        %v3453 = vpack.c.bf16 %v3430, %v3429
        %v3454 = vpack.c.bf16 %v3432, %v3431
        %v3455 = vpack.c.bf16 %v3434, %v3433
        %v3456 = vpack.c.bf16 %v3436, %v3435
        %v3457 = vpack.c.bf16 %v3438, %v3437
        %v3458 = vpack.c.bf16 %v3440, %v3439
        %v3459 = vpack.c.bf16 %v3442, %v3441
        %v3460 = vpack.c.bf16 %v3444, %v3443
        %v3461 = vld [vmem:[%s17] sm:$0xf]
        %v3462 = vld [vmem:[%s17 + $0x4] sm:$0xf]
        %v3463 = vld [vmem:[%s17 + $0x8] sm:$0xf]
        %v3464 = vld [vmem:[%s17 + $0xc] sm:$0xf]
        %v3465 = vld [vmem:[%s17 + $0x10] sm:$0xf]
        %v3466 = vld [vmem:[%s17 + $0x14] sm:$0xf]
        %v3467 = vld [vmem:[%s17 + $0x18] sm:$0xf]
        %v3468 = vld [vmem:[%s17 + $0x1c] sm:$0xf]
        %v3469 = vld [vmem:[%s17 + $0x20] sm:$0xf]
        %v3470 = vld [vmem:[%s17 + $0x24] sm:$0xf]
        %v3471 = vld [vmem:[%s17 + $0x28] sm:$0xf]
        %v3472 = vld [vmem:[%s17 + $0x2c] sm:$0xf]
        %v3473 = vld [vmem:[%s17 + $0x30] sm:$0xf]
        %v3474 = vld [vmem:[%s17 + $0x34] sm:$0xf]
        %v3475 = vld [vmem:[%s17 + $0x38] sm:$0xf]
        %v3476 = vld [vmem:[%s17 + $0x3c] sm:$0xf]
        %v3477 = vld [vmem:[%s18] sm:$0x1]
        %v3479 = vlaneseq
        %v3480 = vshrl.u32 %v3479, 7
        %v3481 = vsub.s32 0, %v3480
        %v3482 = vrot.slane %v3477, %v3481
        %v3500 = vunpack.c.l.b16 %v3461
        %v3501 = vunpack.c.l.b16 %v3462
        %v3502 = vunpack.c.l.b16 %v3463
        %v3503 = vunpack.c.l.b16 %v3464
        %v3504 = vunpack.c.l.b16 %v3465
        %v3505 = vunpack.c.l.b16 %v3466
        %v3506 = vunpack.c.l.b16 %v3467
        %v3507 = vunpack.c.l.b16 %v3468
        %v3508 = vunpack.c.l.b16 %v3469
        %v3509 = vunpack.c.l.b16 %v3470
        %v3510 = vunpack.c.l.b16 %v3471
        %v3511 = vunpack.c.l.b16 %v3472
        %v3512 = vunpack.c.l.b16 %v3473
        %v3513 = vunpack.c.l.b16 %v3474
        %v3514 = vunpack.c.l.b16 %v3475
        %v3515 = vunpack.c.l.b16 %v3476
        %v3516 = vpack.c.b16 %v3501, %v3500
        %v3517 = vpack.c.b16 %v3503, %v3502
        %v3518 = vpack.c.b16 %v3505, %v3504
        %v3519 = vpack.c.b16 %v3507, %v3506
        %v3520 = vpack.c.b16 %v3509, %v3508
        %v3521 = vpack.c.b16 %v3511, %v3510
        %v3522 = vpack.c.b16 %v3513, %v3512
        %v3523 = vpack.c.b16 %v3515, %v3514
        %3532 = vmatprep.subr.bf16.mxu0 0
        %3533 = vmatpush1.bf16.msra.mxu0 %v3516
        %3534 = vmatprep.subr.bf16.mxu0 0
        %3535 = vmatpush1.bf16.msra.mxu0 %v3517
        %3536 = vmatprep.subr.bf16.mxu0 0
        %3537 = vmatpush1.bf16.msra.mxu0 %v3518
        %3538 = vmatprep.subr.bf16.mxu0 0
        %3539 = vmatpush1.bf16.msra.mxu0 %v3519
        %3540 = vmatprep.subr.bf16.mxu0 0
        %3541 = vmatpush1.bf16.msra.mxu0 %v3520
        %3542 = vmatprep.subr.bf16.mxu0 0
        %3543 = vmatpush1.bf16.msra.mxu0 %v3521
        %3544 = vmatprep.subr.bf16.mxu0 0
        %3545 = vmatpush1.bf16.msra.mxu0 %v3522
        %3546 = vmatprep.subr.bf16.mxu0 0
        %3547 = vmatpush1.bf16.msra.mxu0 %v3523
        %3548 = vmatprep.subr.bf16.mxu0 0
        %3549 = vmatpush1.bf16.msra.mxu0 0
        %3550 = vmatprep.subr.bf16.mxu0 0
        %3551 = vmatpush1.bf16.msra.mxu0 0
        %3552 = vmatprep.subr.bf16.mxu0 0
        %3553 = vmatpush1.bf16.msra.mxu0 0
        %3554 = vmatprep.subr.bf16.mxu0 0
        %3555 = vmatpush1.bf16.msra.mxu0 0
        %3556 = vmatprep.subr.bf16.mxu0 0
        %3557 = vmatpush1.bf16.msra.mxu0 0
        %3558 = vmatprep.subr.bf16.mxu0 0
        %3559 = vmatpush1.bf16.msra.mxu0 0
        %3560 = vmatprep.subr.bf16.mxu0 0
        %3561 = vmatpush1.bf16.msra.mxu0 0
        %3562 = vmatprep.subr.bf16.mxu0 0
        %3563 = vmatpush1.bf16.msra.mxu0 0
        %3564 = vmatprep.mubr.bf16.mxu0 0
        %3565 = vmatmul.mubr.bf16.gmra.mrb[0].mxu0 %v3445
        %v3566 = vpop.f32.mrb[0].mxu0
        %v3567 = vadd.f32 %v3482, %v3566
        %v3568 = vpop.f32.mrb[0].mxu0
        %v3569 = vpop.f32.mrb[0].mxu0
        %v3570 = vadd.f32 %v3482, %v3569
        %v3571 = vpop.f32.mrb[0].mxu0
        %3572 = vmatprep.mubr.bf16.mxu0 0
        %3573 = vmatmul.mubr.bf16.gmra.mrb[0].mxu0 %v3446
        %v3574 = vpop.f32.mrb[0].mxu0
        %v3575 = vadd.f32 %v3482, %v3574
        %v3576 = vpop.f32.mrb[0].mxu0
        %v3577 = vpop.f32.mrb[0].mxu0
        %v3578 = vadd.f32 %v3482, %v3577
        %v3579 = vpop.f32.mrb[0].mxu0
        %3580 = vmatprep.mubr.bf16.mxu0 0
        %3581 = vmatmul.mubr.bf16.gmra.mrb[0].mxu0 %v3447
        %v3582 = vpop.f32.mrb[0].mxu0
        %v3583 = vadd.f32 %v3482, %v3582
        %v3584 = vpop.f32.mrb[0].mxu0
        %v3585 = vpop.f32.mrb[0].mxu0
        %v3586 = vadd.f32 %v3482, %v3585
        %v3587 = vpop.f32.mrb[0].mxu0
        %3588 = vmatprep.mubr.bf16.mxu0 0
        %3589 = vmatmul.mubr.bf16.gmra.mrb[0].mxu0 %v3448
        %v3590 = vpop.f32.mrb[0].mxu0
        %v3591 = vadd.f32 %v3482, %v3590
        %v3592 = vpop.f32.mrb[0].mxu0
        %v3593 = vpop.f32.mrb[0].mxu0
        %v3594 = vadd.f32 %v3482, %v3593
        %v3595 = vpop.f32.mrb[0].mxu0
        %3596 = vmatprep.mubr.bf16.mxu0 0
        %3597 = vmatmul.mubr.bf16.gmra.mrb[0].mxu0 %v3449
        %v3598 = vpop.f32.mrb[0].mxu0
        %v3599 = vadd.f32 %v3482, %v3598
        %v3600 = vpop.f32.mrb[0].mxu0
        %v3601 = vpop.f32.mrb[0].mxu0
        %v3602 = vadd.f32 %v3482, %v3601
        %v3603 = vpop.f32.mrb[0].mxu0
        %3604 = vmatprep.mubr.bf16.mxu0 0
        %3605 = vmatmul.mubr.bf16.gmra.mrb[0].mxu0 %v3450
        %v3606 = vpop.f32.mrb[0].mxu0
        %v3607 = vadd.f32 %v3482, %v3606
        %v3608 = vpop.f32.mrb[0].mxu0
        %v3609 = vpop.f32.mrb[0].mxu0
        %v3610 = vadd.f32 %v3482, %v3609
        %v3611 = vpop.f32.mrb[0].mxu0
        %3612 = vmatprep.mubr.bf16.mxu0 0
        %3613 = vmatmul.mubr.bf16.gmra.mrb[0].mxu0 %v3451
        %v3614 = vpop.f32.mrb[0].mxu0
        %v3615 = vadd.f32 %v3482, %v3614
        %v3616 = vpop.f32.mrb[0].mxu0
        %v3617 = vpop.f32.mrb[0].mxu0
        %v3618 = vadd.f32 %v3482, %v3617
        %v3619 = vpop.f32.mrb[0].mxu0
        %3620 = vmatprep.mubr.bf16.mxu0 0
        %3621 = vmatmul.mubr.bf16.gmra.mrb[0].mxu0 %v3452
        %v3622 = vpop.f32.mrb[0].mxu0
        %v3623 = vadd.f32 %v3482, %v3622
        %v3624 = vpop.f32.mrb[0].mxu0
        %v3625 = vpop.f32.mrb[0].mxu0
        %v3626 = vadd.f32 %v3482, %v3625
        %v3627 = vpop.f32.mrb[0].mxu0
        %3628 = vmatprep.mubr.bf16.mxu0 0
        %3629 = vmatmul.mubr.bf16.gmra.mrb[0].mxu0 %v3453
        %v3630 = vpop.f32.mrb[0].mxu0
        %v3631 = vadd.f32 %v3482, %v3630
        %v3632 = vpop.f32.mrb[0].mxu0
        %v3633 = vpop.f32.mrb[0].mxu0
        %v3634 = vadd.f32 %v3482, %v3633
        %v3635 = vpop.f32.mrb[0].mxu0
        %3636 = vmatprep.mubr.bf16.mxu0 0
        %3637 = vmatmul.mubr.bf16.gmra.mrb[0].mxu0 %v3454
        %v3638 = vpop.f32.mrb[0].mxu0
        %v3639 = vadd.f32 %v3482, %v3638
        %v3640 = vpop.f32.mrb[0].mxu0
        %v3641 = vpop.f32.mrb[0].mxu0
        %v3642 = vadd.f32 %v3482, %v3641
        %v3643 = vpop.f32.mrb[0].mxu0
        %3644 = vmatprep.mubr.bf16.mxu0 0
        %3645 = vmatmul.mubr.bf16.gmra.mrb[0].mxu0 %v3455
        %v3646 = vpop.f32.mrb[0].mxu0
        %v3647 = vadd.f32 %v3482, %v3646
        %v3648 = vpop.f32.mrb[0].mxu0
        %v3649 = vpop.f32.mrb[0].mxu0
        %v3650 = vadd.f32 %v3482, %v3649
        %v3651 = vpop.f32.mrb[0].mxu0
        %3652 = vmatprep.mubr.bf16.mxu0 0
        %3653 = vmatmul.mubr.bf16.gmra.mrb[0].mxu0 %v3456
        %v3654 = vpop.f32.mrb[0].mxu0
        %v3655 = vadd.f32 %v3482, %v3654
        %v3656 = vpop.f32.mrb[0].mxu0
        %v3657 = vpop.f32.mrb[0].mxu0
        %v3658 = vadd.f32 %v3482, %v3657
        %v3659 = vpop.f32.mrb[0].mxu0
        %3660 = vmatprep.mubr.bf16.mxu0 0
        %3661 = vmatmul.mubr.bf16.gmra.mrb[0].mxu0 %v3457
        %v3662 = vpop.f32.mrb[0].mxu0
        %v3663 = vadd.f32 %v3482, %v3662
        %v3664 = vpop.f32.mrb[0].mxu0
        %v3665 = vpop.f32.mrb[0].mxu0
        %v3666 = vadd.f32 %v3482, %v3665
        %v3667 = vpop.f32.mrb[0].mxu0
        %3668 = vmatprep.mubr.bf16.mxu0 0
        %3669 = vmatmul.mubr.bf16.gmra.mrb[0].mxu0 %v3458
        %v3670 = vpop.f32.mrb[0].mxu0
        %v3671 = vadd.f32 %v3482, %v3670
        %v3672 = vpop.f32.mrb[0].mxu0
        %v3673 = vpop.f32.mrb[0].mxu0
        %v3674 = vadd.f32 %v3482, %v3673
        %v3675 = vpop.f32.mrb[0].mxu0
        %3676 = vmatprep.mubr.bf16.mxu0 0
        %3677 = vmatmul.mubr.bf16.gmra.mrb[0].mxu0 %v3459
        %v3678 = vpop.f32.mrb[0].mxu0
        %v3679 = vadd.f32 %v3482, %v3678
        %v3680 = vpop.f32.mrb[0].mxu0
        %v3681 = vpop.f32.mrb[0].mxu0
        %v3682 = vadd.f32 %v3482, %v3681
        %v3683 = vpop.f32.mrb[0].mxu0
        %3684 = vmatprep.mubr.bf16.mxu0 0
        %3685 = vmatmul.mubr.bf16.gmra.mrb[0].mxu0 %v3460
        %v3686 = vpop.f32.mrb[0].mxu0
        %v3687 = vadd.f32 %v3482, %v3686
        %v3688 = vpop.f32.mrb[0].mxu0
        %v3689 = vpop.f32.mrb[0].mxu0
        %v3690 = vadd.f32 %v3482, %v3689
        %v3691 = vpop.f32.mrb[0].mxu0
        %3692 = vdwg.mxu0
        %v3693 = vmax.f32 %v3567, 0.0
        %v3694 = vmax.f32 %v3570, 0.0
        %v3695 = vmax.f32 %v3575, 0.0
        %v3696 = vmax.f32 %v3578, 0.0
        %v3697 = vmax.f32 %v3583, 0.0
        %v3698 = vmax.f32 %v3586, 0.0
        %v3699 = vmax.f32 %v3591, 0.0
        %v3700 = vmax.f32 %v3594, 0.0
        %v3701 = vmax.f32 %v3599, 0.0
        %v3702 = vmax.f32 %v3602, 0.0
        %v3703 = vmax.f32 %v3607, 0.0
        %v3704 = vmax.f32 %v3610, 0.0
        %v3705 = vmax.f32 %v3615, 0.0
        %v3706 = vmax.f32 %v3618, 0.0
        %v3707 = vmax.f32 %v3623, 0.0
        %v3708 = vmax.f32 %v3626, 0.0
        %v3709 = vmax.f32 %v3631, 0.0
        %v3710 = vmax.f32 %v3634, 0.0
        %v3711 = vmax.f32 %v3639, 0.0
        %v3712 = vmax.f32 %v3642, 0.0
        %v3713 = vmax.f32 %v3647, 0.0
        %v3714 = vmax.f32 %v3650, 0.0
        %v3715 = vmax.f32 %v3655, 0.0
        %v3716 = vmax.f32 %v3658, 0.0
        %v3717 = vmax.f32 %v3663, 0.0
        %v3718 = vmax.f32 %v3666, 0.0
        %v3719 = vmax.f32 %v3671, 0.0
        %v3720 = vmax.f32 %v3674, 0.0
        %v3721 = vmax.f32 %v3679, 0.0
        %v3722 = vmax.f32 %v3682, 0.0
        %v3723 = vmax.f32 %v3687, 0.0
        %v3724 = vmax.f32 %v3690, 0.0
        %v3725 = vpack.c.bf16 %v3694, %v3693
        %v3726 = vpack.c.bf16 %v3696, %v3695
        %v3727 = vpack.c.bf16 %v3698, %v3697
        %v3728 = vpack.c.bf16 %v3700, %v3699
        %v3729 = vpack.c.bf16 %v3702, %v3701
        %v3730 = vpack.c.bf16 %v3704, %v3703
        %v3731 = vpack.c.bf16 %v3706, %v3705
        %v3732 = vpack.c.bf16 %v3708, %v3707
        %v3733 = vpack.c.bf16 %v3710, %v3709
        %v3734 = vpack.c.bf16 %v3712, %v3711
        %v3735 = vpack.c.bf16 %v3714, %v3713
        %v3736 = vpack.c.bf16 %v3716, %v3715
        %v3737 = vpack.c.bf16 %v3718, %v3717
        %v3738 = vpack.c.bf16 %v3720, %v3719
        %v3739 = vpack.c.bf16 %v3722, %v3721
        %v3740 = vpack.c.bf16 %v3724, %v3723
        %v3741 = vld [vmem:[#allocation25] sm:$0xf]
        %v3742 = vld [vmem:[#allocation25 + $0x4] sm:$0xf]
        %v3743 = vld [vmem:[#allocation25 + $0x8] sm:$0xf]
        %v3744 = vld [vmem:[#allocation25 + $0xc] sm:$0xf]
        %v3745 = vld [vmem:[#allocation25 + $0x10] sm:$0xf]
        %v3746 = vld [vmem:[#allocation25 + $0x14] sm:$0xf]
        %v3747 = vld [vmem:[#allocation25 + $0x18] sm:$0xf]
        %v3748 = vld [vmem:[#allocation25 + $0x1c] sm:$0xf]
        %v3749 = vld [vmem:[#allocation25 + $0x20] sm:$0xf]
        %v3750 = vld [vmem:[#allocation25 + $0x24] sm:$0xf]
        %v3751 = vld [vmem:[#allocation25 + $0x28] sm:$0xf]
        %v3752 = vld [vmem:[#allocation25 + $0x2c] sm:$0xf]
        %v3753 = vld [vmem:[#allocation25 + $0x30] sm:$0xf]
        %v3754 = vld [vmem:[#allocation25 + $0x34] sm:$0xf]
        %v3755 = vld [vmem:[#allocation25 + $0x38] sm:$0xf]
        %v3756 = vld [vmem:[#allocation25 + $0x3c] sm:$0xf]
        %v3757 = vld [vmem:[%s20] sm:$0x1]
        %v3759 = vlaneseq
        %v3760 = vshrl.u32 %v3759, 7
        %v3761 = vsub.s32 0, %v3760
        %v3762 = vrot.slane %v3757, %v3761
        %v3780 = vunpack.c.l.b16 %v3741
        %v3781 = vunpack.c.l.b16 %v3742
        %v3782 = vunpack.c.l.b16 %v3743
        %v3783 = vunpack.c.l.b16 %v3744
        %v3784 = vunpack.c.l.b16 %v3745
        %v3785 = vunpack.c.l.b16 %v3746
        %v3786 = vunpack.c.l.b16 %v3747
        %v3787 = vunpack.c.l.b16 %v3748
        %v3788 = vunpack.c.l.b16 %v3749
        %v3789 = vunpack.c.l.b16 %v3750
        %v3790 = vunpack.c.l.b16 %v3751
        %v3791 = vunpack.c.l.b16 %v3752
        %v3792 = vunpack.c.l.b16 %v3753
        %v3793 = vunpack.c.l.b16 %v3754
        %v3794 = vunpack.c.l.b16 %v3755
        %v3795 = vunpack.c.l.b16 %v3756
        %v3796 = vpack.c.b16 %v3781, %v3780
        %v3797 = vpack.c.b16 %v3783, %v3782
        %v3798 = vpack.c.b16 %v3785, %v3784
        %v3799 = vpack.c.b16 %v3787, %v3786
        %v3800 = vpack.c.b16 %v3789, %v3788
        %v3801 = vpack.c.b16 %v3791, %v3790
        %v3802 = vpack.c.b16 %v3793, %v3792
        %v3803 = vpack.c.b16 %v3795, %v3794
        %3812 = vmatprep.subr.bf16.mxu0 0
        %3813 = vmatpush1.bf16.msra.mxu0 %v3796
        %3814 = vmatprep.subr.bf16.mxu0 0
        %3815 = vmatpush1.bf16.msra.mxu0 %v3797
        %3816 = vmatprep.subr.bf16.mxu0 0
        %3817 = vmatpush1.bf16.msra.mxu0 %v3798
        %3818 = vmatprep.subr.bf16.mxu0 0
        %3819 = vmatpush1.bf16.msra.mxu0 %v3799
        %3820 = vmatprep.subr.bf16.mxu0 0
        %3821 = vmatpush1.bf16.msra.mxu0 %v3800
        %3822 = vmatprep.subr.bf16.mxu0 0
        %3823 = vmatpush1.bf16.msra.mxu0 %v3801
        %3824 = vmatprep.subr.bf16.mxu0 0
        %3825 = vmatpush1.bf16.msra.mxu0 %v3802
        %3826 = vmatprep.subr.bf16.mxu0 0
        %3827 = vmatpush1.bf16.msra.mxu0 %v3803
        %3828 = vmatprep.subr.bf16.mxu0 0
        %3829 = vmatpush1.bf16.msra.mxu0 0
        %3830 = vmatprep.subr.bf16.mxu0 0
        %3831 = vmatpush1.bf16.msra.mxu0 0
        %3832 = vmatprep.subr.bf16.mxu0 0
        %3833 = vmatpush1.bf16.msra.mxu0 0
        %3834 = vmatprep.subr.bf16.mxu0 0
        %3835 = vmatpush1.bf16.msra.mxu0 0
        %3836 = vmatprep.subr.bf16.mxu0 0
        %3837 = vmatpush1.bf16.msra.mxu0 0
        %3838 = vmatprep.subr.bf16.mxu0 0
        %3839 = vmatpush1.bf16.msra.mxu0 0
        %3840 = vmatprep.subr.bf16.mxu0 0
        %3841 = vmatpush1.bf16.msra.mxu0 0
        %3842 = vmatprep.subr.bf16.mxu0 0
        %3843 = vmatpush1.bf16.msra.mxu0 0
        %3844 = vmatprep.mubr.bf16.mxu0 0
        %3845 = vmatmul.mubr.bf16.gmra.mrb[0].mxu0 %v3725
        %v3846 = vpop.f32.mrb[0].mxu0
        %v3847 = vadd.f32 %v3762, %v3846
        %v3848 = vpop.f32.mrb[0].mxu0
        %v3849 = vpop.f32.mrb[0].mxu0
        %v3850 = vadd.f32 %v3762, %v3849
        %v3851 = vpop.f32.mrb[0].mxu0
        %3852 = vmatprep.mubr.bf16.mxu0 0
        %3853 = vmatmul.mubr.bf16.gmra.mrb[0].mxu0 %v3726
        %v3854 = vpop.f32.mrb[0].mxu0
        %v3855 = vadd.f32 %v3762, %v3854
        %v3856 = vpop.f32.mrb[0].mxu0
        %v3857 = vpop.f32.mrb[0].mxu0
        %v3858 = vadd.f32 %v3762, %v3857
        %v3859 = vpop.f32.mrb[0].mxu0
        %3860 = vmatprep.mubr.bf16.mxu0 0
        %3861 = vmatmul.mubr.bf16.gmra.mrb[0].mxu0 %v3727
        %v3862 = vpop.f32.mrb[0].mxu0
        %v3863 = vadd.f32 %v3762, %v3862
        %v3864 = vpop.f32.mrb[0].mxu0
        %v3865 = vpop.f32.mrb[0].mxu0
        %v3866 = vadd.f32 %v3762, %v3865
        %v3867 = vpop.f32.mrb[0].mxu0
        %3868 = vmatprep.mubr.bf16.mxu0 0
        %3869 = vmatmul.mubr.bf16.gmra.mrb[0].mxu0 %v3728
        %v3870 = vpop.f32.mrb[0].mxu0
        %v3871 = vadd.f32 %v3762, %v3870
        %v3872 = vpop.f32.mrb[0].mxu0
        %v3873 = vpop.f32.mrb[0].mxu0
        %v3874 = vadd.f32 %v3762, %v3873
        %v3875 = vpop.f32.mrb[0].mxu0
        %3876 = vmatprep.mubr.bf16.mxu0 0
        %3877 = vmatmul.mubr.bf16.gmra.mrb[0].mxu0 %v3729
        %v3878 = vpop.f32.mrb[0].mxu0
        %v3879 = vadd.f32 %v3762, %v3878
        %v3880 = vpop.f32.mrb[0].mxu0
        %v3881 = vpop.f32.mrb[0].mxu0
        %v3882 = vadd.f32 %v3762, %v3881
        %v3883 = vpop.f32.mrb[0].mxu0
        %3884 = vmatprep.mubr.bf16.mxu0 0
        %3885 = vmatmul.mubr.bf16.gmra.mrb[0].mxu0 %v3730
        %v3886 = vpop.f32.mrb[0].mxu0
        %v3887 = vadd.f32 %v3762, %v3886
        %v3888 = vpop.f32.mrb[0].mxu0
        %v3889 = vpop.f32.mrb[0].mxu0
        %v3890 = vadd.f32 %v3762, %v3889
        %v3891 = vpop.f32.mrb[0].mxu0
        %3892 = vmatprep.mubr.bf16.mxu0 0
        %3893 = vmatmul.mubr.bf16.gmra.mrb[0].mxu0 %v3731
        %v3894 = vpop.f32.mrb[0].mxu0
        %v3895 = vadd.f32 %v3762, %v3894
        %v3896 = vpop.f32.mrb[0].mxu0
        %v3897 = vpop.f32.mrb[0].mxu0
        %v3898 = vadd.f32 %v3762, %v3897
        %v3899 = vpop.f32.mrb[0].mxu0
        %3900 = vmatprep.mubr.bf16.mxu0 0
        %3901 = vmatmul.mubr.bf16.gmra.mrb[0].mxu0 %v3732
        %v3902 = vpop.f32.mrb[0].mxu0
        %v3903 = vadd.f32 %v3762, %v3902
        %v3904 = vpop.f32.mrb[0].mxu0
        %v3905 = vpop.f32.mrb[0].mxu0
        %v3906 = vadd.f32 %v3762, %v3905
        %v3907 = vpop.f32.mrb[0].mxu0
        %3908 = vmatprep.mubr.bf16.mxu0 0
        %3909 = vmatmul.mubr.bf16.gmra.mrb[0].mxu0 %v3733
        %v3910 = vpop.f32.mrb[0].mxu0
        %v3911 = vadd.f32 %v3762, %v3910
        %v3912 = vpop.f32.mrb[0].mxu0
        %v3913 = vpop.f32.mrb[0].mxu0
        %v3914 = vadd.f32 %v3762, %v3913
        %v3915 = vpop.f32.mrb[0].mxu0
        %3916 = vmatprep.mubr.bf16.mxu0 0
        %3917 = vmatmul.mubr.bf16.gmra.mrb[0].mxu0 %v3734
        %v3918 = vpop.f32.mrb[0].mxu0
        %v3919 = vadd.f32 %v3762, %v3918
        %v3920 = vpop.f32.mrb[0].mxu0
        %v3921 = vpop.f32.mrb[0].mxu0
        %v3922 = vadd.f32 %v3762, %v3921
        %v3923 = vpop.f32.mrb[0].mxu0
        %3924 = vmatprep.mubr.bf16.mxu0 0
        %3925 = vmatmul.mubr.bf16.gmra.mrb[0].mxu0 %v3735
        %v3926 = vpop.f32.mrb[0].mxu0
        %v3927 = vadd.f32 %v3762, %v3926
        %v3928 = vpop.f32.mrb[0].mxu0
        %v3929 = vpop.f32.mrb[0].mxu0
        %v3930 = vadd.f32 %v3762, %v3929
        %v3931 = vpop.f32.mrb[0].mxu0
        %3932 = vmatprep.mubr.bf16.mxu0 0
        %3933 = vmatmul.mubr.bf16.gmra.mrb[0].mxu0 %v3736
        %v3934 = vpop.f32.mrb[0].mxu0
        %v3935 = vadd.f32 %v3762, %v3934
        %v3936 = vpop.f32.mrb[0].mxu0
        %v3937 = vpop.f32.mrb[0].mxu0
        %v3938 = vadd.f32 %v3762, %v3937
        %v3939 = vpop.f32.mrb[0].mxu0
        %3940 = vmatprep.mubr.bf16.mxu0 0
        %3941 = vmatmul.mubr.bf16.gmra.mrb[0].mxu0 %v3737
        %v3942 = vpop.f32.mrb[0].mxu0
        %v3943 = vadd.f32 %v3762, %v3942
        %v3944 = vpop.f32.mrb[0].mxu0
        %v3945 = vpop.f32.mrb[0].mxu0
        %v3946 = vadd.f32 %v3762, %v3945
        %v3947 = vpop.f32.mrb[0].mxu0
        %3948 = vmatprep.mubr.bf16.mxu0 0
        %3949 = vmatmul.mubr.bf16.gmra.mrb[0].mxu0 %v3738
        %v3950 = vpop.f32.mrb[0].mxu0
        %v3951 = vadd.f32 %v3762, %v3950
        %v3952 = vpop.f32.mrb[0].mxu0
        %v3953 = vpop.f32.mrb[0].mxu0
        %v3954 = vadd.f32 %v3762, %v3953
        %v3955 = vpop.f32.mrb[0].mxu0
        %3956 = vmatprep.mubr.bf16.mxu0 0
        %3957 = vmatmul.mubr.bf16.gmra.mrb[0].mxu0 %v3739
        %v3958 = vpop.f32.mrb[0].mxu0
        %v3959 = vadd.f32 %v3762, %v3958
        %v3960 = vpop.f32.mrb[0].mxu0
        %v3961 = vpop.f32.mrb[0].mxu0
        %v3962 = vadd.f32 %v3762, %v3961
        %v3963 = vpop.f32.mrb[0].mxu0
        %3964 = vmatprep.mubr.bf16.mxu0 0
        %3965 = vmatmul.mubr.bf16.gmra.mrb[0].mxu0 %v3740
        %v3966 = vpop.f32.mrb[0].mxu0
        %v3967 = vadd.f32 %v3762, %v3966
        %v3968 = vpop.f32.mrb[0].mxu0
        %v3969 = vpop.f32.mrb[0].mxu0
        %v3970 = vadd.f32 %v3762, %v3969
        %v3971 = vpop.f32.mrb[0].mxu0
        %3972 = vdwg.mxu0
        %v3973 = vpack.c.bf16 %v3850, %v3847
        %v3974 = vpack.c.bf16 %v3858, %v3855
        %v3975 = vpack.c.bf16 %v3866, %v3863
        %v3976 = vpack.c.bf16 %v3874, %v3871
        %v3977 = vpack.c.bf16 %v3882, %v3879
        %v3978 = vpack.c.bf16 %v3890, %v3887
        %v3979 = vpack.c.bf16 %v3898, %v3895
        %v3980 = vpack.c.bf16 %v3906, %v3903
        %v3981 = vpack.c.bf16 %v3914, %v3911
        %v3982 = vpack.c.bf16 %v3922, %v3919
        %v3983 = vpack.c.bf16 %v3930, %v3927
        %v3984 = vpack.c.bf16 %v3938, %v3935
        %v3985 = vpack.c.bf16 %v3946, %v3943
        %v3986 = vpack.c.bf16 %v3954, %v3951
        %v3987 = vpack.c.bf16 %v3962, %v3959
        %v3988 = vpack.c.bf16 %v3970, %v3967
        %v3989 = vld [vmem:[%s21] sm:$0xf]
        %v3990 = vld [vmem:[%s21 + $0x4] sm:$0xf]
        %v3991 = vld [vmem:[%s21 + $0x8] sm:$0xf]
        %v3992 = vld [vmem:[%s21 + $0xc] sm:$0xf]
        %v3993 = vld [vmem:[%s21 + $0x10] sm:$0xf]
        %v3994 = vld [vmem:[%s21 + $0x14] sm:$0xf]
        %v3995 = vld [vmem:[%s21 + $0x18] sm:$0xf]
        %v3996 = vld [vmem:[%s21 + $0x1c] sm:$0xf]
        %v3997 = vld [vmem:[%s21 + $0x20] sm:$0xf]
        %v3998 = vld [vmem:[%s21 + $0x24] sm:$0xf]
        %v3999 = vld [vmem:[%s21 + $0x28] sm:$0xf]
        %v4000 = vld [vmem:[%s21 + $0x2c] sm:$0xf]
        %v4001 = vld [vmem:[%s21 + $0x30] sm:$0xf]
        %v4002 = vld [vmem:[%s21 + $0x34] sm:$0xf]
        %v4003 = vld [vmem:[%s21 + $0x38] sm:$0xf]
        %v4004 = vld [vmem:[%s21 + $0x3c] sm:$0xf]
        %v4005 = vld [vmem:[%s22] sm:$0xf]
        %v4006 = vld [vmem:[%s22 + $0x4] sm:$0xf]
        %v4007 = vld [vmem:[%s22 + $0x8] sm:$0xf]
        %v4008 = vld [vmem:[%s22 + $0xc] sm:$0xf]
        %v4009 = vld [vmem:[%s22 + $0x10] sm:$0xf]
        %v4010 = vld [vmem:[%s22 + $0x14] sm:$0xf]
        %v4011 = vld [vmem:[%s22 + $0x18] sm:$0xf]
        %v4012 = vld [vmem:[%s22 + $0x1c] sm:$0xf]
        %v4013 = vld [vmem:[%s22 + $0x20] sm:$0xf]
        %v4014 = vld [vmem:[%s22 + $0x24] sm:$0xf]
        %v4015 = vld [vmem:[%s22 + $0x28] sm:$0xf]
        %v4016 = vld [vmem:[%s22 + $0x2c] sm:$0xf]
        %v4017 = vld [vmem:[%s22 + $0x30] sm:$0xf]
        %v4018 = vld [vmem:[%s22 + $0x34] sm:$0xf]
        %v4019 = vld [vmem:[%s22 + $0x38] sm:$0xf]
        %v4020 = vld [vmem:[%s22 + $0x3c] sm:$0xf]
        %v4053 = vunpack.c.l.b16 %v1116
        %v4054 = vunpack.c.l.b16 %v1117
        %v4055 = vunpack.c.l.b16 %v1118
        %v4056 = vunpack.c.l.b16 %v1119
        %v4057 = vunpack.c.l.b16 %v1120
        %v4058 = vunpack.c.l.b16 %v1121
        %v4059 = vunpack.c.l.b16 %v1122
        %v4060 = vunpack.c.l.b16 %v1123
        %v4061 = vunpack.c.l.b16 %v1124
        %v4062 = vunpack.c.l.b16 %v1125
        %v4063 = vunpack.c.l.b16 %v1126
        %v4064 = vunpack.c.l.b16 %v1127
        %v4065 = vunpack.c.l.b16 %v1128
        %v4066 = vunpack.c.l.b16 %v1129
        %v4067 = vunpack.c.l.b16 %v1130
        %v4068 = vunpack.c.l.b16 %v1131
        %v4069 = vunpack.c.l.b16 %v1132
        %v4070 = vunpack.c.l.b16 %v1133
        %v4071 = vunpack.c.l.b16 %v1134
        %v4072 = vunpack.c.l.b16 %v1135
        %v4073 = vunpack.c.l.b16 %v1136
        %v4074 = vunpack.c.l.b16 %v1137
        %v4075 = vunpack.c.l.b16 %v1138
        %v4076 = vunpack.c.l.b16 %v1139
        %v4077 = vunpack.c.l.b16 %v1140
        %v4078 = vunpack.c.l.b16 %v1141
        %v4079 = vunpack.c.l.b16 %v1142
        %v4080 = vunpack.c.l.b16 %v1143
        %v4081 = vunpack.c.l.b16 %v1144
        %v4082 = vunpack.c.l.b16 %v1145
        %v4083 = vunpack.c.l.b16 %v1146
        %v4084 = vunpack.c.l.b16 %v1147
        %v4085 = vpack.c.b16 %v4054, %v4053
        %v4086 = vpack.c.b16 %v4056, %v4055
        %v4087 = vpack.c.b16 %v4058, %v4057
        %v4088 = vpack.c.b16 %v4060, %v4059
        %v4089 = vpack.c.b16 %v4062, %v4061
        %v4090 = vpack.c.b16 %v4064, %v4063
        %v4091 = vpack.c.b16 %v4066, %v4065
        %v4092 = vpack.c.b16 %v4068, %v4067
        %v4093 = vpack.c.b16 %v4070, %v4069
        %v4094 = vpack.c.b16 %v4072, %v4071
        %v4095 = vpack.c.b16 %v4074, %v4073
        %v4096 = vpack.c.b16 %v4076, %v4075
        %v4097 = vpack.c.b16 %v4078, %v4077
        %v4098 = vpack.c.b16 %v4080, %v4079
        %v4099 = vpack.c.b16 %v4082, %v4081
        %v4100 = vpack.c.b16 %v4084, %v4083
        %v4133 = vunpack.c.l.b16 %v4005
        %v4134 = vunpack.c.l.b16 %v4006
        %v4135 = vunpack.c.l.b16 %v4007
        %v4136 = vunpack.c.l.b16 %v4008
        %v4137 = vunpack.c.l.b16 %v4009
        %v4138 = vunpack.c.l.b16 %v4010
        %v4139 = vunpack.c.l.b16 %v4011
        %v4140 = vunpack.c.l.b16 %v4012
        %v4141 = vunpack.c.l.b16 %v4013
        %v4142 = vunpack.c.l.b16 %v4014
        %v4143 = vunpack.c.l.b16 %v4015
        %v4144 = vunpack.c.l.b16 %v4016
        %v4145 = vunpack.c.l.b16 %v4017
        %v4146 = vunpack.c.l.b16 %v4018
        %v4147 = vunpack.c.l.b16 %v4019
        %v4148 = vunpack.c.l.b16 %v4020
        %v4149 = vpack.c.b16 %v4134, %v4133
        %v4150 = vpack.c.b16 %v4136, %v4135
        %v4151 = vpack.c.b16 %v4138, %v4137
        %v4152 = vpack.c.b16 %v4140, %v4139
        %v4153 = vpack.c.b16 %v4142, %v4141
        %v4154 = vpack.c.b16 %v4144, %v4143
        %v4155 = vpack.c.b16 %v4146, %v4145
        %v4156 = vpack.c.b16 %v4148, %v4147
        %4165 = vmatprep.subr.bf16.mxu0 0
        %4166 = vmatpush1.bf16.msra.mxu0 %v4149
        %4167 = vmatprep.subr.bf16.mxu0 0
        %4168 = vmatpush1.bf16.msra.mxu0 %v4150
        %4169 = vmatprep.subr.bf16.mxu0 0
        %4170 = vmatpush1.bf16.msra.mxu0 %v4151
        %4171 = vmatprep.subr.bf16.mxu0 0
        %4172 = vmatpush1.bf16.msra.mxu0 %v4152
        %4173 = vmatprep.subr.bf16.mxu0 0
        %4174 = vmatpush1.bf16.msra.mxu0 %v4153
        %4175 = vmatprep.subr.bf16.mxu0 0
        %4176 = vmatpush1.bf16.msra.mxu0 %v4154
        %4177 = vmatprep.subr.bf16.mxu0 0
        %4178 = vmatpush1.bf16.msra.mxu0 %v4155
        %4179 = vmatprep.subr.bf16.mxu0 0
        %4180 = vmatpush1.bf16.msra.mxu0 %v4156
        %4181 = vmatprep.subr.bf16.mxu0 0
        %4182 = vmatpush1.bf16.msra.mxu0 0
        %4183 = vmatprep.subr.bf16.mxu0 0
        %4184 = vmatpush1.bf16.msra.mxu0 0
        %4185 = vmatprep.subr.bf16.mxu0 0
        %4186 = vmatpush1.bf16.msra.mxu0 0
        %4187 = vmatprep.subr.bf16.mxu0 0
        %4188 = vmatpush1.bf16.msra.mxu0 0
        %4189 = vmatprep.subr.bf16.mxu0 0
        %4190 = vmatpush1.bf16.msra.mxu0 0
        %4191 = vmatprep.subr.bf16.mxu0 0
        %4192 = vmatpush1.bf16.msra.mxu0 0
        %4193 = vmatprep.subr.bf16.mxu0 0
        %4194 = vmatpush1.bf16.msra.mxu0 0
        %4195 = vmatprep.subr.bf16.mxu0 0
        %4196 = vmatpush1.bf16.msra.mxu0 0
        %4197 = vmatprep.mubr.bf16.mxu0 0
        %4198 = vmatmul.mubr.bf16.gmra.mrb[0].mxu0 %v4085
        %v4199 = vpop.f32.mrb[0].mxu0
        %v4200 = vadd.f32 0.0, %v4199
        %v4201 = vpop.f32.mrb[0].mxu0
        %v4202 = vpop.f32.mrb[0].mxu0
        %v4203 = vadd.f32 0.0, %v4202
        %v4204 = vpop.f32.mrb[0].mxu0
        %4205 = vmatprep.mubr.bf16.mxu0 0
        %4206 = vmatmul.mubr.bf16.gmra.mrb[0].mxu0 %v4086
        %v4207 = vpop.f32.mrb[0].mxu0
        %v4208 = vadd.f32 0.0, %v4207
        %v4209 = vpop.f32.mrb[0].mxu0
        %v4210 = vpop.f32.mrb[0].mxu0
        %v4211 = vadd.f32 0.0, %v4210
        %v4212 = vpop.f32.mrb[0].mxu0
        %4213 = vmatprep.mubr.bf16.mxu0 0
        %4214 = vmatmul.mubr.bf16.gmra.mrb[0].mxu0 %v4087
        %v4215 = vpop.f32.mrb[0].mxu0
        %v4216 = vadd.f32 0.0, %v4215
        %v4217 = vpop.f32.mrb[0].mxu0
        %v4218 = vpop.f32.mrb[0].mxu0
        %v4219 = vadd.f32 0.0, %v4218
        %v4220 = vpop.f32.mrb[0].mxu0
        %4221 = vmatprep.mubr.bf16.mxu0 0
        %4222 = vmatmul.mubr.bf16.gmra.mrb[0].mxu0 %v4088
        %v4223 = vpop.f32.mrb[0].mxu0
        %v4224 = vadd.f32 0.0, %v4223
        %v4225 = vpop.f32.mrb[0].mxu0
        %v4226 = vpop.f32.mrb[0].mxu0
        %v4227 = vadd.f32 0.0, %v4226
        %v4228 = vpop.f32.mrb[0].mxu0
        %4229 = vmatprep.mubr.bf16.mxu0 0
        %4230 = vmatmul.mubr.bf16.gmra.mrb[0].mxu0 %v4089
        %v4231 = vpop.f32.mrb[0].mxu0
        %v4232 = vadd.f32 0.0, %v4231
        %v4233 = vpop.f32.mrb[0].mxu0
        %v4234 = vpop.f32.mrb[0].mxu0
        %v4235 = vadd.f32 0.0, %v4234
        %v4236 = vpop.f32.mrb[0].mxu0
        %4237 = vmatprep.mubr.bf16.mxu0 0
        %4238 = vmatmul.mubr.bf16.gmra.mrb[0].mxu0 %v4090
        %v4239 = vpop.f32.mrb[0].mxu0
        %v4240 = vadd.f32 0.0, %v4239
        %v4241 = vpop.f32.mrb[0].mxu0
        %v4242 = vpop.f32.mrb[0].mxu0
        %v4243 = vadd.f32 0.0, %v4242
        %v4244 = vpop.f32.mrb[0].mxu0
        %4245 = vmatprep.mubr.bf16.mxu0 0
        %4246 = vmatmul.mubr.bf16.gmra.mrb[0].mxu0 %v4091
        %v4247 = vpop.f32.mrb[0].mxu0
        %v4248 = vadd.f32 0.0, %v4247
        %v4249 = vpop.f32.mrb[0].mxu0
        %v4250 = vpop.f32.mrb[0].mxu0
        %v4251 = vadd.f32 0.0, %v4250
        %v4252 = vpop.f32.mrb[0].mxu0
        %4253 = vmatprep.mubr.bf16.mxu0 0
        %4254 = vmatmul.mubr.bf16.gmra.mrb[0].mxu0 %v4092
        %v4255 = vpop.f32.mrb[0].mxu0
        %v4256 = vadd.f32 0.0, %v4255
        %v4257 = vpop.f32.mrb[0].mxu0
        %v4258 = vpop.f32.mrb[0].mxu0
        %v4259 = vadd.f32 0.0, %v4258
        %v4260 = vpop.f32.mrb[0].mxu0
        %4261 = vmatprep.mubr.bf16.mxu0 0
        %4262 = vmatmul.mubr.bf16.gmra.mrb[0].mxu0 %v4093
        %v4263 = vpop.f32.mrb[0].mxu0
        %v4264 = vadd.f32 0.0, %v4263
        %v4265 = vpop.f32.mrb[0].mxu0
        %v4266 = vpop.f32.mrb[0].mxu0
        %v4267 = vadd.f32 0.0, %v4266
        %v4268 = vpop.f32.mrb[0].mxu0
        %4269 = vmatprep.mubr.bf16.mxu0 0
        %4270 = vmatmul.mubr.bf16.gmra.mrb[0].mxu0 %v4094
        %v4271 = vpop.f32.mrb[0].mxu0
        %v4272 = vadd.f32 0.0, %v4271
        %v4273 = vpop.f32.mrb[0].mxu0
        %v4274 = vpop.f32.mrb[0].mxu0
        %v4275 = vadd.f32 0.0, %v4274
        %v4276 = vpop.f32.mrb[0].mxu0
        %4277 = vmatprep.mubr.bf16.mxu0 0
        %4278 = vmatmul.mubr.bf16.gmra.mrb[0].mxu0 %v4095
        %v4279 = vpop.f32.mrb[0].mxu0
        %v4280 = vadd.f32 0.0, %v4279
        %v4281 = vpop.f32.mrb[0].mxu0
        %v4282 = vpop.f32.mrb[0].mxu0
        %v4283 = vadd.f32 0.0, %v4282
        %v4284 = vpop.f32.mrb[0].mxu0
        %4285 = vmatprep.mubr.bf16.mxu0 0
        %4286 = vmatmul.mubr.bf16.gmra.mrb[0].mxu0 %v4096
        %v4287 = vpop.f32.mrb[0].mxu0
        %v4288 = vadd.f32 0.0, %v4287
        %v4289 = vpop.f32.mrb[0].mxu0
        %v4290 = vpop.f32.mrb[0].mxu0
        %v4291 = vadd.f32 0.0, %v4290
        %v4292 = vpop.f32.mrb[0].mxu0
        %4293 = vmatprep.mubr.bf16.mxu0 0
        %4294 = vmatmul.mubr.bf16.gmra.mrb[0].mxu0 %v4097
        %v4295 = vpop.f32.mrb[0].mxu0
        %v4296 = vadd.f32 0.0, %v4295
        %v4297 = vpop.f32.mrb[0].mxu0
        %v4298 = vpop.f32.mrb[0].mxu0
        %v4299 = vadd.f32 0.0, %v4298
        %v4300 = vpop.f32.mrb[0].mxu0
        %4301 = vmatprep.mubr.bf16.mxu0 0
        %4302 = vmatmul.mubr.bf16.gmra.mrb[0].mxu0 %v4098
        %v4303 = vpop.f32.mrb[0].mxu0
        %v4304 = vadd.f32 0.0, %v4303
        %v4305 = vpop.f32.mrb[0].mxu0
        %v4306 = vpop.f32.mrb[0].mxu0
        %v4307 = vadd.f32 0.0, %v4306
        %v4308 = vpop.f32.mrb[0].mxu0
        %4309 = vmatprep.mubr.bf16.mxu0 0
        %4310 = vmatmul.mubr.bf16.gmra.mrb[0].mxu0 %v4099
        %v4311 = vpop.f32.mrb[0].mxu0
        %v4312 = vadd.f32 0.0, %v4311
        %v4313 = vpop.f32.mrb[0].mxu0
        %v4314 = vpop.f32.mrb[0].mxu0
        %v4315 = vadd.f32 0.0, %v4314
        %v4316 = vpop.f32.mrb[0].mxu0
        %4317 = vmatprep.mubr.bf16.mxu0 0
        %4318 = vmatmul.mubr.bf16.gmra.mrb[0].mxu0 %v4100
        %v4319 = vpop.f32.mrb[0].mxu0
        %v4320 = vadd.f32 0.0, %v4319
        %v4321 = vpop.f32.mrb[0].mxu0
        %v4322 = vpop.f32.mrb[0].mxu0
        %v4323 = vadd.f32 0.0, %v4322
        %v4324 = vpop.f32.mrb[0].mxu0
        %4325 = vdwg.mxu0
        %v4342 = vunpack.c.l.b16 %v3989
        %v4343 = vunpack.c.l.b16 %v3990
        %v4344 = vunpack.c.l.b16 %v3991
        %v4345 = vunpack.c.l.b16 %v3992
        %v4346 = vunpack.c.l.b16 %v3993
        %v4347 = vunpack.c.l.b16 %v3994
        %v4348 = vunpack.c.l.b16 %v3995
        %v4349 = vunpack.c.l.b16 %v3996
        %v4350 = vunpack.c.l.b16 %v3997
        %v4351 = vunpack.c.l.b16 %v3998
        %v4352 = vunpack.c.l.b16 %v3999
        %v4353 = vunpack.c.l.b16 %v4000
        %v4354 = vunpack.c.l.b16 %v4001
        %v4355 = vunpack.c.l.b16 %v4002
        %v4356 = vunpack.c.l.b16 %v4003
        %v4357 = vunpack.c.l.b16 %v4004
        %v4358 = vpack.c.b16 %v4343, %v4342
        %v4359 = vpack.c.b16 %v4345, %v4344
        %v4360 = vpack.c.b16 %v4347, %v4346
        %v4361 = vpack.c.b16 %v4349, %v4348
        %v4362 = vpack.c.b16 %v4351, %v4350
        %v4363 = vpack.c.b16 %v4353, %v4352
        %v4364 = vpack.c.b16 %v4355, %v4354
        %v4365 = vpack.c.b16 %v4357, %v4356
        %4374 = vmatprep.subr.bf16.mxu0 0
        %4375 = vmatpush1.bf16.msra.mxu0 %v4358
        %4376 = vmatprep.subr.bf16.mxu0 0
        %4377 = vmatpush1.bf16.msra.mxu0 %v4359
        %4378 = vmatprep.subr.bf16.mxu0 0
        %4379 = vmatpush1.bf16.msra.mxu0 %v4360
        %4380 = vmatprep.subr.bf16.mxu0 0
        %4381 = vmatpush1.bf16.msra.mxu0 %v4361
        %4382 = vmatprep.subr.bf16.mxu0 0
        %4383 = vmatpush1.bf16.msra.mxu0 %v4362
        %4384 = vmatprep.subr.bf16.mxu0 0
        %4385 = vmatpush1.bf16.msra.mxu0 %v4363
        %4386 = vmatprep.subr.bf16.mxu0 0
        %4387 = vmatpush1.bf16.msra.mxu0 %v4364
        %4388 = vmatprep.subr.bf16.mxu0 0
        %4389 = vmatpush1.bf16.msra.mxu0 %v4365
        %4390 = vmatprep.subr.bf16.mxu0 0
        %4391 = vmatpush1.bf16.msra.mxu0 0
        %4392 = vmatprep.subr.bf16.mxu0 0
        %4393 = vmatpush1.bf16.msra.mxu0 0
        %4394 = vmatprep.subr.bf16.mxu0 0
        %4395 = vmatpush1.bf16.msra.mxu0 0
        %4396 = vmatprep.subr.bf16.mxu0 0
        %4397 = vmatpush1.bf16.msra.mxu0 0
        %4398 = vmatprep.subr.bf16.mxu0 0
        %4399 = vmatpush1.bf16.msra.mxu0 0
        %4400 = vmatprep.subr.bf16.mxu0 0
        %4401 = vmatpush1.bf16.msra.mxu0 0
        %4402 = vmatprep.subr.bf16.mxu0 0
        %4403 = vmatpush1.bf16.msra.mxu0 0
        %4404 = vmatprep.subr.bf16.mxu0 0
        %4405 = vmatpush1.bf16.msra.mxu0 0
        %4406 = vmatprep.mubr.bf16.mxu0 0
        %4407 = vmatmul.mubr.bf16.gmra.mrb[0].mxu0 %v3973
        %v4408 = vpop.f32.mrb[0].mxu0
        %v4409 = vadd.f32 %v4200, %v4408
        %v4410 = vpop.f32.mrb[0].mxu0
        %v4411 = vpop.f32.mrb[0].mxu0
        %v4412 = vadd.f32 %v4203, %v4411
        %v4413 = vpop.f32.mrb[0].mxu0
        %4414 = vmatprep.mubr.bf16.mxu0 0
        %4415 = vmatmul.mubr.bf16.gmra.mrb[0].mxu0 %v3974
        %v4416 = vpop.f32.mrb[0].mxu0
        %v4417 = vadd.f32 %v4208, %v4416
        %v4418 = vpop.f32.mrb[0].mxu0
        %v4419 = vpop.f32.mrb[0].mxu0
        %v4420 = vadd.f32 %v4211, %v4419
        %v4421 = vpop.f32.mrb[0].mxu0
        %4422 = vmatprep.mubr.bf16.mxu0 0
        %4423 = vmatmul.mubr.bf16.gmra.mrb[0].mxu0 %v3975
        %v4424 = vpop.f32.mrb[0].mxu0
        %v4425 = vadd.f32 %v4216, %v4424
        %v4426 = vpop.f32.mrb[0].mxu0
        %v4427 = vpop.f32.mrb[0].mxu0
        %v4428 = vadd.f32 %v4219, %v4427
        %v4429 = vpop.f32.mrb[0].mxu0
        %4430 = vmatprep.mubr.bf16.mxu0 0
        %4431 = vmatmul.mubr.bf16.gmra.mrb[0].mxu0 %v3976
        %v4432 = vpop.f32.mrb[0].mxu0
        %v4433 = vadd.f32 %v4224, %v4432
        %v4434 = vpop.f32.mrb[0].mxu0
        %v4435 = vpop.f32.mrb[0].mxu0
        %v4436 = vadd.f32 %v4227, %v4435
        %v4437 = vpop.f32.mrb[0].mxu0
        %4438 = vmatprep.mubr.bf16.mxu0 0
        %4439 = vmatmul.mubr.bf16.gmra.mrb[0].mxu0 %v3977
        %v4440 = vpop.f32.mrb[0].mxu0
        %v4441 = vadd.f32 %v4232, %v4440
        %v4442 = vpop.f32.mrb[0].mxu0
        %v4443 = vpop.f32.mrb[0].mxu0
        %v4444 = vadd.f32 %v4235, %v4443
        %v4445 = vpop.f32.mrb[0].mxu0
        %4446 = vmatprep.mubr.bf16.mxu0 0
        %4447 = vmatmul.mubr.bf16.gmra.mrb[0].mxu0 %v3978
        %v4448 = vpop.f32.mrb[0].mxu0
        %v4449 = vadd.f32 %v4240, %v4448
        %v4450 = vpop.f32.mrb[0].mxu0
        %v4451 = vpop.f32.mrb[0].mxu0
        %v4452 = vadd.f32 %v4243, %v4451
        %v4453 = vpop.f32.mrb[0].mxu0
        %4454 = vmatprep.mubr.bf16.mxu0 0
        %4455 = vmatmul.mubr.bf16.gmra.mrb[0].mxu0 %v3979
        %v4456 = vpop.f32.mrb[0].mxu0
        %v4457 = vadd.f32 %v4248, %v4456
        %v4458 = vpop.f32.mrb[0].mxu0
        %v4459 = vpop.f32.mrb[0].mxu0
        %v4460 = vadd.f32 %v4251, %v4459
        %v4461 = vpop.f32.mrb[0].mxu0
        %4462 = vmatprep.mubr.bf16.mxu0 0
        %4463 = vmatmul.mubr.bf16.gmra.mrb[0].mxu0 %v3980
        %v4464 = vpop.f32.mrb[0].mxu0
        %v4465 = vadd.f32 %v4256, %v4464
        %v4466 = vpop.f32.mrb[0].mxu0
        %v4467 = vpop.f32.mrb[0].mxu0
        %v4468 = vadd.f32 %v4259, %v4467
        %v4469 = vpop.f32.mrb[0].mxu0
        %4470 = vmatprep.mubr.bf16.mxu0 0
        %4471 = vmatmul.mubr.bf16.gmra.mrb[0].mxu0 %v3981
        %v4472 = vpop.f32.mrb[0].mxu0
        %v4473 = vadd.f32 %v4264, %v4472
        %v4474 = vpop.f32.mrb[0].mxu0
        %v4475 = vpop.f32.mrb[0].mxu0
        %v4476 = vadd.f32 %v4267, %v4475
        %v4477 = vpop.f32.mrb[0].mxu0
        %4478 = vmatprep.mubr.bf16.mxu0 0
        %4479 = vmatmul.mubr.bf16.gmra.mrb[0].mxu0 %v3982
        %v4480 = vpop.f32.mrb[0].mxu0
        %v4481 = vadd.f32 %v4272, %v4480
        %v4482 = vpop.f32.mrb[0].mxu0
        %v4483 = vpop.f32.mrb[0].mxu0
        %v4484 = vadd.f32 %v4275, %v4483
        %v4485 = vpop.f32.mrb[0].mxu0
        %4486 = vmatprep.mubr.bf16.mxu0 0
        %4487 = vmatmul.mubr.bf16.gmra.mrb[0].mxu0 %v3983
        %v4488 = vpop.f32.mrb[0].mxu0
        %v4489 = vadd.f32 %v4280, %v4488
        %v4490 = vpop.f32.mrb[0].mxu0
        %v4491 = vpop.f32.mrb[0].mxu0
        %v4492 = vadd.f32 %v4283, %v4491
        %v4493 = vpop.f32.mrb[0].mxu0
        %4494 = vmatprep.mubr.bf16.mxu0 0
        %4495 = vmatmul.mubr.bf16.gmra.mrb[0].mxu0 %v3984
        %v4496 = vpop.f32.mrb[0].mxu0
        %v4497 = vadd.f32 %v4288, %v4496
        %v4498 = vpop.f32.mrb[0].mxu0
        %v4499 = vpop.f32.mrb[0].mxu0
        %v4500 = vadd.f32 %v4291, %v4499
        %v4501 = vpop.f32.mrb[0].mxu0
        %4502 = vmatprep.mubr.bf16.mxu0 0
        %4503 = vmatmul.mubr.bf16.gmra.mrb[0].mxu0 %v3985
        %v4504 = vpop.f32.mrb[0].mxu0
        %v4505 = vadd.f32 %v4296, %v4504
        %v4506 = vpop.f32.mrb[0].mxu0
        %v4507 = vpop.f32.mrb[0].mxu0
        %v4508 = vadd.f32 %v4299, %v4507
        %v4509 = vpop.f32.mrb[0].mxu0
        %4510 = vmatprep.mubr.bf16.mxu0 0
        %4511 = vmatmul.mubr.bf16.gmra.mrb[0].mxu0 %v3986
        %v4512 = vpop.f32.mrb[0].mxu0
        %v4513 = vadd.f32 %v4304, %v4512
        %v4514 = vpop.f32.mrb[0].mxu0
        %v4515 = vpop.f32.mrb[0].mxu0
        %v4516 = vadd.f32 %v4307, %v4515
        %v4517 = vpop.f32.mrb[0].mxu0
        %4518 = vmatprep.mubr.bf16.mxu0 0
        %4519 = vmatmul.mubr.bf16.gmra.mrb[0].mxu0 %v3987
        %v4520 = vpop.f32.mrb[0].mxu0
        %v4521 = vadd.f32 %v4312, %v4520
        %v4522 = vpop.f32.mrb[0].mxu0
        %v4523 = vpop.f32.mrb[0].mxu0
        %v4524 = vadd.f32 %v4315, %v4523
        %v4525 = vpop.f32.mrb[0].mxu0
        %4526 = vmatprep.mubr.bf16.mxu0 0
        %4527 = vmatmul.mubr.bf16.gmra.mrb[0].mxu0 %v3988
        %v4528 = vpop.f32.mrb[0].mxu0
        %v4529 = vadd.f32 %v4320, %v4528
        %v4530 = vpop.f32.mrb[0].mxu0
        %v4531 = vpop.f32.mrb[0].mxu0
        %v4532 = vadd.f32 %v4323, %v4531
        %v4533 = vpop.f32.mrb[0].mxu0
        %4534 = vdwg.mxu0
        %v4535 = vld [vmem:[%s23] sm:$0x1]
        %v4537 = vlaneseq
        %v4538 = vshrl.u32 %v4537, 7
        %v4539 = vsub.s32 0, %v4538
        %v4540 = vrot.slane %v4535, %v4539
        %v4542 = vadd.f32 %v4409, %v4540
        %v4543 = vadd.f32 %v4412, %v4540
        %v4544 = vadd.f32 %v4417, %v4540
        %v4545 = vadd.f32 %v4420, %v4540
        %v4546 = vadd.f32 %v4425, %v4540
        %v4547 = vadd.f32 %v4428, %v4540
        %v4548 = vadd.f32 %v4433, %v4540
        %v4549 = vadd.f32 %v4436, %v4540
        %v4550 = vadd.f32 %v4441, %v4540
        %v4551 = vadd.f32 %v4444, %v4540
        %v4552 = vadd.f32 %v4449, %v4540
        %v4553 = vadd.f32 %v4452, %v4540
        %v4554 = vadd.f32 %v4457, %v4540
        %v4555 = vadd.f32 %v4460, %v4540
        %v4556 = vadd.f32 %v4465, %v4540
        %v4557 = vadd.f32 %v4468, %v4540
        %v4558 = vadd.f32 %v4473, %v4540
        %v4559 = vadd.f32 %v4476, %v4540
        %v4560 = vadd.f32 %v4481, %v4540
        %v4561 = vadd.f32 %v4484, %v4540
        %v4562 = vadd.f32 %v4489, %v4540
        %v4563 = vadd.f32 %v4492, %v4540
        %v4564 = vadd.f32 %v4497, %v4540
        %v4565 = vadd.f32 %v4500, %v4540
        %v4566 = vadd.f32 %v4505, %v4540
        %v4567 = vadd.f32 %v4508, %v4540
        %v4568 = vadd.f32 %v4513, %v4540
        %v4569 = vadd.f32 %v4516, %v4540
        %v4570 = vadd.f32 %v4521, %v4540
        %v4571 = vadd.f32 %v4524, %v4540
        %v4572 = vadd.f32 %v4529, %v4540
        %v4573 = vadd.f32 %v4532, %v4540
        %v4574 = vmax.f32 %v4542, 0.0
        %v4575 = vmax.f32 %v4543, 0.0
        %v4576 = vmax.f32 %v4544, 0.0
        %v4577 = vmax.f32 %v4545, 0.0
        %v4578 = vmax.f32 %v4546, 0.0
        %v4579 = vmax.f32 %v4547, 0.0
        %v4580 = vmax.f32 %v4548, 0.0
        %v4581 = vmax.f32 %v4549, 0.0
        %v4582 = vmax.f32 %v4550, 0.0
        %v4583 = vmax.f32 %v4551, 0.0
        %v4584 = vmax.f32 %v4552, 0.0
        %v4585 = vmax.f32 %v4553, 0.0
        %v4586 = vmax.f32 %v4554, 0.0
        %v4587 = vmax.f32 %v4555, 0.0
        %v4588 = vmax.f32 %v4556, 0.0
        %v4589 = vmax.f32 %v4557, 0.0
        %v4590 = vmax.f32 %v4558, 0.0
        %v4591 = vmax.f32 %v4559, 0.0
        %v4592 = vmax.f32 %v4560, 0.0
        %v4593 = vmax.f32 %v4561, 0.0
        %v4594 = vmax.f32 %v4562, 0.0
        %v4595 = vmax.f32 %v4563, 0.0
        %v4596 = vmax.f32 %v4564, 0.0
        %v4597 = vmax.f32 %v4565, 0.0
        %v4598 = vmax.f32 %v4566, 0.0
        %v4599 = vmax.f32 %v4567, 0.0
        %v4600 = vmax.f32 %v4568, 0.0
        %v4601 = vmax.f32 %v4569, 0.0
        %v4602 = vmax.f32 %v4570, 0.0
        %v4603 = vmax.f32 %v4571, 0.0
        %v4604 = vmax.f32 %v4572, 0.0
        %v4605 = vmax.f32 %v4573, 0.0
        %v4606 = vpack.c.bf16 %v4575, %v4574
        %v4607 = vpack.c.bf16 %v4577, %v4576
        %v4608 = vpack.c.bf16 %v4579, %v4578
        %v4609 = vpack.c.bf16 %v4581, %v4580
        %v4610 = vpack.c.bf16 %v4583, %v4582
        %v4611 = vpack.c.bf16 %v4585, %v4584
        %v4612 = vpack.c.bf16 %v4587, %v4586
        %v4613 = vpack.c.bf16 %v4589, %v4588
        %v4614 = vpack.c.bf16 %v4591, %v4590
        %v4615 = vpack.c.bf16 %v4593, %v4592
        %v4616 = vpack.c.bf16 %v4595, %v4594
        %v4617 = vpack.c.bf16 %v4597, %v4596
        %v4618 = vpack.c.bf16 %v4599, %v4598
        %v4619 = vpack.c.bf16 %v4601, %v4600
        %v4620 = vpack.c.bf16 %v4603, %v4602
        %v4621 = vpack.c.bf16 %v4605, %v4604
        %v4622 = vld [vmem:[#allocation26] sm:$0xf]
        %v4623 = vld [vmem:[#allocation26 + $0x4] sm:$0xf]
        %v4624 = vld [vmem:[#allocation26 + $0x8] sm:$0xf]
        %v4625 = vld [vmem:[#allocation26 + $0xc] sm:$0xf]
        %v4626 = vld [vmem:[#allocation26 + $0x10] sm:$0xf]
        %v4627 = vld [vmem:[#allocation26 + $0x14] sm:$0xf]
        %v4628 = vld [vmem:[#allocation26 + $0x18] sm:$0xf]
        %v4629 = vld [vmem:[#allocation26 + $0x1c] sm:$0xf]
        %v4630 = vld [vmem:[#allocation28] sm:$0xf]
        %v4631 = vld [vmem:[#allocation28 + $0x4] sm:$0xf]
        %v4632 = vld [vmem:[#allocation28 + $0x8] sm:$0xf]
        %v4633 = vld [vmem:[#allocation28 + $0xc] sm:$0xf]
        %v4634 = vld [vmem:[#allocation28 + $0x10] sm:$0xf]
        %v4635 = vld [vmem:[#allocation28 + $0x14] sm:$0xf]
        %v4636 = vld [vmem:[#allocation28 + $0x18] sm:$0xf]
        %v4637 = vld [vmem:[#allocation28 + $0x1c] sm:$0xf]
        %v4638 = vld [vmem:[#allocation28 + $0x20] sm:$0xf]
        %v4639 = vld [vmem:[#allocation28 + $0x24] sm:$0xf]
        %v4640 = vld [vmem:[#allocation28 + $0x28] sm:$0xf]
        %v4641 = vld [vmem:[#allocation28 + $0x2c] sm:$0xf]
        %v4642 = vld [vmem:[#allocation28 + $0x30] sm:$0xf]
        %v4643 = vld [vmem:[#allocation28 + $0x34] sm:$0xf]
        %v4644 = vld [vmem:[#allocation28 + $0x38] sm:$0xf]
        %v4645 = vld [vmem:[#allocation28 + $0x3c] sm:$0xf]
        %v4662 = vunpack.c.l.b16 %v4630
        %v4663 = vunpack.c.l.b16 %v4631
        %v4664 = vunpack.c.l.b16 %v4632
        %v4665 = vunpack.c.l.b16 %v4633
        %v4666 = vunpack.c.l.b16 %v4634
        %v4667 = vunpack.c.l.b16 %v4635
        %v4668 = vunpack.c.l.b16 %v4636
        %v4669 = vunpack.c.l.b16 %v4637
        %v4670 = vunpack.c.l.b16 %v4638
        %v4671 = vunpack.c.l.b16 %v4639
        %v4672 = vunpack.c.l.b16 %v4640
        %v4673 = vunpack.c.l.b16 %v4641
        %v4674 = vunpack.c.l.b16 %v4642
        %v4675 = vunpack.c.l.b16 %v4643
        %v4676 = vunpack.c.l.b16 %v4644
        %v4677 = vunpack.c.l.b16 %v4645
        %v4678 = vpack.c.b16 %v4663, %v4662
        %v4679 = vpack.c.b16 %v4665, %v4664
        %v4680 = vpack.c.b16 %v4667, %v4666
        %v4681 = vpack.c.b16 %v4669, %v4668
        %v4682 = vpack.c.b16 %v4671, %v4670
        %v4683 = vpack.c.b16 %v4673, %v4672
        %v4684 = vpack.c.b16 %v4675, %v4674
        %v4685 = vpack.c.b16 %v4677, %v4676
        %4694 = vmatprep.subr.bf16.mxu0 0
        %4695 = vmatpush1.bf16.msra.mxu0 %v4678
        %4696 = vmatprep.subr.bf16.mxu0 0
        %4697 = vmatpush1.bf16.msra.mxu0 %v4679
        %4698 = vmatprep.subr.bf16.mxu0 0
        %4699 = vmatpush1.bf16.msra.mxu0 %v4680
        %4700 = vmatprep.subr.bf16.mxu0 0
        %4701 = vmatpush1.bf16.msra.mxu0 %v4681
        %4702 = vmatprep.subr.bf16.mxu0 0
        %4703 = vmatpush1.bf16.msra.mxu0 %v4682
        %4704 = vmatprep.subr.bf16.mxu0 0
        %4705 = vmatpush1.bf16.msra.mxu0 %v4683
        %4706 = vmatprep.subr.bf16.mxu0 0
        %4707 = vmatpush1.bf16.msra.mxu0 %v4684
        %4708 = vmatprep.subr.bf16.mxu0 0
        %4709 = vmatpush1.bf16.msra.mxu0 %v4685
        %4710 = vmatprep.subr.bf16.mxu0 0
        %4711 = vmatpush1.bf16.msra.mxu0 0
        %4712 = vmatprep.subr.bf16.mxu0 0
        %4713 = vmatpush1.bf16.msra.mxu0 0
        %4714 = vmatprep.subr.bf16.mxu0 0
        %4715 = vmatpush1.bf16.msra.mxu0 0
        %4716 = vmatprep.subr.bf16.mxu0 0
        %4717 = vmatpush1.bf16.msra.mxu0 0
        %4718 = vmatprep.subr.bf16.mxu0 0
        %4719 = vmatpush1.bf16.msra.mxu0 0
        %4720 = vmatprep.subr.bf16.mxu0 0
        %4721 = vmatpush1.bf16.msra.mxu0 0
        %4722 = vmatprep.subr.bf16.mxu0 0
        %4723 = vmatpush1.bf16.msra.mxu0 0
        %4724 = vmatprep.subr.bf16.mxu0 0
        %4725 = vmatpush1.bf16.msra.mxu0 0
        %4726 = vmatprep.mubr.bf16.mxu0 0
        %4727 = vmatmul.mubr.bf16.gmra.mrb[0].mxu0 %v3725
        %v4728 = vpop.f32.mrb[0].mxu0
        %v4729 = vadd.f32 0.0, %v4728
        %v4730 = vpop.f32.mrb[0].mxu0
        %v4731 = vpop.f32.mrb[0].mxu0
        %v4732 = vadd.f32 0.0, %v4731
        %v4733 = vpop.f32.mrb[0].mxu0
        %4734 = vmatprep.mubr.bf16.mxu0 0
        %4735 = vmatmul.mubr.bf16.gmra.mrb[0].mxu0 %v3726
        %v4736 = vpop.f32.mrb[0].mxu0
        %v4737 = vadd.f32 0.0, %v4736
        %v4738 = vpop.f32.mrb[0].mxu0
        %v4739 = vpop.f32.mrb[0].mxu0
        %v4740 = vadd.f32 0.0, %v4739
        %v4741 = vpop.f32.mrb[0].mxu0
        %4742 = vmatprep.mubr.bf16.mxu0 0
        %4743 = vmatmul.mubr.bf16.gmra.mrb[0].mxu0 %v3727
        %v4744 = vpop.f32.mrb[0].mxu0
        %v4745 = vadd.f32 0.0, %v4744
        %v4746 = vpop.f32.mrb[0].mxu0
        %v4747 = vpop.f32.mrb[0].mxu0
        %v4748 = vadd.f32 0.0, %v4747
        %v4749 = vpop.f32.mrb[0].mxu0
        %4750 = vmatprep.mubr.bf16.mxu0 0
        %4751 = vmatmul.mubr.bf16.gmra.mrb[0].mxu0 %v3728
        %v4752 = vpop.f32.mrb[0].mxu0
        %v4753 = vadd.f32 0.0, %v4752
        %v4754 = vpop.f32.mrb[0].mxu0
        %v4755 = vpop.f32.mrb[0].mxu0
        %v4756 = vadd.f32 0.0, %v4755
        %v4757 = vpop.f32.mrb[0].mxu0
        %4758 = vmatprep.mubr.bf16.mxu0 0
        %4759 = vmatmul.mubr.bf16.gmra.mrb[0].mxu0 %v3729
        %v4760 = vpop.f32.mrb[0].mxu0
        %v4761 = vadd.f32 0.0, %v4760
        %v4762 = vpop.f32.mrb[0].mxu0
        %v4763 = vpop.f32.mrb[0].mxu0
        %v4764 = vadd.f32 0.0, %v4763
        %v4765 = vpop.f32.mrb[0].mxu0
        %4766 = vmatprep.mubr.bf16.mxu0 0
        %4767 = vmatmul.mubr.bf16.gmra.mrb[0].mxu0 %v3730
        %v4768 = vpop.f32.mrb[0].mxu0
        %v4769 = vadd.f32 0.0, %v4768
        %v4770 = vpop.f32.mrb[0].mxu0
        %v4771 = vpop.f32.mrb[0].mxu0
        %v4772 = vadd.f32 0.0, %v4771
        %v4773 = vpop.f32.mrb[0].mxu0
        %4774 = vmatprep.mubr.bf16.mxu0 0
        %4775 = vmatmul.mubr.bf16.gmra.mrb[0].mxu0 %v3731
        %v4776 = vpop.f32.mrb[0].mxu0
        %v4777 = vadd.f32 0.0, %v4776
        %v4778 = vpop.f32.mrb[0].mxu0
        %v4779 = vpop.f32.mrb[0].mxu0
        %v4780 = vadd.f32 0.0, %v4779
        %v4781 = vpop.f32.mrb[0].mxu0
        %4782 = vmatprep.mubr.bf16.mxu0 0
        %4783 = vmatmul.mubr.bf16.gmra.mrb[0].mxu0 %v3732
        %v4784 = vpop.f32.mrb[0].mxu0
        %v4785 = vadd.f32 0.0, %v4784
        %v4786 = vpop.f32.mrb[0].mxu0
        %v4787 = vpop.f32.mrb[0].mxu0
        %v4788 = vadd.f32 0.0, %v4787
        %v4789 = vpop.f32.mrb[0].mxu0
        %4790 = vmatprep.mubr.bf16.mxu0 0
        %4791 = vmatmul.mubr.bf16.gmra.mrb[0].mxu0 %v3733
        %v4792 = vpop.f32.mrb[0].mxu0
        %v4793 = vadd.f32 0.0, %v4792
        %v4794 = vpop.f32.mrb[0].mxu0
        %v4795 = vpop.f32.mrb[0].mxu0
        %v4796 = vadd.f32 0.0, %v4795
        %v4797 = vpop.f32.mrb[0].mxu0
        %4798 = vmatprep.mubr.bf16.mxu0 0
        %4799 = vmatmul.mubr.bf16.gmra.mrb[0].mxu0 %v3734
        %v4800 = vpop.f32.mrb[0].mxu0
        %v4801 = vadd.f32 0.0, %v4800
        %v4802 = vpop.f32.mrb[0].mxu0
        %v4803 = vpop.f32.mrb[0].mxu0
        %v4804 = vadd.f32 0.0, %v4803
        %v4805 = vpop.f32.mrb[0].mxu0
        %4806 = vmatprep.mubr.bf16.mxu0 0
        %4807 = vmatmul.mubr.bf16.gmra.mrb[0].mxu0 %v3735
        %v4808 = vpop.f32.mrb[0].mxu0
        %v4809 = vadd.f32 0.0, %v4808
        %v4810 = vpop.f32.mrb[0].mxu0
        %v4811 = vpop.f32.mrb[0].mxu0
        %v4812 = vadd.f32 0.0, %v4811
        %v4813 = vpop.f32.mrb[0].mxu0
        %4814 = vmatprep.mubr.bf16.mxu0 0
        %4815 = vmatmul.mubr.bf16.gmra.mrb[0].mxu0 %v3736
        %v4816 = vpop.f32.mrb[0].mxu0
        %v4817 = vadd.f32 0.0, %v4816
        %v4818 = vpop.f32.mrb[0].mxu0
        %v4819 = vpop.f32.mrb[0].mxu0
        %v4820 = vadd.f32 0.0, %v4819
        %v4821 = vpop.f32.mrb[0].mxu0
        %4822 = vmatprep.mubr.bf16.mxu0 0
        %4823 = vmatmul.mubr.bf16.gmra.mrb[0].mxu0 %v3737
        %v4824 = vpop.f32.mrb[0].mxu0
        %v4825 = vadd.f32 0.0, %v4824
        %v4826 = vpop.f32.mrb[0].mxu0
        %v4827 = vpop.f32.mrb[0].mxu0
        %v4828 = vadd.f32 0.0, %v4827
        %v4829 = vpop.f32.mrb[0].mxu0
        %4830 = vmatprep.mubr.bf16.mxu0 0
        %4831 = vmatmul.mubr.bf16.gmra.mrb[0].mxu0 %v3738
        %v4832 = vpop.f32.mrb[0].mxu0
        %v4833 = vadd.f32 0.0, %v4832
        %v4834 = vpop.f32.mrb[0].mxu0
        %v4835 = vpop.f32.mrb[0].mxu0
        %v4836 = vadd.f32 0.0, %v4835
        %v4837 = vpop.f32.mrb[0].mxu0
        %4838 = vmatprep.mubr.bf16.mxu0 0
        %4839 = vmatmul.mubr.bf16.gmra.mrb[0].mxu0 %v3739
        %v4840 = vpop.f32.mrb[0].mxu0
        %v4841 = vadd.f32 0.0, %v4840
        %v4842 = vpop.f32.mrb[0].mxu0
        %v4843 = vpop.f32.mrb[0].mxu0
        %v4844 = vadd.f32 0.0, %v4843
        %v4845 = vpop.f32.mrb[0].mxu0
        %4846 = vmatprep.mubr.bf16.mxu0 0
        %4847 = vmatmul.mubr.bf16.gmra.mrb[0].mxu0 %v3740
        %v4848 = vpop.f32.mrb[0].mxu0
        %v4849 = vadd.f32 0.0, %v4848
        %v4850 = vpop.f32.mrb[0].mxu0
        %v4851 = vpop.f32.mrb[0].mxu0
        %v4852 = vadd.f32 0.0, %v4851
        %v4853 = vpop.f32.mrb[0].mxu0
        %4854 = vdwg.mxu0
        %v4863 = vunpack.c.l.b16 %v4622
        %v4864 = vunpack.c.l.b16 %v4623
        %v4865 = vunpack.c.l.b16 %v4624
        %v4866 = vunpack.c.l.b16 %v4625
        %v4867 = vunpack.c.l.b16 %v4626
        %v4868 = vunpack.c.l.b16 %v4627
        %v4869 = vunpack.c.l.b16 %v4628
        %v4870 = vunpack.c.l.b16 %v4629
        %v4871 = vpack.c.b16 %v4864, %v4863
        %v4872 = vpack.c.b16 %v4866, %v4865
        %v4873 = vpack.c.b16 %v4868, %v4867
        %v4874 = vpack.c.b16 %v4870, %v4869
        %vm4879 = vcmask 523264
        %v4881 = vsel %vm4879, %v4606, 0
        %v4884 = vsel %vm4879, %v4607, 0
        %v4887 = vsel %vm4879, %v4608, 0
        %v4890 = vsel %vm4879, %v4609, 0
        %v4893 = vsel %vm4879, %v4610, 0
        %v4896 = vsel %vm4879, %v4611, 0
        %v4899 = vsel %vm4879, %v4612, 0
        %v4902 = vsel %vm4879, %v4613, 0
        %v4905 = vsel %vm4879, %v4614, 0
        %v4908 = vsel %vm4879, %v4615, 0
        %v4911 = vsel %vm4879, %v4616, 0
        %v4914 = vsel %vm4879, %v4617, 0
        %v4917 = vsel %vm4879, %v4618, 0
        %v4920 = vsel %vm4879, %v4619, 0
        %v4923 = vsel %vm4879, %v4620, 0
        %v4926 = vsel %vm4879, %v4621, 0
        %4928 = vmatprep.subr.bf16.mxu0 0
        %4929 = vmatpush1.bf16.msra.mxu0 %v4871
        %4930 = vmatprep.subr.bf16.mxu0 0
        %4931 = vmatpush1.bf16.msra.mxu0 %v4872
        %4932 = vmatprep.subr.bf16.mxu0 0
        %4933 = vmatpush1.bf16.msra.mxu0 %v4873
        %4934 = vmatprep.subr.bf16.mxu0 0
        %4935 = vmatpush1.bf16.msra.mxu0 %v4874
        %4936 = vmatprep.subr.bf16.mxu0 0
        %4937 = vmatpush1.bf16.msra.mxu0 0
        %4938 = vmatprep.subr.bf16.mxu0 0
        %4939 = vmatpush1.bf16.msra.mxu0 0
        %4940 = vmatprep.subr.bf16.mxu0 0
        %4941 = vmatpush1.bf16.msra.mxu0 0
        %4942 = vmatprep.subr.bf16.mxu0 0
        %4943 = vmatpush1.bf16.msra.mxu0 0
        %4944 = vmatprep.subr.bf16.mxu0 0
        %4945 = vmatpush1.bf16.msra.mxu0 0
        %4946 = vmatprep.subr.bf16.mxu0 0
        %4947 = vmatpush1.bf16.msra.mxu0 0
        %4948 = vmatprep.subr.bf16.mxu0 0
        %4949 = vmatpush1.bf16.msra.mxu0 0
        %4950 = vmatprep.subr.bf16.mxu0 0
        %4951 = vmatpush1.bf16.msra.mxu0 0
        %4952 = vmatprep.subr.bf16.mxu0 0
        %4953 = vmatpush1.bf16.msra.mxu0 0
        %4954 = vmatprep.subr.bf16.mxu0 0
        %4955 = vmatpush1.bf16.msra.mxu0 0
        %4956 = vmatprep.subr.bf16.mxu0 0
        %4957 = vmatpush1.bf16.msra.mxu0 0
        %4958 = vmatprep.subr.bf16.mxu0 0
        %4959 = vmatpush1.bf16.msra.mxu0 0
        %4960 = vmatprep.mubr.bf16.mxu0 0
        %4961 = vmatmul.mubr.bf16.gmra.mrb[0].mxu0 %v4881
        %v4962 = vpop.f32.mrb[0].mxu0
        %v4963 = vadd.f32 %v4729, %v4962
        %v4964 = vpop.f32.mrb[0].mxu0
        %v4965 = vpop.f32.mrb[0].mxu0
        %v4966 = vadd.f32 %v4732, %v4965
        %v4967 = vpop.f32.mrb[0].mxu0
        %4968 = vmatprep.mubr.bf16.mxu0 0
        %4969 = vmatmul.mubr.bf16.gmra.mrb[0].mxu0 %v4884
        %v4970 = vpop.f32.mrb[0].mxu0
        %v4971 = vadd.f32 %v4737, %v4970
        %v4972 = vpop.f32.mrb[0].mxu0
        %v4973 = vpop.f32.mrb[0].mxu0
        %v4974 = vadd.f32 %v4740, %v4973
        %v4975 = vpop.f32.mrb[0].mxu0
        %4976 = vmatprep.mubr.bf16.mxu0 0
        %4977 = vmatmul.mubr.bf16.gmra.mrb[0].mxu0 %v4887
        %v4978 = vpop.f32.mrb[0].mxu0
        %v4979 = vadd.f32 %v4745, %v4978
        %v4980 = vpop.f32.mrb[0].mxu0
        %v4981 = vpop.f32.mrb[0].mxu0
        %v4982 = vadd.f32 %v4748, %v4981
        %v4983 = vpop.f32.mrb[0].mxu0
        %4984 = vmatprep.mubr.bf16.mxu0 0
        %4985 = vmatmul.mubr.bf16.gmra.mrb[0].mxu0 %v4890
        %v4986 = vpop.f32.mrb[0].mxu0
        %v4987 = vadd.f32 %v4753, %v4986
        %v4988 = vpop.f32.mrb[0].mxu0
        %v4989 = vpop.f32.mrb[0].mxu0
        %v4990 = vadd.f32 %v4756, %v4989
        %v4991 = vpop.f32.mrb[0].mxu0
        %4992 = vmatprep.mubr.bf16.mxu0 0
        %4993 = vmatmul.mubr.bf16.gmra.mrb[0].mxu0 %v4893
        %v4994 = vpop.f32.mrb[0].mxu0
        %v4995 = vadd.f32 %v4761, %v4994
        %v4996 = vpop.f32.mrb[0].mxu0
        %v4997 = vpop.f32.mrb[0].mxu0
        %v4998 = vadd.f32 %v4764, %v4997
        %v4999 = vpop.f32.mrb[0].mxu0
        %5000 = vmatprep.mubr.bf16.mxu0 0
        %5001 = vmatmul.mubr.bf16.gmra.mrb[0].mxu0 %v4896
        %v5002 = vpop.f32.mrb[0].mxu0
        %v5003 = vadd.f32 %v4769, %v5002
        %v5004 = vpop.f32.mrb[0].mxu0
        %v5005 = vpop.f32.mrb[0].mxu0
        %v5006 = vadd.f32 %v4772, %v5005
        %v5007 = vpop.f32.mrb[0].mxu0
        %5008 = vmatprep.mubr.bf16.mxu0 0
        %5009 = vmatmul.mubr.bf16.gmra.mrb[0].mxu0 %v4899
        %v5010 = vpop.f32.mrb[0].mxu0
        %v5011 = vadd.f32 %v4777, %v5010
        %v5012 = vpop.f32.mrb[0].mxu0
        %v5013 = vpop.f32.mrb[0].mxu0
        %v5014 = vadd.f32 %v4780, %v5013
        %v5015 = vpop.f32.mrb[0].mxu0
        %5016 = vmatprep.mubr.bf16.mxu0 0
        %5017 = vmatmul.mubr.bf16.gmra.mrb[0].mxu0 %v4902
        %v5018 = vpop.f32.mrb[0].mxu0
        %v5019 = vadd.f32 %v4785, %v5018
        %v5020 = vpop.f32.mrb[0].mxu0
        %v5021 = vpop.f32.mrb[0].mxu0
        %v5022 = vadd.f32 %v4788, %v5021
        %v5023 = vpop.f32.mrb[0].mxu0
        %5024 = vmatprep.mubr.bf16.mxu0 0
        %5025 = vmatmul.mubr.bf16.gmra.mrb[0].mxu0 %v4905
        %v5026 = vpop.f32.mrb[0].mxu0
        %v5027 = vadd.f32 %v4793, %v5026
        %v5028 = vpop.f32.mrb[0].mxu0
        %v5029 = vpop.f32.mrb[0].mxu0
        %v5030 = vadd.f32 %v4796, %v5029
        %v5031 = vpop.f32.mrb[0].mxu0
        %5032 = vmatprep.mubr.bf16.mxu0 0
        %5033 = vmatmul.mubr.bf16.gmra.mrb[0].mxu0 %v4908
        %v5034 = vpop.f32.mrb[0].mxu0
        %v5035 = vadd.f32 %v4801, %v5034
        %v5036 = vpop.f32.mrb[0].mxu0
        %v5037 = vpop.f32.mrb[0].mxu0
        %v5038 = vadd.f32 %v4804, %v5037
        %v5039 = vpop.f32.mrb[0].mxu0
        %5040 = vmatprep.mubr.bf16.mxu0 0
        %5041 = vmatmul.mubr.bf16.gmra.mrb[0].mxu0 %v4911
        %v5042 = vpop.f32.mrb[0].mxu0
        %v5043 = vadd.f32 %v4809, %v5042
        %v5044 = vpop.f32.mrb[0].mxu0
        %v5045 = vpop.f32.mrb[0].mxu0
        %v5046 = vadd.f32 %v4812, %v5045
        %v5047 = vpop.f32.mrb[0].mxu0
        %5048 = vmatprep.mubr.bf16.mxu0 0
        %5049 = vmatmul.mubr.bf16.gmra.mrb[0].mxu0 %v4914
        %v5050 = vpop.f32.mrb[0].mxu0
        %v5051 = vadd.f32 %v4817, %v5050
        %v5052 = vpop.f32.mrb[0].mxu0
        %v5053 = vpop.f32.mrb[0].mxu0
        %v5054 = vadd.f32 %v4820, %v5053
        %v5055 = vpop.f32.mrb[0].mxu0
        %5056 = vmatprep.mubr.bf16.mxu0 0
        %5057 = vmatmul.mubr.bf16.gmra.mrb[0].mxu0 %v4917
        %v5058 = vpop.f32.mrb[0].mxu0
        %v5059 = vadd.f32 %v4825, %v5058
        %v5060 = vpop.f32.mrb[0].mxu0
        %v5061 = vpop.f32.mrb[0].mxu0
        %v5062 = vadd.f32 %v4828, %v5061
        %v5063 = vpop.f32.mrb[0].mxu0
        %5064 = vmatprep.mubr.bf16.mxu0 0
        %5065 = vmatmul.mubr.bf16.gmra.mrb[0].mxu0 %v4920
        %v5066 = vpop.f32.mrb[0].mxu0
        %v5067 = vadd.f32 %v4833, %v5066
        %v5068 = vpop.f32.mrb[0].mxu0
        %v5069 = vpop.f32.mrb[0].mxu0
        %v5070 = vadd.f32 %v4836, %v5069
        %v5071 = vpop.f32.mrb[0].mxu0
        %5072 = vmatprep.mubr.bf16.mxu0 0
        %5073 = vmatmul.mubr.bf16.gmra.mrb[0].mxu0 %v4923
        %v5074 = vpop.f32.mrb[0].mxu0
        %v5075 = vadd.f32 %v4841, %v5074
        %v5076 = vpop.f32.mrb[0].mxu0
        %v5077 = vpop.f32.mrb[0].mxu0
        %v5078 = vadd.f32 %v4844, %v5077
        %v5079 = vpop.f32.mrb[0].mxu0
        %5080 = vmatprep.mubr.bf16.mxu0 0
        %5081 = vmatmul.mubr.bf16.gmra.mrb[0].mxu0 %v4926
        %v5082 = vpop.f32.mrb[0].mxu0
        %v5083 = vadd.f32 %v4849, %v5082
        %v5084 = vpop.f32.mrb[0].mxu0
        %v5085 = vpop.f32.mrb[0].mxu0
        %v5086 = vadd.f32 %v4852, %v5085
        %v5087 = vpop.f32.mrb[0].mxu0
        %5088 = vdwg.mxu0
        %v5089 = vld [vmem:[%s26] sm:$0x1]
        %v5091 = vlaneseq
        %v5092 = vshrl.u32 %v5091, 7
        %v5093 = vsub.s32 0, %v5092
        %v5094 = vrot.slane %v5089, %v5093
        %v5096 = vadd.f32 %v4963, %v5094
        %v5097 = vadd.f32 %v4966, %v5094
        %v5098 = vadd.f32 %v4971, %v5094
        %v5099 = vadd.f32 %v4974, %v5094
        %v5100 = vadd.f32 %v4979, %v5094
        %v5101 = vadd.f32 %v4982, %v5094
        %v5102 = vadd.f32 %v4987, %v5094
        %v5103 = vadd.f32 %v4990, %v5094
        %v5104 = vadd.f32 %v4995, %v5094
        %v5105 = vadd.f32 %v4998, %v5094
        %v5106 = vadd.f32 %v5003, %v5094
        %v5107 = vadd.f32 %v5006, %v5094
        %v5108 = vadd.f32 %v5011, %v5094
        %v5109 = vadd.f32 %v5014, %v5094
        %v5110 = vadd.f32 %v5019, %v5094
        %v5111 = vadd.f32 %v5022, %v5094
        %v5112 = vadd.f32 %v5027, %v5094
        %v5113 = vadd.f32 %v5030, %v5094
        %v5114 = vadd.f32 %v5035, %v5094
        %v5115 = vadd.f32 %v5038, %v5094
        %v5116 = vadd.f32 %v5043, %v5094
        %v5117 = vadd.f32 %v5046, %v5094
        %v5118 = vadd.f32 %v5051, %v5094
        %v5119 = vadd.f32 %v5054, %v5094
        %v5120 = vadd.f32 %v5059, %v5094
        %v5121 = vadd.f32 %v5062, %v5094
        %v5122 = vadd.f32 %v5067, %v5094
        %v5123 = vadd.f32 %v5070, %v5094
        %v5124 = vadd.f32 %v5075, %v5094
        %v5125 = vadd.f32 %v5078, %v5094
        %v5126 = vadd.f32 %v5083, %v5094
        %v5127 = vadd.f32 %v5086, %v5094
        %5128 = vst [vmem:[%s1079] sm:$0xff] %v5096
        %5129 = vst [vmem:[%s1079 + $0x8] sm:$0xff] %v5097
        %5130 = vst [vmem:[%s1079 + $0x10] sm:$0xff] %v5098
        %5131 = vst [vmem:[%s1079 + $0x18] sm:$0xff] %v5099
        %5132 = vst [vmem:[%s1079 + $0x20] sm:$0xff] %v5100
        %5133 = vst [vmem:[%s1079 + $0x28] sm:$0xff] %v5101
        %5134 = vst [vmem:[%s1079 + $0x30] sm:$0xff] %v5102
        %5135 = vst [vmem:[%s1079 + $0x38] sm:$0xff] %v5103
        %5136 = vst [vmem:[%s1079 + $0x40] sm:$0xff] %v5104
        %5137 = vst [vmem:[%s1079 + $0x48] sm:$0xff] %v5105
        %5138 = vst [vmem:[%s1079 + $0x50] sm:$0xff] %v5106
        %5139 = vst [vmem:[%s1079 + $0x58] sm:$0xff] %v5107
        %5140 = vst [vmem:[%s1079 + $0x60] sm:$0xff] %v5108
        %5141 = vst [vmem:[%s1079 + $0x68] sm:$0xff] %v5109
        %5142 = vst [vmem:[%s1079 + $0x70] sm:$0xff] %v5110
        %5143 = vst [vmem:[%s1079 + $0x78] sm:$0xff] %v5111
        %5144 = vst [vmem:[%s1079 + $0x80] sm:$0xff] %v5112
        %5145 = vst [vmem:[%s1079 + $0x88] sm:$0xff] %v5113
        %5146 = vst [vmem:[%s1079 + $0x90] sm:$0xff] %v5114
        %5147 = vst [vmem:[%s1079 + $0x98] sm:$0xff] %v5115
        %5148 = vst [vmem:[%s1079 + $0xa0] sm:$0xff] %v5116
        %5149 = vst [vmem:[%s1079 + $0xa8] sm:$0xff] %v5117
        %5150 = vst [vmem:[%s1079 + $0xb0] sm:$0xff] %v5118
        %5151 = vst [vmem:[%s1079 + $0xb8] sm:$0xff] %v5119
        %5152 = vst [vmem:[%s1079 + $0xc0] sm:$0xff] %v5120
        %5153 = vst [vmem:[%s1079 + $0xc8] sm:$0xff] %v5121
        %5154 = vst [vmem:[%s1079 + $0xd0] sm:$0xff] %v5122
        %5155 = vst [vmem:[%s1079 + $0xd8] sm:$0xff] %v5123
        %5156 = vst [vmem:[%s1079 + $0xe0] sm:$0xff] %v5124
        %5157 = vst [vmem:[%s1079 + $0xe8] sm:$0xff] %v5125
        %5158 = vst [vmem:[%s1079 + $0xf0] sm:$0xff] %v5126
        %5159 = vst [vmem:[%s1079 + $0xf8] sm:$0xff] %v5127
        %s5160 = sand.u32 %s639, 1
        %s5161 = scalar_lea.sflag [#allocation4], %s5160
        %s5162 = sand.u32 %s639, 1
        %s5163 = smul.addr %s5162, 256
        %s5164 = scalar_lea.vmem [#allocation29], %s5163
        // Predicated region
        $region197: #{tpu_custom_call.1} parent=127 // pred_check
          %p5165 = pneg %p649
        $region198: #{tpu_custom_call.1} parent=127 // pred_check_branch
          %5167 = sbr.rel (%p5165) target = $region200
        $region199: #{tpu_custom_call.1} parent=127 // pred_region
          %s5168 = smul.u32 32, %s54
          %s5170 = ssub.s32 4096, 4096
          %5171 = vsyncadd %s5161, %s5170
          %s5172 = smul.addr %s5168, 128
          %s5173 = scalar_lea.hbm %s27, %s5172
          %s5174 = sshll.u32 %s5164, 4
          %s5175 = int_to_ptr.vmem [resolvable:$true] %s5174
          %5180 = dma.vmem_to_hbm [thread:$0]  %s5175, 4096, %s5173, %s5161, 128, 128, 8
        $region200: #{tpu_custom_call.1} parent=127 // pred_fallthru
          _
      $region128: #{tpu_custom_call.1} parent=5 // pred_fallthru
        _
      %p5181 = scmp.le.s32.totalorder 2, %s49
      // Predicated region
      $region201: #{tpu_custom_call.1} parent=5 // pred_check
        %p5182 = pneg %p5181
      $region202: #{tpu_custom_call.1} parent=5 // pred_check_branch
        %5184 = sbr.rel (%p5182) target = $region204
      $region203: #{tpu_custom_call.1} parent=5 // pred_region
        %s5185 = ssub.s32 %s49, 2
        // Predicated region
        $region205: #{tpu_custom_call.1} parent=203 // pred_check
          %p5186 = pneg %p655
        $region206: #{tpu_custom_call.1} parent=203 // pred_check_branch
          %5188 = sbr.rel (%p5186) target = $region208
        $region207: #{tpu_custom_call.1} parent=203 // pred_region
          %s5189 = sand.u32 %s640, 1
          %s5190 = scalar_lea.sflag [#allocation4], %s5189
          %s5191 = sand.u32 %s640, 1
          %s5192 = smul.addr %s5191, 256
          %s5193 = scalar_lea.vmem [#allocation29], %s5192
          %5194 = dma.done %s5190, 4096
        $region208: #{tpu_custom_call.1} parent=203 // pred_fallthru
          _
      $region204: #{tpu_custom_call.1} parent=5 // pred_fallthru
        _
    $region6: #{tpu_custom_call.1} parent=1 // loop_footer
      %s53 = sadd.s32 1, %s49
    $region7: #{tpu_custom_call.1} parent=1 // loop_footer_branch
      %48 = sbr.rel target = $region3
    $region8: #{tpu_custom_call.1} parent=1 // loop_exit
      _
    %5195 = vsyncpa [#allocation3], 1
    %s5196 = scalar_lea.sflag [#allocation3], 1
    %5197 = vsyncpa %s5196, 1
    %5198 = vsyncpa [#allocation6], 1
    %s5199 = scalar_lea.sflag [#allocation6], 1
    %5200 = vsyncpa %s5199, 1
    %5201 = vsyncpa [#allocation9], 1
    %5202 = vsyncpa [#allocation12], 1
    %5203 = vsyncpa [#allocation15], 1
    %5204 = vsyncpa [#allocation18], 1
    %5205 = vsyncpa [#allocation21], 1
    %5206 = vsyncpa [#allocation24], 1
    %5207 = vsyncpa [#allocation27], 1
    %5208 = vsyncpa [#allocation4], 1
    %s5209 = scalar_lea.sflag [#allocation4], 1
    %5210 = vsyncpa %s5209, 1

</llo_original>
